<compile_context>
chip_gen: v6e
topology: v6e:2x2x1
jax: 0.10.0
libtpu: 0.0.40
codegen_flags: <defaults>
</compile_context>

<pallas_src>
import numpy as np

import jax
import jax.numpy as jnp
from jax.experimental import pallas as pl
from jax.experimental.pallas import tpu as pltpu


# ---------------------------------------------------------------------------
# Fixed architecture / layout constants for this config
# ---------------------------------------------------------------------------
H = W = 16
HP, WP = H + 2, W + 2            # zero-padded spatial dims
LI = HP * WP                     # per-image flattened (padded) length = 324
HALO = 128                       # lane halo so shifted tap windows never go OOB
PADL = HALO + LI + HALO          # 580
CIN = 4
F1, F2 = 4, 8
NC = 10
WROWS = 46                       # packed weight-slab rows

# weight-slab row offsets (rows = output channels per layer)
_STEM_R, _B1C1_R, _B1C2_R = 0, 4, 8
_B2C1_R, _B2C2_R, _DS_R, _FC_R = 12, 20, 28, 36


# ---------------------------------------------------------------------------
# The single fused kernel (one grid step == one image)
# ---------------------------------------------------------------------------
def _resnet_kernel(x_ref, w_ref, aff_ref, fcb_ref, msk_ref,
                   logits_ref, feat_ref,
                   pad0, pad1, pad2, pad3, slab):
    f32 = jnp.float32
    bf16 = jnp.bfloat16

    # Zero only the lane halos of the activation scratch buffers (the padded
    # border pixels inside the interior are re-zeroed by the vmask multiply at
    # each store, so no whole-buffer zero fills).
    for buf in (pad0, pad1, pad2, pad3):
        c = buf.shape[0]
        buf[:, 0:HALO] = jnp.zeros((c, HALO), f32)
        buf[:, HALO + LI:PADL] = jnp.zeros((c, HALO), f32)

    vmask = msk_ref[0:1, :]      # (1, LI): 1 at interior pixels, 0 at pad slots
    pmask = msk_ref[1:2, :]      # (1, LI): 1/64 on the stride-2 8x8 grid, else 0

    def conv3x3(src_ref, row0, cin, cout, dil):
        # im2col: 9 statically shifted lane windows copied (as bf16) into a
        # lane-dense (9*cin, LI) slab, then ONE MXU matmul with K = 9*cin.
        k = 9 * cin
        for t in range(9):
            dy, dx = t // 3, t % 3
            s = HALO + dil * ((dy - 1) * WP + (dx - 1))
            slab[t * cin:(t + 1) * cin, :] = src_ref[:, s:s + LI].astype(bf16)
        wmat = w_ref[row0:row0 + cout, 0:k]                  # (cout, 9*cin) bf16
        return jnp.dot(wmat, slab[0:k, :], preferred_element_type=f32)

    def bn(y, col, cout, relu):
        # eval-mode BatchNorm folded to per-channel scale/shift columns,
        # broadcast over the lane (pixel) axis.
        s = aff_ref[0:cout, col:col + 1]
        b = aff_ref[0:cout, col + 1:col + 2]
        y = y * s + b
        return jnp.maximum(y, 0.0) if relu else y

    def store(dst_ref, y):
        # Re-zero the padded border pixels and write the buffer interior.
        dst_ref[:, HALO:HALO + LI] = y * vmask

    # ---- stem: conv3x3/s1/p1 + BN + ReLU (16 <= min_size: no max-pool) ----
    a0 = bn(conv3x3(x_ref, _STEM_R, CIN, F1, 1), 0, F1, True)     # (F1, LI)
    store(pad0, a0)

    # ---- BasicBlock 1: stride 1, identity shortcut ----
    y = bn(conv3x3(pad0, _B1C1_R, F1, F1, 1), 2, F1, True)
    store(pad1, y)
    y = bn(conv3x3(pad1, _B1C2_R, F1, F1, 1), 4, F1, False)
    a2 = jnp.maximum(y + a0, 0.0)                                 # (F1, LI)
    store(pad2, a2)

    # ---- BasicBlock 2: stride 2, 1x1-conv downsample shortcut ----
    # conv1 (stride 2) evaluated densely at stride 1: the even-even pixels of
    # the result are exactly the stride-2 outputs; other lanes are dead.
    y = bn(conv3x3(pad2, _B2C1_R, F1, F2, 1), 6, F2, True)        # (F2, LI)
    store(pad3, y)
    # conv2 on the subsampled 8x8 grid == dilation-2 taps in the dense layout
    # (out-of-range taps land on zeroed border pixels / halo).
    y = bn(conv3x3(pad3, _B2C2_R, F2, F2, 2), 8, F2, False)
    # 1x1/s2 downsample shortcut: pointwise, evaluated densely.
    wd = w_ref[_DS_R:_DS_R + F2, 0:F1]                            # (F2, F1) bf16
    sc = bn(jnp.dot(wd, a2.astype(bf16), preferred_element_type=f32),
            10, F2, False)
    out = jnp.maximum(y + sc, 0.0)                                # (F2, LI)

    # ---- AdaptiveAvgPool2d((1,1)) over the 64 valid stride-2 pixels + FC ----
    pooled = jnp.sum(out * pmask, axis=1, keepdims=True)          # (F2, 1)
    feat_ref[...] = pooled
    fcw_t = w_ref[_FC_R:_FC_R + NC, 0:F2].astype(f32)             # (NC, F2)
    logits_ref[...] = (jnp.dot(fcw_t, pooled, preferred_element_type=f32)
                       + fcb_ref[...])                            # (NC, 1)


# ---------------------------------------------------------------------------
# Parameters: packed bf16 weight slab + f32 BN-affine slab + fc bias
# ---------------------------------------------------------------------------
def make_params(key, feature_maps=4, in_ch=4, num_classes=10):
    """Conv weights are generated in PyTorch (cout, cin, kh, kw) layout and
    permuted to the kernel's (cout, [tap, cin]) im2col layout; eval-mode
    BatchNorm is folded to per-channel scale/shift columns; the FC weight is
    stored in nn.Linear (out, in) layout."""
    f1, f2 = feature_maps, 2 * feature_maps
    assert (f1, f2, in_ch, num_classes) == (F1, F2, CIN, NC)
    keys = iter(jax.random.split(key, 16))

    def conv_rows(k, cout, cin, ksz):
        fan_in = cin * ksz * ksz
        w = jax.random.normal(k, (cout, cin, ksz, ksz)) * (2.0 / fan_in) ** 0.5
        # (cout, cin, kh, kw) -> (cout, kh, kw, cin) -> (cout, kh*kw*cin)
        return jnp.transpose(w, (0, 2, 3, 1)).reshape(cout, ksz * ksz * cin)

    def bn_fold(k, c, eps=1e-5):
        k1, k2, k3, k4 = jax.random.split(k, 4)
        gamma = 1.0 + 0.1 * jax.random.normal(k1, (c,))
        beta = 0.1 * jax.random.normal(k2, (c,))
        mean = 0.1 * jax.random.normal(k3, (c,))
        var = 1.0 + 0.1 * jax.random.uniform(k4, (c,))
        scale = gamma / jnp.sqrt(var + eps)
        return scale, beta - mean * scale

    w_slab = jnp.zeros((WROWS, 128), jnp.float32)
    aff = jnp.zeros((8, 16), jnp.float32)
    specs = [(_STEM_R, F1, CIN, 3, 0), (_B1C1_R, F1, F1, 3, 2),
             (_B1C2_R, F1, F1, 3, 4), (_B2C1_R, F2, F1, 3, 6),
             (_B2C2_R, F2, F2, 3, 8), (_DS_R, F2, F1, 1, 10)]
    for row0, cout, cin, ksz, col in specs:
        w_slab = w_slab.at[row0:row0 + cout, :ksz * ksz * cin].set(
            conv_rows(next(keys), cout, cin, ksz))
        s, b = bn_fold(next(keys), cout)
        aff = aff.at[:cout, col].set(s)
        aff = aff.at[:cout, col + 1].set(b)
    fc_w = (jax.random.normal(next(keys), (num_classes, f2))
            * (1.0 / f2) ** 0.5)                                  # (NC, F2)
    w_slab = w_slab.at[_FC_R:_FC_R + num_classes, :f2].set(fc_w)
    fc_b = 0.01 * jax.random.normal(next(keys), (num_classes, 1))
    return {"w": w_slab.astype(jnp.bfloat16),
            "aff": aff.astype(jnp.float32),
            "fcb": fc_b.astype(jnp.float32)}


# ---------------------------------------------------------------------------
# Forward pass (default path: lam = -1, rotations = False)
# ---------------------------------------------------------------------------
def resnet_forward(x_nchw, params):
    n, cin, h, w = x_nchw.shape
    assert (cin, h, w) == (CIN, H, W)

    # Wrapper-side layout plumbing (tiny): NCHW -> per-image zero-padded,
    # row-major-flattened (C, HALO + Hp*Wp + HALO) slabs.
    xp = jnp.pad(x_nchw.astype(jnp.float32), ((0, 0), (0, 0), (1, 1), (1, 1)))
    xp = xp.reshape(n, CIN, LI)
    xp = jnp.pad(xp, ((0, 0), (0, 0), (HALO, HALO)))              # (N, CIN, PADL)

    # Interior / stride-2-grid masks (constants, ~2.6 KB total).
    rr, cc = np.arange(LI) // WP, np.arange(LI) % WP
    interior = (rr >= 1) & (rr <= H) & (cc >= 1) & (cc <= W)
    pool = interior & (rr % 2 == 1) & (cc % 2 == 1)
    masks = jnp.asarray(np.stack(
        [interior.astype(np.float32),
         pool.astype(np.float32) / float((H // 2) * (W // 2))]))   # (2, LI)

    logits3, feats3 = pl.pallas_call(
        _resnet_kernel,
        out_shape=(jax.ShapeDtypeStruct((n, NC, 1), jnp.float32),
                   jax.ShapeDtypeStruct((n, F2, 1), jnp.float32)),
        grid=(n,),
        in_specs=[
            pl.BlockSpec((None, CIN, PADL), lambda i: (i, 0, 0)),   # image i
            pl.BlockSpec((WROWS, 128), lambda i: (0, 0)),           # weight slab
            pl.BlockSpec((8, 16), lambda i: (0, 0)),                # BN affine slab
            pl.BlockSpec((NC, 1), lambda i: (0, 0)),                # fc bias
            pl.BlockSpec((2, LI), lambda i: (0, 0)),                # masks
        ],
        out_specs=(
            pl.BlockSpec((None, NC, 1), lambda i: (i, 0, 0)),
            pl.BlockSpec((None, F2, 1), lambda i: (i, 0, 0)),
        ),
        scratch_shapes=[
            pltpu.VMEM((F1, PADL), jnp.float32),     # stem output (padded)
            pltpu.VMEM((F1, PADL), jnp.float32),     # block1 conv1 output
            pltpu.VMEM((F1, PADL), jnp.float32),     # block1 output (a2)
            pltpu.VMEM((F2, PADL), jnp.float32),     # block2 conv1 output
            pltpu.VMEM((9 * F2, LI), jnp.bfloat16),  # shared im2col slab
        ],
        compiler_params=pltpu.CompilerParams(
            dimension_semantics=("parallel",)),       # megacore split on v7x
        cost_estimate=pl.CostEstimate(flops=1_700_000, transcendentals=0,
                                      bytes_accessed=40_000),
    )(xp, params["w"], params["aff"], params["fcb"], masks)

    return logits3[:, :, 0], feats3[:, :, 0]          # (N, 10), (N, 8)


if __name__ == "__main__":
    key = jax.random.PRNGKey(0)
    kx, kp = jax.random.split(key)
    x = jax.random.normal(kx, (2, CIN, H, W), dtype=jnp.float32)   # NCHW input
    params = make_params(kp, feature_maps=4, in_ch=4, num_classes=10)

    logits, features = jax.jit(resnet_forward)(x, params)
    jax.block_until_ready((logits, features))
    assert logits.shape == (2, NC) and features.shape == (2, F2)
    print("KERNEL_OK")
</pallas_src>

<mosaic_0001>
module attributes {stable_mosaic.version = 11 : i64} {
  func.func @_resnet_kernel(%arg0: i32, %arg1: memref<1x4x580xf32, #tpu.memory_space<vmem>>, %arg2: memref<46x128xbf16, #tpu.memory_space<vmem>>, %arg3: memref<8x16xf32, #tpu.memory_space<vmem>>, %arg4: memref<10x1xf32, #tpu.memory_space<vmem>>, %arg5: memref<2x324xf32, #tpu.memory_space<vmem>>, %arg6: memref<1x10x1xf32, #tpu.memory_space<vmem>>, %arg7: memref<1x8x1xf32, #tpu.memory_space<vmem>>, %arg8: memref<4x580xf32, #tpu.memory_space<vmem>>, %arg9: memref<4x580xf32, #tpu.memory_space<vmem>>, %arg10: memref<4x580xf32, #tpu.memory_space<vmem>>, %arg11: memref<8x580xf32, #tpu.memory_space<vmem>>, %arg12: memref<72x324xbf16, #tpu.memory_space<vmem>>) attributes {dimension_semantics = [#tpu.dimension_semantics<parallel>], iteration_bounds = array<i64: 2>, scalar_prefetch = 0 : i64, scratch_operands = 5 : i64, tpu.core_type = #tpu.core_type<tc>, window_params = [{transform_indices = @transform_0, window_bounds = array<i64: 1, 4, 580>}, {pipeline_mode = #tpu.pipeline_mode<synchronous>, transform_indices = @transform_1, window_bounds = array<i64: 46, 128>}, {pipeline_mode = #tpu.pipeline_mode<synchronous>, transform_indices = @transform_2, window_bounds = array<i64: 8, 16>}, {pipeline_mode = #tpu.pipeline_mode<synchronous>, transform_indices = @transform_3, window_bounds = array<i64: 10, 1>}, {pipeline_mode = #tpu.pipeline_mode<synchronous>, transform_indices = @transform_4, window_bounds = array<i64: 2, 324>}, {transform_indices = @transform_5, window_bounds = array<i64: 1, 10, 1>}, {transform_indices = @transform_6, window_bounds = array<i64: 1, 8, 1>}]} {
    %cst = arith.constant 0.000000e+00 : f32
    %0 = vector.broadcast %cst : f32 to vector<4x128xf32>
    %c0 = arith.constant 0 : index
    %c0_0 = arith.constant 0 : index
    %1 = vector.load %arg8[%c0, %c0_0] : memref<4x580xf32, #tpu.memory_space<vmem>>, vector<4x128xf32>
    tpu.vector_store %arg8[%c0, %c0_0], %0 {strides = array<i32>} : memref<4x580xf32, #tpu.memory_space<vmem>>, vector<4x128xf32>,
    %cst_1 = arith.constant 0.000000e+00 : f32
    %2 = vector.broadcast %cst_1 : f32 to vector<4x128xf32>
    %c0_2 = arith.constant 0 : index
    %c452 = arith.constant 452 : index
    %3 = vector.load %arg8[%c0_2, %c452] : memref<4x580xf32, #tpu.memory_space<vmem>>, vector<4x128xf32>
    tpu.vector_store %arg8[%c0_2, %c452], %2 {strides = array<i32>} : memref<4x580xf32, #tpu.memory_space<vmem>>, vector<4x128xf32>,
    %cst_3 = arith.constant 0.000000e+00 : f32
    %4 = vector.broadcast %cst_3 : f32 to vector<4x128xf32>
    %c0_4 = arith.constant 0 : index
    %c0_5 = arith.constant 0 : index
    %5 = vector.load %arg9[%c0_4, %c0_5] : memref<4x580xf32, #tpu.memory_space<vmem>>, vector<4x128xf32>
    tpu.vector_store %arg9[%c0_4, %c0_5], %4 {strides = array<i32>} : memref<4x580xf32, #tpu.memory_space<vmem>>, vector<4x128xf32>,
    %cst_6 = arith.constant 0.000000e+00 : f32
    %6 = vector.broadcast %cst_6 : f32 to vector<4x128xf32>
    %c0_7 = arith.constant 0 : index
    %c452_8 = arith.constant 452 : index
    %7 = vector.load %arg9[%c0_7, %c452_8] : memref<4x580xf32, #tpu.memory_space<vmem>>, vector<4x128xf32>
    tpu.vector_store %arg9[%c0_7, %c452_8], %6 {strides = array<i32>} : memref<4x580xf32, #tpu.memory_space<vmem>>, vector<4x128xf32>,
    %cst_9 = arith.constant 0.000000e+00 : f32
    %8 = vector.broadcast %cst_9 : f32 to vector<4x128xf32>
    %c0_10 = arith.constant 0 : index
    %c0_11 = arith.constant 0 : index
    %9 = vector.load %arg10[%c0_10, %c0_11] : memref<4x580xf32, #tpu.memory_space<vmem>>, vector<4x128xf32>
    tpu.vector_store %arg10[%c0_10, %c0_11], %8 {strides = array<i32>} : memref<4x580xf32, #tpu.memory_space<vmem>>, vector<4x128xf32>,
    %cst_12 = arith.constant 0.000000e+00 : f32
    %10 = vector.broadcast %cst_12 : f32 to vector<4x128xf32>
    %c0_13 = arith.constant 0 : index
    %c452_14 = arith.constant 452 : index
    %11 = vector.load %arg10[%c0_13, %c452_14] : memref<4x580xf32, #tpu.memory_space<vmem>>, vector<4x128xf32>
    tpu.vector_store %arg10[%c0_13, %c452_14], %10 {strides = array<i32>} : memref<4x580xf32, #tpu.memory_space<vmem>>, vector<4x128xf32>,
    %cst_15 = arith.constant 0.000000e+00 : f32
    %12 = vector.broadcast %cst_15 : f32 to vector<8x128xf32>
    %c0_16 = arith.constant 0 : index
    %c0_17 = arith.constant 0 : index
    %13 = vector.load %arg11[%c0_16, %c0_17] : memref<8x580xf32, #tpu.memory_space<vmem>>, vector<8x128xf32>
    tpu.vector_store %arg11[%c0_16, %c0_17], %12 {strides = array<i32>} : memref<8x580xf32, #tpu.memory_space<vmem>>, vector<8x128xf32>,
    %cst_18 = arith.constant 0.000000e+00 : f32
    %14 = vector.broadcast %cst_18 : f32 to vector<8x128xf32>
    %c0_19 = arith.constant 0 : index
    %c452_20 = arith.constant 452 : index
    %15 = vector.load %arg11[%c0_19, %c452_20] : memref<8x580xf32, #tpu.memory_space<vmem>>, vector<8x128xf32>
    tpu.vector_store %arg11[%c0_19, %c452_20], %14 {strides = array<i32>} : memref<8x580xf32, #tpu.memory_space<vmem>>, vector<8x128xf32>,
    %c0_21 = arith.constant 0 : index
    %c0_22 = arith.constant 0 : index
    %16 = vector.load %arg5[%c0_21, %c0_22] : memref<2x324xf32, #tpu.memory_space<vmem>>, vector<1x324xf32>
    %c1 = arith.constant 1 : index
    %c0_23 = arith.constant 0 : index
    %17 = vector.load %arg5[%c1, %c0_23] : memref<2x324xf32, #tpu.memory_space<vmem>>, vector<1x324xf32>
    %c0_24 = arith.constant 0 : index
    %c0_25 = arith.constant 0 : index
    %c109 = arith.constant 109 : index
    %18 = vector.load %arg1[%c0_24, %c0_25, %c109] : memref<1x4x580xf32, #tpu.memory_space<vmem>>, vector<1x4x324xf32>
    %19 = vector.shape_cast %18 : vector<1x4x324xf32> to vector<4x324xf32>
    %20 = arith.truncf %19 : vector<4x324xf32> to vector<4x324xbf16>
    %c0_26 = arith.constant 0 : index
    %c0_27 = arith.constant 0 : index
    %21 = vector.load %arg12[%c0_26, %c0_27] : memref<72x324xbf16, #tpu.memory_space<vmem>>, vector<4x324xbf16>
    tpu.vector_store %arg12[%c0_26, %c0_27], %20 {strides = array<i32>} : memref<72x324xbf16, #tpu.memory_space<vmem>>, vector<4x324xbf16>,
    %c0_28 = arith.constant 0 : index
    %c0_29 = arith.constant 0 : index
    %c110 = arith.constant 110 : index
    %22 = vector.load %arg1[%c0_28, %c0_29, %c110] : memref<1x4x580xf32, #tpu.memory_space<vmem>>, vector<1x4x324xf32>
    %23 = vector.shape_cast %22 : vector<1x4x324xf32> to vector<4x324xf32>
    %24 = arith.truncf %23 : vector<4x324xf32> to vector<4x324xbf16>
    %c4 = arith.constant 4 : index
    %c0_30 = arith.constant 0 : index
    %25 = vector.load %arg12[%c4, %c0_30] : memref<72x324xbf16, #tpu.memory_space<vmem>>, vector<4x324xbf16>
    tpu.vector_store %arg12[%c4, %c0_30], %24 {strides = array<i32>} : memref<72x324xbf16, #tpu.memory_space<vmem>>, vector<4x324xbf16>,
    %c0_31 = arith.constant 0 : index
    %c0_32 = arith.constant 0 : index
    %c111 = arith.constant 111 : index
    %26 = vector.load %arg1[%c0_31, %c0_32, %c111] : memref<1x4x580xf32, #tpu.memory_space<vmem>>, vector<1x4x324xf32>
    %27 = vector.shape_cast %26 : vector<1x4x324xf32> to vector<4x324xf32>
    %28 = arith.truncf %27 : vector<4x324xf32> to vector<4x324xbf16>
    %c8 = arith.constant 8 : index
    %c0_33 = arith.constant 0 : index
    %29 = vector.load %arg12[%c8, %c0_33] : memref<72x324xbf16, #tpu.memory_space<vmem>>, vector<4x324xbf16>
    tpu.vector_store %arg12[%c8, %c0_33], %28 {strides = array<i32>} : memref<72x324xbf16, #tpu.memory_space<vmem>>, vector<4x324xbf16>,
    %c0_34 = arith.constant 0 : index
    %c0_35 = arith.constant 0 : index
    %c127 = arith.constant 127 : index
    %30 = vector.load %arg1[%c0_34, %c0_35, %c127] : memref<1x4x580xf32, #tpu.memory_space<vmem>>, vector<1x4x324xf32>
    %31 = vector.shape_cast %30 : vector<1x4x324xf32> to vector<4x324xf32>
    %32 = arith.truncf %31 : vector<4x324xf32> to vector<4x324xbf16>
    %c12 = arith.constant 12 : index
    %c0_36 = arith.constant 0 : index
    %33 = vector.load %arg12[%c12, %c0_36] : memref<72x324xbf16, #tpu.memory_space<vmem>>, vector<4x324xbf16>
    tpu.vector_store %arg12[%c12, %c0_36], %32 {strides = array<i32>} : memref<72x324xbf16, #tpu.memory_space<vmem>>, vector<4x324xbf16>,
    %c0_37 = arith.constant 0 : index
    %c0_38 = arith.constant 0 : index
    %c128 = arith.constant 128 : index
    %34 = vector.load %arg1[%c0_37, %c0_38, %c128] : memref<1x4x580xf32, #tpu.memory_space<vmem>>, vector<1x4x324xf32>
    %35 = vector.shape_cast %34 : vector<1x4x324xf32> to vector<4x324xf32>
    %36 = arith.truncf %35 : vector<4x324xf32> to vector<4x324xbf16>
    %c16 = arith.constant 16 : index
    %c0_39 = arith.constant 0 : index
    %37 = vector.load %arg12[%c16, %c0_39] : memref<72x324xbf16, #tpu.memory_space<vmem>>, vector<4x324xbf16>
    tpu.vector_store %arg12[%c16, %c0_39], %36 {strides = array<i32>} : memref<72x324xbf16, #tpu.memory_space<vmem>>, vector<4x324xbf16>,
    %c0_40 = arith.constant 0 : index
    %c0_41 = arith.constant 0 : index
    %c129 = arith.constant 129 : index
    %38 = vector.load %arg1[%c0_40, %c0_41, %c129] : memref<1x4x580xf32, #tpu.memory_space<vmem>>, vector<1x4x324xf32>
    %39 = vector.shape_cast %38 : vector<1x4x324xf32> to vector<4x324xf32>
    %40 = arith.truncf %39 : vector<4x324xf32> to vector<4x324xbf16>
    %c20 = arith.constant 20 : index
    %c0_42 = arith.constant 0 : index
    %41 = vector.load %arg12[%c20, %c0_42] : memref<72x324xbf16, #tpu.memory_space<vmem>>, vector<4x324xbf16>
    tpu.vector_store %arg12[%c20, %c0_42], %40 {strides = array<i32>} : memref<72x324xbf16, #tpu.memory_space<vmem>>, vector<4x324xbf16>,
    %c0_43 = arith.constant 0 : index
    %c0_44 = arith.constant 0 : index
    %c145 = arith.constant 145 : index
    %42 = vector.load %arg1[%c0_43, %c0_44, %c145] : memref<1x4x580xf32, #tpu.memory_space<vmem>>, vector<1x4x324xf32>
    %43 = vector.shape_cast %42 : vector<1x4x324xf32> to vector<4x324xf32>
    %44 = arith.truncf %43 : vector<4x324xf32> to vector<4x324xbf16>
    %c24 = arith.constant 24 : index
    %c0_45 = arith.constant 0 : index
    %45 = vector.load %arg12[%c24, %c0_45] : memref<72x324xbf16, #tpu.memory_space<vmem>>, vector<4x324xbf16>
    tpu.vector_store %arg12[%c24, %c0_45], %44 {strides = array<i32>} : memref<72x324xbf16, #tpu.memory_space<vmem>>, vector<4x324xbf16>,
    %c0_46 = arith.constant 0 : index
    %c0_47 = arith.constant 0 : index
    %c146 = arith.constant 146 : index
    %46 = vector.load %arg1[%c0_46, %c0_47, %c146] : memref<1x4x580xf32, #tpu.memory_space<vmem>>, vector<1x4x324xf32>
    %47 = vector.shape_cast %46 : vector<1x4x324xf32> to vector<4x324xf32>
    %48 = arith.truncf %47 : vector<4x324xf32> to vector<4x324xbf16>
    %c28 = arith.constant 28 : index
    %c0_48 = arith.constant 0 : index
    %49 = vector.load %arg12[%c28, %c0_48] : memref<72x324xbf16, #tpu.memory_space<vmem>>, vector<4x324xbf16>
    tpu.vector_store %arg12[%c28, %c0_48], %48 {strides = array<i32>} : memref<72x324xbf16, #tpu.memory_space<vmem>>, vector<4x324xbf16>,
    %c0_49 = arith.constant 0 : index
    %c0_50 = arith.constant 0 : index
    %c147 = arith.constant 147 : index
    %50 = vector.load %arg1[%c0_49, %c0_50, %c147] : memref<1x4x580xf32, #tpu.memory_space<vmem>>, vector<1x4x324xf32>
    %51 = vector.shape_cast %50 : vector<1x4x324xf32> to vector<4x324xf32>
    %52 = arith.truncf %51 : vector<4x324xf32> to vector<4x324xbf16>
    %c32 = arith.constant 32 : index
    %c0_51 = arith.constant 0 : index
    %53 = vector.load %arg12[%c32, %c0_51] : memref<72x324xbf16, #tpu.memory_space<vmem>>, vector<4x324xbf16>
    tpu.vector_store %arg12[%c32, %c0_51], %52 {strides = array<i32>} : memref<72x324xbf16, #tpu.memory_space<vmem>>, vector<4x324xbf16>,
    %c0_52 = arith.constant 0 : index
    %c0_53 = arith.constant 0 : index
    %54 = vector.load %arg2[%c0_52, %c0_53] : memref<46x128xbf16, #tpu.memory_space<vmem>>, vector<4x36xbf16>
    %c0_54 = arith.constant 0 : index
    %c0_55 = arith.constant 0 : index
    %55 = vector.load %arg12[%c0_54, %c0_55] : memref<72x324xbf16, #tpu.memory_space<vmem>>, vector<36x324xbf16>
    %cst_56 = arith.constant dense<0.000000e+00> : vector<4x324xf32>
    %56 = tpu.matmul %54, %55, %cst_56 {dimension_numbers = #tpu.dot_dimension_numbers<[1], [0], [0], [1], [0, 0, 1, 1], [], []>} : vector<4x36xbf16>, vector<36x324xbf16>, vector<4x324xf32> -> vector<4x324xf32>
    %c0_57 = arith.constant 0 : index
    %c0_58 = arith.constant 0 : index
    %57 = vector.load %arg3[%c0_57, %c0_58] : memref<8x16xf32, #tpu.memory_space<vmem>>, vector<4x1xf32>
    %c0_59 = arith.constant 0 : index
    %c1_60 = arith.constant 1 : index
    %58 = vector.load %arg3[%c0_59, %c1_60] : memref<8x16xf32, #tpu.memory_space<vmem>>, vector<4x1xf32>
    %59 = vector.broadcast %57 : vector<4x1xf32> to vector<4x324xf32>
    %60 = arith.mulf %56, %59 : vector<4x324xf32>
    %61 = vector.broadcast %58 : vector<4x1xf32> to vector<4x324xf32>
    %62 = arith.addf %60, %61 : vector<4x324xf32>
    %cst_61 = arith.constant 0.000000e+00 : f32
    %63 = vector.broadcast %cst_61 : f32 to vector<4x324xf32>
    %64 = arith.maximumf %62, %63 : vector<4x324xf32>
    %65 = vector.broadcast %16 : vector<1x324xf32> to vector<4x324xf32>
    %66 = arith.mulf %64, %65 : vector<4x324xf32>
    %c0_62 = arith.constant 0 : index
    %c128_63 = arith.constant 128 : index
    %67 = vector.load %arg8[%c0_62, %c128_63] : memref<4x580xf32, #tpu.memory_space<vmem>>, vector<4x324xf32>
    tpu.vector_store %arg8[%c0_62, %c128_63], %66 {strides = array<i32>} : memref<4x580xf32, #tpu.memory_space<vmem>>, vector<4x324xf32>,
    %c0_64 = arith.constant 0 : index
    %c109_65 = arith.constant 109 : index
    %68 = vector.load %arg8[%c0_64, %c109_65] : memref<4x580xf32, #tpu.memory_space<vmem>>, vector<4x324xf32>
    %69 = arith.truncf %68 : vector<4x324xf32> to vector<4x324xbf16>
    %c0_66 = arith.constant 0 : index
    %c0_67 = arith.constant 0 : index
    %70 = vector.load %arg12[%c0_66, %c0_67] : memref<72x324xbf16, #tpu.memory_space<vmem>>, vector<4x324xbf16>
    tpu.vector_store %arg12[%c0_66, %c0_67], %69 {strides = array<i32>} : memref<72x324xbf16, #tpu.memory_space<vmem>>, vector<4x324xbf16>,
    %c0_68 = arith.constant 0 : index
    %c110_69 = arith.constant 110 : index
    %71 = vector.load %arg8[%c0_68, %c110_69] : memref<4x580xf32, #tpu.memory_space<vmem>>, vector<4x324xf32>
    %72 = arith.truncf %71 : vector<4x324xf32> to vector<4x324xbf16>
    %c4_70 = arith.constant 4 : index
    %c0_71 = arith.constant 0 : index
    %73 = vector.load %arg12[%c4_70, %c0_71] : memref<72x324xbf16, #tpu.memory_space<vmem>>, vector<4x324xbf16>
    tpu.vector_store %arg12[%c4_70, %c0_71], %72 {strides = array<i32>} : memref<72x324xbf16, #tpu.memory_space<vmem>>, vector<4x324xbf16>,
    %c0_72 = arith.constant 0 : index
    %c111_73 = arith.constant 111 : index
    %74 = vector.load %arg8[%c0_72, %c111_73] : memref<4x580xf32, #tpu.memory_space<vmem>>, vector<4x324xf32>
    %75 = arith.truncf %74 : vector<4x324xf32> to vector<4x324xbf16>
    %c8_74 = arith.constant 8 : index
    %c0_75 = arith.constant 0 : index
    %76 = vector.load %arg12[%c8_74, %c0_75] : memref<72x324xbf16, #tpu.memory_space<vmem>>, vector<4x324xbf16>
    tpu.vector_store %arg12[%c8_74, %c0_75], %75 {strides = array<i32>} : memref<72x324xbf16, #tpu.memory_space<vmem>>, vector<4x324xbf16>,
    %c0_76 = arith.constant 0 : index
    %c127_77 = arith.constant 127 : index
    %77 = vector.load %arg8[%c0_76, %c127_77] : memref<4x580xf32, #tpu.memory_space<vmem>>, vector<4x324xf32>
    %78 = arith.truncf %77 : vector<4x324xf32> to vector<4x324xbf16>
    %c12_78 = arith.constant 12 : index
    %c0_79 = arith.constant 0 : index
    %79 = vector.load %arg12[%c12_78, %c0_79] : memref<72x324xbf16, #tpu.memory_space<vmem>>, vector<4x324xbf16>
    tpu.vector_store %arg12[%c12_78, %c0_79], %78 {strides = array<i32>} : memref<72x324xbf16, #tpu.memory_space<vmem>>, vector<4x324xbf16>,
    %c0_80 = arith.constant 0 : index
    %c128_81 = arith.constant 128 : index
    %80 = vector.load %arg8[%c0_80, %c128_81] : memref<4x580xf32, #tpu.memory_space<vmem>>, vector<4x324xf32>
    %81 = arith.truncf %80 : vector<4x324xf32> to vector<4x324xbf16>
    %c16_82 = arith.constant 16 : index
    %c0_83 = arith.constant 0 : index
    %82 = vector.load %arg12[%c16_82, %c0_83] : memref<72x324xbf16, #tpu.memory_space<vmem>>, vector<4x324xbf16>
    tpu.vector_store %arg12[%c16_82, %c0_83], %81 {strides = array<i32>} : memref<72x324xbf16, #tpu.memory_space<vmem>>, vector<4x324xbf16>,
    %c0_84 = arith.constant 0 : index
    %c129_85 = arith.constant 129 : index
    %83 = vector.load %arg8[%c0_84, %c129_85] : memref<4x580xf32, #tpu.memory_space<vmem>>, vector<4x324xf32>
    %84 = arith.truncf %83 : vector<4x324xf32> to vector<4x324xbf16>
    %c20_86 = arith.constant 20 : index
    %c0_87 = arith.constant 0 : index
    %85 = vector.load %arg12[%c20_86, %c0_87] : memref<72x324xbf16, #tpu.memory_space<vmem>>, vector<4x324xbf16>
    tpu.vector_store %arg12[%c20_86, %c0_87], %84 {strides = array<i32>} : memref<72x324xbf16, #tpu.memory_space<vmem>>, vector<4x324xbf16>,
    %c0_88 = arith.constant 0 : index
    %c145_89 = arith.constant 145 : index
    %86 = vector.load %arg8[%c0_88, %c145_89] : memref<4x580xf32, #tpu.memory_space<vmem>>, vector<4x324xf32>
    %87 = arith.truncf %86 : vector<4x324xf32> to vector<4x324xbf16>
    %c24_90 = arith.constant 24 : index
    %c0_91 = arith.constant 0 : index
    %88 = vector.load %arg12[%c24_90, %c0_91] : memref<72x324xbf16, #tpu.memory_space<vmem>>, vector<4x324xbf16>
    tpu.vector_store %arg12[%c24_90, %c0_91], %87 {strides = array<i32>} : memref<72x324xbf16, #tpu.memory_space<vmem>>, vector<4x324xbf16>,
    %c0_92 = arith.constant 0 : index
    %c146_93 = arith.constant 146 : index
    %89 = vector.load %arg8[%c0_92, %c146_93] : memref<4x580xf32, #tpu.memory_space<vmem>>, vector<4x324xf32>
    %90 = arith.truncf %89 : vector<4x324xf32> to vector<4x324xbf16>
    %c28_94 = arith.constant 28 : index
    %c0_95 = arith.constant 0 : index
    %91 = vector.load %arg12[%c28_94, %c0_95] : memref<72x324xbf16, #tpu.memory_space<vmem>>, vector<4x324xbf16>
    tpu.vector_store %arg12[%c28_94, %c0_95], %90 {strides = array<i32>} : memref<72x324xbf16, #tpu.memory_space<vmem>>, vector<4x324xbf16>,
    %c0_96 = arith.constant 0 : index
    %c147_97 = arith.constant 147 : index
    %92 = vector.load %arg8[%c0_96, %c147_97] : memref<4x580xf32, #tpu.memory_space<vmem>>, vector<4x324xf32>
    %93 = arith.truncf %92 : vector<4x324xf32> to vector<4x324xbf16>
    %c32_98 = arith.constant 32 : index
    %c0_99 = arith.constant 0 : index
    %94 = vector.load %arg12[%c32_98, %c0_99] : memref<72x324xbf16, #tpu.memory_space<vmem>>, vector<4x324xbf16>
    tpu.vector_store %arg12[%c32_98, %c0_99], %93 {strides = array<i32>} : memref<72x324xbf16, #tpu.memory_space<vmem>>, vector<4x324xbf16>,
    %c4_100 = arith.constant 4 : index
    %c0_101 = arith.constant 0 : index
    %95 = vector.load %arg2[%c4_100, %c0_101] : memref<46x128xbf16, #tpu.memory_space<vmem>>, vector<4x36xbf16>
    %c0_102 = arith.constant 0 : index
    %c0_103 = arith.constant 0 : index
    %96 = vector.load %arg12[%c0_102, %c0_103] : memref<72x324xbf16, #tpu.memory_space<vmem>>, vector<36x324xbf16>
    %cst_104 = arith.constant dense<0.000000e+00> : vector<4x324xf32>
    %97 = tpu.matmul %95, %96, %cst_104 {dimension_numbers = #tpu.dot_dimension_numbers<[1], [0], [0], [1], [0, 0, 1, 1], [], []>} : vector<4x36xbf16>, vector<36x324xbf16>, vector<4x324xf32> -> vector<4x324xf32>
    %c0_105 = arith.constant 0 : index
    %c2 = arith.constant 2 : index
    %98 = vector.load %arg3[%c0_105, %c2] : memref<8x16xf32, #tpu.memory_space<vmem>>, vector<4x1xf32>
    %c0_106 = arith.constant 0 : index
    %c3 = arith.constant 3 : index
    %99 = vector.load %arg3[%c0_106, %c3] : memref<8x16xf32, #tpu.memory_space<vmem>>, vector<4x1xf32>
    %100 = vector.broadcast %98 : vector<4x1xf32> to vector<4x324xf32>
    %101 = arith.mulf %97, %100 : vector<4x324xf32>
    %102 = vector.broadcast %99 : vector<4x1xf32> to vector<4x324xf32>
    %103 = arith.addf %101, %102 : vector<4x324xf32>
    %cst_107 = arith.constant 0.000000e+00 : f32
    %104 = vector.broadcast %cst_107 : f32 to vector<4x324xf32>
    %105 = arith.maximumf %103, %104 : vector<4x324xf32>
    %106 = vector.broadcast %16 : vector<1x324xf32> to vector<4x324xf32>
    %107 = arith.mulf %105, %106 : vector<4x324xf32>
    %c0_108 = arith.constant 0 : index
    %c128_109 = arith.constant 128 : index
    %108 = vector.load %arg9[%c0_108, %c128_109] : memref<4x580xf32, #tpu.memory_space<vmem>>, vector<4x324xf32>
    tpu.vector_store %arg9[%c0_108, %c128_109], %107 {strides = array<i32>} : memref<4x580xf32, #tpu.memory_space<vmem>>, vector<4x324xf32>,
    %c0_110 = arith.constant 0 : index
    %c109_111 = arith.constant 109 : index
    %109 = vector.load %arg9[%c0_110, %c109_111] : memref<4x580xf32, #tpu.memory_space<vmem>>, vector<4x324xf32>
    %110 = arith.truncf %109 : vector<4x324xf32> to vector<4x324xbf16>
    %c0_112 = arith.constant 0 : index
    %c0_113 = arith.constant 0 : index
    %111 = vector.load %arg12[%c0_112, %c0_113] : memref<72x324xbf16, #tpu.memory_space<vmem>>, vector<4x324xbf16>
    tpu.vector_store %arg12[%c0_112, %c0_113], %110 {strides = array<i32>} : memref<72x324xbf16, #tpu.memory_space<vmem>>, vector<4x324xbf16>,
    %c0_114 = arith.constant 0 : index
    %c110_115 = arith.constant 110 : index
    %112 = vector.load %arg9[%c0_114, %c110_115] : memref<4x580xf32, #tpu.memory_space<vmem>>, vector<4x324xf32>
    %113 = arith.truncf %112 : vector<4x324xf32> to vector<4x324xbf16>
    %c4_116 = arith.constant 4 : index
    %c0_117 = arith.constant 0 : index
    %114 = vector.load %arg12[%c4_116, %c0_117] : memref<72x324xbf16, #tpu.memory_space<vmem>>, vector<4x324xbf16>
    tpu.vector_store %arg12[%c4_116, %c0_117], %113 {strides = array<i32>} : memref<72x324xbf16, #tpu.memory_space<vmem>>, vector<4x324xbf16>,
    %c0_118 = arith.constant 0 : index
    %c111_119 = arith.constant 111 : index
    %115 = vector.load %arg9[%c0_118, %c111_119] : memref<4x580xf32, #tpu.memory_space<vmem>>, vector<4x324xf32>
    %116 = arith.truncf %115 : vector<4x324xf32> to vector<4x324xbf16>
    %c8_120 = arith.constant 8 : index
    %c0_121 = arith.constant 0 : index
    %117 = vector.load %arg12[%c8_120, %c0_121] : memref<72x324xbf16, #tpu.memory_space<vmem>>, vector<4x324xbf16>
    tpu.vector_store %arg12[%c8_120, %c0_121], %116 {strides = array<i32>} : memref<72x324xbf16, #tpu.memory_space<vmem>>, vector<4x324xbf16>,
    %c0_122 = arith.constant 0 : index
    %c127_123 = arith.constant 127 : index
    %118 = vector.load %arg9[%c0_122, %c127_123] : memref<4x580xf32, #tpu.memory_space<vmem>>, vector<4x324xf32>
    %119 = arith.truncf %118 : vector<4x324xf32> to vector<4x324xbf16>
    %c12_124 = arith.constant 12 : index
    %c0_125 = arith.constant 0 : index
    %120 = vector.load %arg12[%c12_124, %c0_125] : memref<72x324xbf16, #tpu.memory_space<vmem>>, vector<4x324xbf16>
    tpu.vector_store %arg12[%c12_124, %c0_125], %119 {strides = array<i32>} : memref<72x324xbf16, #tpu.memory_space<vmem>>, vector<4x324xbf16>,
    %c0_126 = arith.constant 0 : index
    %c128_127 = arith.constant 128 : index
    %121 = vector.load %arg9[%c0_126, %c128_127] : memref<4x580xf32, #tpu.memory_space<vmem>>, vector<4x324xf32>
    %122 = arith.truncf %121 : vector<4x324xf32> to vector<4x324xbf16>
    %c16_128 = arith.constant 16 : index
    %c0_129 = arith.constant 0 : index
    %123 = vector.load %arg12[%c16_128, %c0_129] : memref<72x324xbf16, #tpu.memory_space<vmem>>, vector<4x324xbf16>
    tpu.vector_store %arg12[%c16_128, %c0_129], %122 {strides = array<i32>} : memref<72x324xbf16, #tpu.memory_space<vmem>>, vector<4x324xbf16>,
    %c0_130 = arith.constant 0 : index
    %c129_131 = arith.constant 129 : index
    %124 = vector.load %arg9[%c0_130, %c129_131] : memref<4x580xf32, #tpu.memory_space<vmem>>, vector<4x324xf32>
    %125 = arith.truncf %124 : vector<4x324xf32> to vector<4x324xbf16>
    %c20_132 = arith.constant 20 : index
    %c0_133 = arith.constant 0 : index
    %126 = vector.load %arg12[%c20_132, %c0_133] : memref<72x324xbf16, #tpu.memory_space<vmem>>, vector<4x324xbf16>
    tpu.vector_store %arg12[%c20_132, %c0_133], %125 {strides = array<i32>} : memref<72x324xbf16, #tpu.memory_space<vmem>>, vector<4x324xbf16>,
    %c0_134 = arith.constant 0 : index
    %c145_135 = arith.constant 145 : index
    %127 = vector.load %arg9[%c0_134, %c145_135] : memref<4x580xf32, #tpu.memory_space<vmem>>, vector<4x324xf32>
    %128 = arith.truncf %127 : vector<4x324xf32> to vector<4x324xbf16>
    %c24_136 = arith.constant 24 : index
    %c0_137 = arith.constant 0 : index
    %129 = vector.load %arg12[%c24_136, %c0_137] : memref<72x324xbf16, #tpu.memory_space<vmem>>, vector<4x324xbf16>
    tpu.vector_store %arg12[%c24_136, %c0_137], %128 {strides = array<i32>} : memref<72x324xbf16, #tpu.memory_space<vmem>>, vector<4x324xbf16>,
    %c0_138 = arith.constant 0 : index
    %c146_139 = arith.constant 146 : index
    %130 = vector.load %arg9[%c0_138, %c146_139] : memref<4x580xf32, #tpu.memory_space<vmem>>, vector<4x324xf32>
    %131 = arith.truncf %130 : vector<4x324xf32> to vector<4x324xbf16>
    %c28_140 = arith.constant 28 : index
    %c0_141 = arith.constant 0 : index
    %132 = vector.load %arg12[%c28_140, %c0_141] : memref<72x324xbf16, #tpu.memory_space<vmem>>, vector<4x324xbf16>
    tpu.vector_store %arg12[%c28_140, %c0_141], %131 {strides = array<i32>} : memref<72x324xbf16, #tpu.memory_space<vmem>>, vector<4x324xbf16>,
    %c0_142 = arith.constant 0 : index
    %c147_143 = arith.constant 147 : index
    %133 = vector.load %arg9[%c0_142, %c147_143] : memref<4x580xf32, #tpu.memory_space<vmem>>, vector<4x324xf32>
    %134 = arith.truncf %133 : vector<4x324xf32> to vector<4x324xbf16>
    %c32_144 = arith.constant 32 : index
    %c0_145 = arith.constant 0 : index
    %135 = vector.load %arg12[%c32_144, %c0_145] : memref<72x324xbf16, #tpu.memory_space<vmem>>, vector<4x324xbf16>
    tpu.vector_store %arg12[%c32_144, %c0_145], %134 {strides = array<i32>} : memref<72x324xbf16, #tpu.memory_space<vmem>>, vector<4x324xbf16>,
    %c8_146 = arith.constant 8 : index
    %c0_147 = arith.constant 0 : index
    %136 = vector.load %arg2[%c8_146, %c0_147] : memref<46x128xbf16, #tpu.memory_space<vmem>>, vector<4x36xbf16>
    %c0_148 = arith.constant 0 : index
    %c0_149 = arith.constant 0 : index
    %137 = vector.load %arg12[%c0_148, %c0_149] : memref<72x324xbf16, #tpu.memory_space<vmem>>, vector<36x324xbf16>
    %cst_150 = arith.constant dense<0.000000e+00> : vector<4x324xf32>
    %138 = tpu.matmul %136, %137, %cst_150 {dimension_numbers = #tpu.dot_dimension_numbers<[1], [0], [0], [1], [0, 0, 1, 1], [], []>} : vector<4x36xbf16>, vector<36x324xbf16>, vector<4x324xf32> -> vector<4x324xf32>
    %c0_151 = arith.constant 0 : index
    %c4_152 = arith.constant 4 : index
    %139 = vector.load %arg3[%c0_151, %c4_152] : memref<8x16xf32, #tpu.memory_space<vmem>>, vector<4x1xf32>
    %c0_153 = arith.constant 0 : index
    %c5 = arith.constant 5 : index
    %140 = vector.load %arg3[%c0_153, %c5] : memref<8x16xf32, #tpu.memory_space<vmem>>, vector<4x1xf32>
    %141 = vector.broadcast %139 : vector<4x1xf32> to vector<4x324xf32>
    %142 = arith.mulf %138, %141 : vector<4x324xf32>
    %143 = vector.broadcast %140 : vector<4x1xf32> to vector<4x324xf32>
    %144 = arith.addf %142, %143 : vector<4x324xf32>
    %145 = arith.addf %144, %64 : vector<4x324xf32>
    %cst_154 = arith.constant 0.000000e+00 : f32
    %146 = vector.broadcast %cst_154 : f32 to vector<4x324xf32>
    %147 = arith.maximumf %145, %146 : vector<4x324xf32>
    %148 = vector.broadcast %16 : vector<1x324xf32> to vector<4x324xf32>
    %149 = arith.mulf %147, %148 : vector<4x324xf32>
    %c0_155 = arith.constant 0 : index
    %c128_156 = arith.constant 128 : index
    %150 = vector.load %arg10[%c0_155, %c128_156] : memref<4x580xf32, #tpu.memory_space<vmem>>, vector<4x324xf32>
    tpu.vector_store %arg10[%c0_155, %c128_156], %149 {strides = array<i32>} : memref<4x580xf32, #tpu.memory_space<vmem>>, vector<4x324xf32>,
    %c0_157 = arith.constant 0 : index
    %c109_158 = arith.constant 109 : index
    %151 = vector.load %arg10[%c0_157, %c109_158] : memref<4x580xf32, #tpu.memory_space<vmem>>, vector<4x324xf32>
    %152 = arith.truncf %151 : vector<4x324xf32> to vector<4x324xbf16>
    %c0_159 = arith.constant 0 : index
    %c0_160 = arith.constant 0 : index
    %153 = vector.load %arg12[%c0_159, %c0_160] : memref<72x324xbf16, #tpu.memory_space<vmem>>, vector<4x324xbf16>
    tpu.vector_store %arg12[%c0_159, %c0_160], %152 {strides = array<i32>} : memref<72x324xbf16, #tpu.memory_space<vmem>>, vector<4x324xbf16>,
    %c0_161 = arith.constant 0 : index
    %c110_162 = arith.constant 110 : index
    %154 = vector.load %arg10[%c0_161, %c110_162] : memref<4x580xf32, #tpu.memory_space<vmem>>, vector<4x324xf32>
    %155 = arith.truncf %154 : vector<4x324xf32> to vector<4x324xbf16>
    %c4_163 = arith.constant 4 : index
    %c0_164 = arith.constant 0 : index
    %156 = vector.load %arg12[%c4_163, %c0_164] : memref<72x324xbf16, #tpu.memory_space<vmem>>, vector<4x324xbf16>
    tpu.vector_store %arg12[%c4_163, %c0_164], %155 {strides = array<i32>} : memref<72x324xbf16, #tpu.memory_space<vmem>>, vector<4x324xbf16>,
    %c0_165 = arith.constant 0 : index
    %c111_166 = arith.constant 111 : index
    %157 = vector.load %arg10[%c0_165, %c111_166] : memref<4x580xf32, #tpu.memory_space<vmem>>, vector<4x324xf32>
    %158 = arith.truncf %157 : vector<4x324xf32> to vector<4x324xbf16>
    %c8_167 = arith.constant 8 : index
    %c0_168 = arith.constant 0 : index
    %159 = vector.load %arg12[%c8_167, %c0_168] : memref<72x324xbf16, #tpu.memory_space<vmem>>, vector<4x324xbf16>
    tpu.vector_store %arg12[%c8_167, %c0_168], %158 {strides = array<i32>} : memref<72x324xbf16, #tpu.memory_space<vmem>>, vector<4x324xbf16>,
    %c0_169 = arith.constant 0 : index
    %c127_170 = arith.constant 127 : index
    %160 = vector.load %arg10[%c0_169, %c127_170] : memref<4x580xf32, #tpu.memory_space<vmem>>, vector<4x324xf32>
    %161 = arith.truncf %160 : vector<4x324xf32> to vector<4x324xbf16>
    %c12_171 = arith.constant 12 : index
    %c0_172 = arith.constant 0 : index
    %162 = vector.load %arg12[%c12_171, %c0_172] : memref<72x324xbf16, #tpu.memory_space<vmem>>, vector<4x324xbf16>
    tpu.vector_store %arg12[%c12_171, %c0_172], %161 {strides = array<i32>} : memref<72x324xbf16, #tpu.memory_space<vmem>>, vector<4x324xbf16>,
    %c0_173 = arith.constant 0 : index
    %c128_174 = arith.constant 128 : index
    %163 = vector.load %arg10[%c0_173, %c128_174] : memref<4x580xf32, #tpu.memory_space<vmem>>, vector<4x324xf32>
    %164 = arith.truncf %163 : vector<4x324xf32> to vector<4x324xbf16>
    %c16_175 = arith.constant 16 : index
    %c0_176 = arith.constant 0 : index
    %165 = vector.load %arg12[%c16_175, %c0_176] : memref<72x324xbf16, #tpu.memory_space<vmem>>, vector<4x324xbf16>
    tpu.vector_store %arg12[%c16_175, %c0_176], %164 {strides = array<i32>} : memref<72x324xbf16, #tpu.memory_space<vmem>>, vector<4x324xbf16>,
    %c0_177 = arith.constant 0 : index
    %c129_178 = arith.constant 129 : index
    %166 = vector.load %arg10[%c0_177, %c129_178] : memref<4x580xf32, #tpu.memory_space<vmem>>, vector<4x324xf32>
    %167 = arith.truncf %166 : vector<4x324xf32> to vector<4x324xbf16>
    %c20_179 = arith.constant 20 : index
    %c0_180 = arith.constant 0 : index
    %168 = vector.load %arg12[%c20_179, %c0_180] : memref<72x324xbf16, #tpu.memory_space<vmem>>, vector<4x324xbf16>
    tpu.vector_store %arg12[%c20_179, %c0_180], %167 {strides = array<i32>} : memref<72x324xbf16, #tpu.memory_space<vmem>>, vector<4x324xbf16>,
    %c0_181 = arith.constant 0 : index
    %c145_182 = arith.constant 145 : index
    %169 = vector.load %arg10[%c0_181, %c145_182] : memref<4x580xf32, #tpu.memory_space<vmem>>, vector<4x324xf32>
    %170 = arith.truncf %169 : vector<4x324xf32> to vector<4x324xbf16>
    %c24_183 = arith.constant 24 : index
    %c0_184 = arith.constant 0 : index
    %171 = vector.load %arg12[%c24_183, %c0_184] : memref<72x324xbf16, #tpu.memory_space<vmem>>, vector<4x324xbf16>
    tpu.vector_store %arg12[%c24_183, %c0_184], %170 {strides = array<i32>} : memref<72x324xbf16, #tpu.memory_space<vmem>>, vector<4x324xbf16>,
    %c0_185 = arith.constant 0 : index
    %c146_186 = arith.constant 146 : index
    %172 = vector.load %arg10[%c0_185, %c146_186] : memref<4x580xf32, #tpu.memory_space<vmem>>, vector<4x324xf32>
    %173 = arith.truncf %172 : vector<4x324xf32> to vector<4x324xbf16>
    %c28_187 = arith.constant 28 : index
    %c0_188 = arith.constant 0 : index
    %174 = vector.load %arg12[%c28_187, %c0_188] : memref<72x324xbf16, #tpu.memory_space<vmem>>, vector<4x324xbf16>
    tpu.vector_store %arg12[%c28_187, %c0_188], %173 {strides = array<i32>} : memref<72x324xbf16, #tpu.memory_space<vmem>>, vector<4x324xbf16>,
    %c0_189 = arith.constant 0 : index
    %c147_190 = arith.constant 147 : index
    %175 = vector.load %arg10[%c0_189, %c147_190] : memref<4x580xf32, #tpu.memory_space<vmem>>, vector<4x324xf32>
    %176 = arith.truncf %175 : vector<4x324xf32> to vector<4x324xbf16>
    %c32_191 = arith.constant 32 : index
    %c0_192 = arith.constant 0 : index
    %177 = vector.load %arg12[%c32_191, %c0_192] : memref<72x324xbf16, #tpu.memory_space<vmem>>, vector<4x324xbf16>
    tpu.vector_store %arg12[%c32_191, %c0_192], %176 {strides = array<i32>} : memref<72x324xbf16, #tpu.memory_space<vmem>>, vector<4x324xbf16>,
    %c12_193 = arith.constant 12 : index
    %c0_194 = arith.constant 0 : index
    %178 = vector.load %arg2[%c12_193, %c0_194] : memref<46x128xbf16, #tpu.memory_space<vmem>>, vector<8x36xbf16>
    %c0_195 = arith.constant 0 : index
    %c0_196 = arith.constant 0 : index
    %179 = vector.load %arg12[%c0_195, %c0_196] : memref<72x324xbf16, #tpu.memory_space<vmem>>, vector<36x324xbf16>
    %cst_197 = arith.constant dense<0.000000e+00> : vector<8x324xf32>
    %180 = tpu.matmul %178, %179, %cst_197 {dimension_numbers = #tpu.dot_dimension_numbers<[1], [0], [0], [1], [0, 0, 1, 1], [], []>} : vector<8x36xbf16>, vector<36x324xbf16>, vector<8x324xf32> -> vector<8x324xf32>
    %c0_198 = arith.constant 0 : index
    %c6 = arith.constant 6 : index
    %181 = vector.load %arg3[%c0_198, %c6] : memref<8x16xf32, #tpu.memory_space<vmem>>, vector<8x1xf32>
    %c0_199 = arith.constant 0 : index
    %c7 = arith.constant 7 : index
    %182 = vector.load %arg3[%c0_199, %c7] : memref<8x16xf32, #tpu.memory_space<vmem>>, vector<8x1xf32>
    %183 = vector.broadcast %181 : vector<8x1xf32> to vector<8x324xf32>
    %184 = arith.mulf %180, %183 : vector<8x324xf32>
    %185 = vector.broadcast %182 : vector<8x1xf32> to vector<8x324xf32>
    %186 = arith.addf %184, %185 : vector<8x324xf32>
    %cst_200 = arith.constant 0.000000e+00 : f32
    %187 = vector.broadcast %cst_200 : f32 to vector<8x324xf32>
    %188 = arith.maximumf %186, %187 : vector<8x324xf32>
    %189 = vector.broadcast %16 : vector<1x324xf32> to vector<8x324xf32>
    %190 = arith.mulf %188, %189 : vector<8x324xf32>
    %c0_201 = arith.constant 0 : index
    %c128_202 = arith.constant 128 : index
    %191 = vector.load %arg11[%c0_201, %c128_202] : memref<8x580xf32, #tpu.memory_space<vmem>>, vector<8x324xf32>
    tpu.vector_store %arg11[%c0_201, %c128_202], %190 {strides = array<i32>} : memref<8x580xf32, #tpu.memory_space<vmem>>, vector<8x324xf32>,
    %c0_203 = arith.constant 0 : index
    %c90 = arith.constant 90 : index
    %192 = vector.load %arg11[%c0_203, %c90] : memref<8x580xf32, #tpu.memory_space<vmem>>, vector<8x324xf32>
    %193 = arith.truncf %192 : vector<8x324xf32> to vector<8x324xbf16>
    %c0_204 = arith.constant 0 : index
    %c0_205 = arith.constant 0 : index
    %194 = vector.load %arg12[%c0_204, %c0_205] : memref<72x324xbf16, #tpu.memory_space<vmem>>, vector<8x324xbf16>
    tpu.vector_store %arg12[%c0_204, %c0_205], %193 {strides = array<i32>} : memref<72x324xbf16, #tpu.memory_space<vmem>>, vector<8x324xbf16>,
    %c0_206 = arith.constant 0 : index
    %c92 = arith.constant 92 : index
    %195 = vector.load %arg11[%c0_206, %c92] : memref<8x580xf32, #tpu.memory_space<vmem>>, vector<8x324xf32>
    %196 = arith.truncf %195 : vector<8x324xf32> to vector<8x324xbf16>
    %c8_207 = arith.constant 8 : index
    %c0_208 = arith.constant 0 : index
    %197 = vector.load %arg12[%c8_207, %c0_208] : memref<72x324xbf16, #tpu.memory_space<vmem>>, vector<8x324xbf16>
    tpu.vector_store %arg12[%c8_207, %c0_208], %196 {strides = array<i32>} : memref<72x324xbf16, #tpu.memory_space<vmem>>, vector<8x324xbf16>,
    %c0_209 = arith.constant 0 : index
    %c94 = arith.constant 94 : index
    %198 = vector.load %arg11[%c0_209, %c94] : memref<8x580xf32, #tpu.memory_space<vmem>>, vector<8x324xf32>
    %199 = arith.truncf %198 : vector<8x324xf32> to vector<8x324xbf16>
    %c16_210 = arith.constant 16 : index
    %c0_211 = arith.constant 0 : index
    %200 = vector.load %arg12[%c16_210, %c0_211] : memref<72x324xbf16, #tpu.memory_space<vmem>>, vector<8x324xbf16>
    tpu.vector_store %arg12[%c16_210, %c0_211], %199 {strides = array<i32>} : memref<72x324xbf16, #tpu.memory_space<vmem>>, vector<8x324xbf16>,
    %c0_212 = arith.constant 0 : index
    %c126 = arith.constant 126 : index
    %201 = vector.load %arg11[%c0_212, %c126] : memref<8x580xf32, #tpu.memory_space<vmem>>, vector<8x324xf32>
    %202 = arith.truncf %201 : vector<8x324xf32> to vector<8x324xbf16>
    %c24_213 = arith.constant 24 : index
    %c0_214 = arith.constant 0 : index
    %203 = vector.load %arg12[%c24_213, %c0_214] : memref<72x324xbf16, #tpu.memory_space<vmem>>, vector<8x324xbf16>
    tpu.vector_store %arg12[%c24_213, %c0_214], %202 {strides = array<i32>} : memref<72x324xbf16, #tpu.memory_space<vmem>>, vector<8x324xbf16>,
    %c0_215 = arith.constant 0 : index
    %c128_216 = arith.constant 128 : index
    %204 = vector.load %arg11[%c0_215, %c128_216] : memref<8x580xf32, #tpu.memory_space<vmem>>, vector<8x324xf32>
    %205 = arith.truncf %204 : vector<8x324xf32> to vector<8x324xbf16>
    %c32_217 = arith.constant 32 : index
    %c0_218 = arith.constant 0 : index
    %206 = vector.load %arg12[%c32_217, %c0_218] : memref<72x324xbf16, #tpu.memory_space<vmem>>, vector<8x324xbf16>
    tpu.vector_store %arg12[%c32_217, %c0_218], %205 {strides = array<i32>} : memref<72x324xbf16, #tpu.memory_space<vmem>>, vector<8x324xbf16>,
    %c0_219 = arith.constant 0 : index
    %c130 = arith.constant 130 : index
    %207 = vector.load %arg11[%c0_219, %c130] : memref<8x580xf32, #tpu.memory_space<vmem>>, vector<8x324xf32>
    %208 = arith.truncf %207 : vector<8x324xf32> to vector<8x324xbf16>
    %c40 = arith.constant 40 : index
    %c0_220 = arith.constant 0 : index
    %209 = vector.load %arg12[%c40, %c0_220] : memref<72x324xbf16, #tpu.memory_space<vmem>>, vector<8x324xbf16>
    tpu.vector_store %arg12[%c40, %c0_220], %208 {strides = array<i32>} : memref<72x324xbf16, #tpu.memory_space<vmem>>, vector<8x324xbf16>,
    %c0_221 = arith.constant 0 : index
    %c162 = arith.constant 162 : index
    %210 = vector.load %arg11[%c0_221, %c162] : memref<8x580xf32, #tpu.memory_space<vmem>>, vector<8x324xf32>
    %211 = arith.truncf %210 : vector<8x324xf32> to vector<8x324xbf16>
    %c48 = arith.constant 48 : index
    %c0_222 = arith.constant 0 : index
    %212 = vector.load %arg12[%c48, %c0_222] : memref<72x324xbf16, #tpu.memory_space<vmem>>, vector<8x324xbf16>
    tpu.vector_store %arg12[%c48, %c0_222], %211 {strides = array<i32>} : memref<72x324xbf16, #tpu.memory_space<vmem>>, vector<8x324xbf16>,
    %c0_223 = arith.constant 0 : index
    %c164 = arith.constant 164 : index
    %213 = vector.load %arg11[%c0_223, %c164] : memref<8x580xf32, #tpu.memory_space<vmem>>, vector<8x324xf32>
    %214 = arith.truncf %213 : vector<8x324xf32> to vector<8x324xbf16>
    %c56 = arith.constant 56 : index
    %c0_224 = arith.constant 0 : index
    %215 = vector.load %arg12[%c56, %c0_224] : memref<72x324xbf16, #tpu.memory_space<vmem>>, vector<8x324xbf16>
    tpu.vector_store %arg12[%c56, %c0_224], %214 {strides = array<i32>} : memref<72x324xbf16, #tpu.memory_space<vmem>>, vector<8x324xbf16>,
    %c0_225 = arith.constant 0 : index
    %c166 = arith.constant 166 : index
    %216 = vector.load %arg11[%c0_225, %c166] : memref<8x580xf32, #tpu.memory_space<vmem>>, vector<8x324xf32>
    %217 = arith.truncf %216 : vector<8x324xf32> to vector<8x324xbf16>
    %c64 = arith.constant 64 : index
    %c0_226 = arith.constant 0 : index
    %218 = vector.load %arg12[%c64, %c0_226] : memref<72x324xbf16, #tpu.memory_space<vmem>>, vector<8x324xbf16>
    tpu.vector_store %arg12[%c64, %c0_226], %217 {strides = array<i32>} : memref<72x324xbf16, #tpu.memory_space<vmem>>, vector<8x324xbf16>,
    %c20_227 = arith.constant 20 : index
    %c0_228 = arith.constant 0 : index
    %219 = vector.load %arg2[%c20_227, %c0_228] : memref<46x128xbf16, #tpu.memory_space<vmem>>, vector<8x72xbf16>
    %c0_229 = arith.constant 0 : index
    %c0_230 = arith.constant 0 : index
    %220 = vector.load %arg12[%c0_229, %c0_230] : memref<72x324xbf16, #tpu.memory_space<vmem>>, vector<72x324xbf16>
    %cst_231 = arith.constant dense<0.000000e+00> : vector<8x324xf32>
    %221 = tpu.matmul %219, %220, %cst_231 {dimension_numbers = #tpu.dot_dimension_numbers<[1], [0], [0], [1], [0, 0, 1, 1], [], []>} : vector<8x72xbf16>, vector<72x324xbf16>, vector<8x324xf32> -> vector<8x324xf32>
    %c0_232 = arith.constant 0 : index
    %c8_233 = arith.constant 8 : index
    %222 = vector.load %arg3[%c0_232, %c8_233] : memref<8x16xf32, #tpu.memory_space<vmem>>, vector<8x1xf32>
    %c0_234 = arith.constant 0 : index
    %c9 = arith.constant 9 : index
    %223 = vector.load %arg3[%c0_234, %c9] : memref<8x16xf32, #tpu.memory_space<vmem>>, vector<8x1xf32>
    %224 = vector.broadcast %222 : vector<8x1xf32> to vector<8x324xf32>
    %225 = arith.mulf %221, %224 : vector<8x324xf32>
    %226 = vector.broadcast %223 : vector<8x1xf32> to vector<8x324xf32>
    %227 = arith.addf %225, %226 : vector<8x324xf32>
    %c28_235 = arith.constant 28 : index
    %c0_236 = arith.constant 0 : index
    %228 = vector.load %arg2[%c28_235, %c0_236] : memref<46x128xbf16, #tpu.memory_space<vmem>>, vector<8x4xbf16>
    %229 = arith.truncf %147 : vector<4x324xf32> to vector<4x324xbf16>
    %cst_237 = arith.constant dense<0.000000e+00> : vector<8x324xf32>
    %230 = tpu.matmul %228, %229, %cst_237 {dimension_numbers = #tpu.dot_dimension_numbers<[1], [0], [0], [1], [0, 0, 1, 1], [], []>} : vector<8x4xbf16>, vector<4x324xbf16>, vector<8x324xf32> -> vector<8x324xf32>
    %c0_238 = arith.constant 0 : index
    %c10 = arith.constant 10 : index
    %231 = vector.load %arg3[%c0_238, %c10] : memref<8x16xf32, #tpu.memory_space<vmem>>, vector<8x1xf32>
    %c0_239 = arith.constant 0 : index
    %c11 = arith.constant 11 : index
    %232 = vector.load %arg3[%c0_239, %c11] : memref<8x16xf32, #tpu.memory_space<vmem>>, vector<8x1xf32>
    %233 = vector.broadcast %231 : vector<8x1xf32> to vector<8x324xf32>
    %234 = arith.mulf %230, %233 : vector<8x324xf32>
    %235 = vector.broadcast %232 : vector<8x1xf32> to vector<8x324xf32>
    %236 = arith.addf %234, %235 : vector<8x324xf32>
    %237 = arith.addf %227, %236 : vector<8x324xf32>
    %cst_240 = arith.constant 0.000000e+00 : f32
    %238 = vector.broadcast %cst_240 : f32 to vector<8x324xf32>
    %239 = arith.maximumf %237, %238 : vector<8x324xf32>
    %240 = vector.broadcast %17 : vector<1x324xf32> to vector<8x324xf32>
    %241 = arith.mulf %239, %240 : vector<8x324xf32>
    %cst_241 = arith.constant dense<0.000000e+00> : vector<8xf32>
    %242 = vector.multi_reduction <add>, %241, %cst_241 [1] : vector<8x324xf32> to vector<8xf32>
    %243 = vector.shape_cast %242 : vector<8xf32> to vector<8x1xf32>
    %c0_242 = arith.constant 0 : index
    %c0_243 = arith.constant 0 : index
    %c0_244 = arith.constant 0 : index
    %244 = vector.load %arg7[%c0_242, %c0_243, %c0_244] : memref<1x8x1xf32, #tpu.memory_space<vmem>>, vector<1x8x1xf32>
    %245 = vector.shape_cast %244 : vector<1x8x1xf32> to vector<8x1xf32>
    %246 = vector.shape_cast %243 : vector<8x1xf32> to vector<1x8x1xf32>
    tpu.vector_store %arg7[%c0_242, %c0_243, %c0_244], %246 {strides = array<i32>} : memref<1x8x1xf32, #tpu.memory_space<vmem>>, vector<1x8x1xf32>,
    %c36 = arith.constant 36 : index
    %c0_245 = arith.constant 0 : index
    %247 = vector.load %arg2[%c36, %c0_245] : memref<46x128xbf16, #tpu.memory_space<vmem>>, vector<10x8xbf16>
    %248 = arith.extf %247 : vector<10x8xbf16> to vector<10x8xf32>
    %cst_246 = arith.constant dense<0.000000e+00> : vector<10x1xf32>
    %249 = tpu.matmul %248, %243, %cst_246 {dimension_numbers = #tpu.dot_dimension_numbers<[1], [0], [0], [1], [0, 0, 1, 1], [], []>} : vector<10x8xf32>, vector<8x1xf32>, vector<10x1xf32> -> vector<10x1xf32>
    %c0_247 = arith.constant 0 : index
    %c0_248 = arith.constant 0 : index
    %250 = vector.load %arg4[%c0_247, %c0_248] : memref<10x1xf32, #tpu.memory_space<vmem>>, vector<10x1xf32>
    %251 = arith.addf %249, %250 : vector<10x1xf32>
    %c0_249 = arith.constant 0 : index
    %c0_250 = arith.constant 0 : index
    %c0_251 = arith.constant 0 : index
    %252 = vector.load %arg6[%c0_249, %c0_250, %c0_251] : memref<1x10x1xf32, #tpu.memory_space<vmem>>, vector<1x10x1xf32>
    %253 = vector.shape_cast %252 : vector<1x10x1xf32> to vector<10x1xf32>
    %254 = vector.shape_cast %251 : vector<10x1xf32> to vector<1x10x1xf32>
    tpu.vector_store %arg6[%c0_249, %c0_250, %c0_251], %254 {strides = array<i32>} : memref<1x10x1xf32, #tpu.memory_space<vmem>>, vector<1x10x1xf32>,
    return
  }
  func.func @transform_0(%arg0: i32) -> (i32, i32, i32) {
    %c0_i32 = arith.constant 0 : i32
    %c0_i32_0 = arith.constant 0 : i32
    %c0_i32_1 = arith.constant 0 : i32
    return %arg0, %c0_i32, %c0_i32_0 : i32, i32, i32
  }
  func.func @transform_1(%arg0: i32) -> (i32, i32) {
    %c0_i32 = arith.constant 0 : i32
    %c0_i32_0 = arith.constant 0 : i32
    %c0_i32_1 = arith.constant 0 : i32
    return %c0_i32, %c0_i32_0 : i32, i32
  }
  func.func @transform_2(%arg0: i32) -> (i32, i32) {
    %c0_i32 = arith.constant 0 : i32
    %c0_i32_0 = arith.constant 0 : i32
    %c0_i32_1 = arith.constant 0 : i32
    return %c0_i32, %c0_i32_0 : i32, i32
  }
  func.func @transform_3(%arg0: i32) -> (i32, i32) {
    %c0_i32 = arith.constant 0 : i32
    %c0_i32_0 = arith.constant 0 : i32
    %c0_i32_1 = arith.constant 0 : i32
    return %c0_i32, %c0_i32_0 : i32, i32
  }
  func.func @transform_4(%arg0: i32) -> (i32, i32) {
    %c0_i32 = arith.constant 0 : i32
    %c0_i32_0 = arith.constant 0 : i32
    %c0_i32_1 = arith.constant 0 : i32
    return %c0_i32, %c0_i32_0 : i32, i32
  }
  func.func @transform_5(%arg0: i32) -> (i32, i32, i32) {
    %c0_i32 = arith.constant 0 : i32
    %c0_i32_0 = arith.constant 0 : i32
    %c0_i32_1 = arith.constant 0 : i32
    return %arg0, %c0_i32, %c0_i32_0 : i32, i32, i32
  }
  func.func @transform_6(%arg0: i32) -> (i32, i32, i32) {
    %c0_i32 = arith.constant 0 : i32
    %c0_i32_0 = arith.constant 0 : i32
    %c0_i32_1 = arith.constant 0 : i32
    return %arg0, %c0_i32, %c0_i32_0 : i32, i32, i32
  }
}

</mosaic_0001>

<llo_original>
// kernel: resnet_forward.1
$region0: #{resnet_forward.1}
  #allocation0 [shape = 'u32[]', space=smem, size = 0x4, offset = 0x4, fixed_abs, tag = 'smem constant byte address 0x4 - core index']
  #allocation1 [shape = 'u32[144,128]{1,0:T(1,128)}', space=vmem, size = 0x12000, scoped, tag = 'internal scratch']
  #allocation2 [shape = 'f32[4,580]{1,0:T(4,128)}', space=vmem, size = 0x2800, scoped, tag = 'scratch operand']
  #allocation3 [shape = 'f32[4,580]{1,0:T(4,128)}', space=vmem, size = 0x2800, scoped, tag = 'scratch operand']
  #allocation4 [shape = 'f32[4,580]{1,0:T(4,128)}', space=vmem, size = 0x2800, scoped, tag = 'scratch operand']
  #allocation5 [shape = 'f32[8,580]{1,0:T(8,128)}', space=vmem, size = 0x5000, scoped, tag = 'scratch operand']
  #allocation6 [shape = 'bf16[72,324]{1,0:T(8,128)(2,1)}', space=vmem, size = 0xd800, scoped, tag = 'scratch operand']
  %s0 = inlined_call_operand.vmem [shape: f32[2,4,580], index: 0, kind: input, shape index: {}]
  %s1 = inlined_call_operand.vmem [shape: bf16[46,128], index: 1, kind: input, shape index: {}]
  %s2 = inlined_call_operand.vmem [shape: f32[8,16], index: 2, kind: input, shape index: {}]
  %s3 = inlined_call_operand.vmem [shape: f32[10,1], index: 3, kind: input, shape index: {}]
  %s4 = inlined_call_operand.vmem [shape: f32[2,324], index: 4, kind: input, shape index: {}]
  %s5 = inlined_call_operand.vmem [shape: f32[2,10,1], index: 5, kind: output, shape index: {0}]
  %s6 = inlined_call_operand.vmem [shape: f32[2,8,1], index: 6, kind: output, shape index: {1}]
  %7 = xla_tuple %s5, %s6
  %s8 = sld [smem:[#allocation0]]
  $region61: #{resnet_forward.1} parent=0
    _
  %s10 = ssub.s32 1, %s8
  %s11 = scalar_select 0, %s10, %s8
  loop: start=0, step=1, limit=4
  $region2: #{resnet_forward.1} parent=0 // loop_pre_header
    _
  $region3: #{resnet_forward.1} parent=0 // loop_header
    %s13 = sphi 0, %s17
    %p14 = scmp.ge.s32.totalorder %s13, 4
    %s23 = sphi 0, %s25
    %s26 = sphi 0, %s23
    %s27 = sphi 0, %s26
    %s43 = sphi 0, %s27
    %s47 = sphi 0, %s47
    %s49 = sphi 0, %s47
    %s50 = sphi 0, %s49
    %s64 = sphi 0, %s50
    %s68 = sphi 0, %s68
    %s70 = sphi 0, %s68
    %s71 = sphi 0, %s70
    %s85 = sphi 0, %s71
    %s89 = sphi 0, %s89
    %s91 = sphi 0, %s89
    %s92 = sphi 0, %s91
    %s106 = sphi 0, %s92
    %s110 = sphi 0, %s110
    %s112 = sphi 0, %s110
    %s113 = sphi 0, %s112
    %s127 = sphi 0, %s113
    %s133 = sphi 0, %s135
    %s136 = sphi 0, %s133
    %s137 = sphi 0, %s136
    %s153 = sphi 0, %s137
    %s159 = sphi 0, %s161
    %s162 = sphi 0, %s159
    %s163 = sphi 0, %s162
    %s179 = sphi 0, %s163
  $region4: #{resnet_forward.1} parent=0 // loop_header_branch
    %16 = sbr.rel (%p14) target = $region8
  $region5: #{resnet_forward.1} parent=0 // loop_body
    %s18 = ssub.s32 %s13, 1
    %s19 = ssub.s32 %s13, 2
    %s20 = sadd.s32 %s13, 1
    %s21 = ssub.s32 %s13, %s20
    %p22 = scmp.eq.s32.totalorder %s21, 0
    %s24 = sadd.s32 %s23, 1
    %s25 = scalar_select %p22, %s23, %s24
    %p28 = pneg %p22
    %p29 = scmp.eq.s32.totalorder %s13, 1
    %p30 = por %p28, %p29
    %p31 = scmp.ne.s32.totalorder %s23, %s26
    %p32 = scmp.eq.s32.totalorder %s13, 0
    %p33 = por %p31, %p32
    %p34 = scmp.ne.s32.totalorder %s23, %s26
    %p35 = scmp.eq.s32.totalorder %s18, 1
    %p36 = por %p34, %p35
    %p37 = scmp.ne.s32.totalorder %s26, %s27
    %p38 = scmp.eq.s32.totalorder %s18, 0
    %p39 = por %p37, %p38
    %p40 = scmp.ne.s32.totalorder %s26, %s27
    %p41 = scmp.eq.s32.totalorder %s19, 1
    %p42 = por %p40, %p41
    %p44 = scmp.ne.s32.totalorder %s27, %s43
    %p45 = scmp.eq.s32.totalorder %s19, 0
    %p46 = por %p44, %p45
    %s48 = sadd.s32 %s47, 1
    %p51 = scmp.eq.s32.totalorder %s13, 1
    %p52 = scmp.ne.s32.totalorder %s47, %s49
    %p53 = scmp.eq.s32.totalorder %s13, 0
    %p54 = por %p52, %p53
    %p55 = scmp.ne.s32.totalorder %s47, %s49
    %p56 = scmp.eq.s32.totalorder %s18, 1
    %p57 = por %p55, %p56
    %p58 = scmp.ne.s32.totalorder %s49, %s50
    %p59 = scmp.eq.s32.totalorder %s18, 0
    %p60 = por %p58, %p59
    %p61 = scmp.ne.s32.totalorder %s49, %s50
    %p62 = scmp.eq.s32.totalorder %s19, 1
    %p63 = por %p61, %p62
    %p65 = scmp.ne.s32.totalorder %s50, %s64
    %p66 = scmp.eq.s32.totalorder %s19, 0
    %p67 = por %p65, %p66
    %s69 = sadd.s32 %s68, 1
    %p72 = scmp.eq.s32.totalorder %s13, 1
    %p73 = scmp.ne.s32.totalorder %s68, %s70
    %p74 = scmp.eq.s32.totalorder %s13, 0
    %p75 = por %p73, %p74
    %p76 = scmp.ne.s32.totalorder %s68, %s70
    %p77 = scmp.eq.s32.totalorder %s18, 1
    %p78 = por %p76, %p77
    %p79 = scmp.ne.s32.totalorder %s70, %s71
    %p80 = scmp.eq.s32.totalorder %s18, 0
    %p81 = por %p79, %p80
    %p82 = scmp.ne.s32.totalorder %s70, %s71
    %p83 = scmp.eq.s32.totalorder %s19, 1
    %p84 = por %p82, %p83
    %p86 = scmp.ne.s32.totalorder %s71, %s85
    %p87 = scmp.eq.s32.totalorder %s19, 0
    %p88 = por %p86, %p87
    %s90 = sadd.s32 %s89, 1
    %p93 = scmp.eq.s32.totalorder %s13, 1
    %p94 = scmp.ne.s32.totalorder %s89, %s91
    %p95 = scmp.eq.s32.totalorder %s13, 0
    %p96 = por %p94, %p95
    %p97 = scmp.ne.s32.totalorder %s89, %s91
    %p98 = scmp.eq.s32.totalorder %s18, 1
    %p99 = por %p97, %p98
    %p100 = scmp.ne.s32.totalorder %s91, %s92
    %p101 = scmp.eq.s32.totalorder %s18, 0
    %p102 = por %p100, %p101
    %p103 = scmp.ne.s32.totalorder %s91, %s92
    %p104 = scmp.eq.s32.totalorder %s19, 1
    %p105 = por %p103, %p104
    %p107 = scmp.ne.s32.totalorder %s92, %s106
    %p108 = scmp.eq.s32.totalorder %s19, 0
    %p109 = por %p107, %p108
    %s111 = sadd.s32 %s110, 1
    %p114 = scmp.eq.s32.totalorder %s13, 1
    %p115 = scmp.ne.s32.totalorder %s110, %s112
    %p116 = scmp.eq.s32.totalorder %s13, 0
    %p117 = por %p115, %p116
    %p118 = scmp.ne.s32.totalorder %s110, %s112
    %p119 = scmp.eq.s32.totalorder %s18, 1
    %p120 = por %p118, %p119
    %p121 = scmp.ne.s32.totalorder %s112, %s113
    %p122 = scmp.eq.s32.totalorder %s18, 0
    %p123 = por %p121, %p122
    %p124 = scmp.ne.s32.totalorder %s112, %s113
    %p125 = scmp.eq.s32.totalorder %s19, 1
    %p126 = por %p124, %p125
    %p128 = scmp.ne.s32.totalorder %s113, %s127
    %p129 = scmp.eq.s32.totalorder %s19, 0
    %p130 = por %p128, %p129
    %s131 = ssub.s32 %s13, %s20
    %p132 = scmp.eq.s32.totalorder %s131, 0
    %s134 = sadd.s32 %s133, 1
    %s135 = scalar_select %p132, %s133, %s134
    %p138 = pneg %p132
    %p139 = scmp.eq.s32.totalorder %s13, 1
    %p140 = por %p138, %p139
    %p141 = scmp.ne.s32.totalorder %s133, %s136
    %p142 = scmp.eq.s32.totalorder %s13, 0
    %p143 = por %p141, %p142
    %p144 = scmp.ne.s32.totalorder %s133, %s136
    %p145 = scmp.eq.s32.totalorder %s18, 1
    %p146 = por %p144, %p145
    %p147 = scmp.ne.s32.totalorder %s136, %s137
    %p148 = scmp.eq.s32.totalorder %s18, 0
    %p149 = por %p147, %p148
    %p150 = scmp.ne.s32.totalorder %s136, %s137
    %p151 = scmp.eq.s32.totalorder %s19, 1
    %p152 = por %p150, %p151
    %p154 = scmp.ne.s32.totalorder %s137, %s153
    %p155 = scmp.eq.s32.totalorder %s19, 0
    %p156 = por %p154, %p155
    %s157 = ssub.s32 %s13, %s20
    %p158 = scmp.eq.s32.totalorder %s157, 0
    %s160 = sadd.s32 %s159, 1
    %s161 = scalar_select %p158, %s159, %s160
    %p164 = pneg %p158
    %p165 = scmp.eq.s32.totalorder %s13, 1
    %p166 = por %p164, %p165
    %p167 = scmp.ne.s32.totalorder %s159, %s162
    %p168 = scmp.eq.s32.totalorder %s13, 0
    %p169 = por %p167, %p168
    %p170 = scmp.ne.s32.totalorder %s159, %s162
    %p171 = scmp.eq.s32.totalorder %s18, 1
    %p172 = por %p170, %p171
    %p173 = scmp.ne.s32.totalorder %s162, %s163
    %p174 = scmp.eq.s32.totalorder %s18, 0
    %p175 = por %p173, %p174
    %p176 = scmp.ne.s32.totalorder %s162, %s163
    %p177 = scmp.eq.s32.totalorder %s19, 1
    %p178 = por %p176, %p177
    %p180 = scmp.ne.s32.totalorder %s163, %s179
    %p181 = scmp.eq.s32.totalorder %s19, 0
    %p182 = por %p180, %p181
    %p183 = scmp.le.s32.totalorder 1, %s13
    %p184 = scmp.lt.s32.totalorder %s13, 3
    %p185 = pnand %p183, %p184
    %p186 = pneg %p185
    // Predicated region
    $region9: #{resnet_forward.1} parent=5 // pred_check
      _
    $region10: #{resnet_forward.1} parent=5 // pred_check_branch
      %188 = sbr.rel (%p185) target = $region12
    $region11: #{resnet_forward.1} parent=5 // pred_region
      %s189 = ssub.s32 %s13, 1
      // Predicated region
      $region13: #{resnet_forward.1} parent=11 // pred_check
        %p190 = pneg %p60
      $region14: #{resnet_forward.1} parent=11 // pred_check_branch
        %192 = sbr.rel (%p190) target = $region16
      $region15: #{resnet_forward.1} parent=11 // pred_region
        _
      $region16: #{resnet_forward.1} parent=11 // pred_fallthru
        _
      // Predicated region
      $region17: #{resnet_forward.1} parent=11 // pred_check
        %p193 = pneg %p81
      $region18: #{resnet_forward.1} parent=11 // pred_check_branch
        %195 = sbr.rel (%p193) target = $region20
      $region19: #{resnet_forward.1} parent=11 // pred_region
        _
      $region20: #{resnet_forward.1} parent=11 // pred_fallthru
        _
      // Predicated region
      $region21: #{resnet_forward.1} parent=11 // pred_check
        %p196 = pneg %p102
      $region22: #{resnet_forward.1} parent=11 // pred_check_branch
        %198 = sbr.rel (%p196) target = $region24
      $region23: #{resnet_forward.1} parent=11 // pred_region
        _
      $region24: #{resnet_forward.1} parent=11 // pred_fallthru
        _
      // Predicated region
      $region25: #{resnet_forward.1} parent=11 // pred_check
        %p199 = pneg %p123
      $region26: #{resnet_forward.1} parent=11 // pred_check_branch
        %201 = sbr.rel (%p199) target = $region28
      $region27: #{resnet_forward.1} parent=11 // pred_region
        _
      $region28: #{resnet_forward.1} parent=11 // pred_fallthru
        _
    $region12: #{resnet_forward.1} parent=5 // pred_fallthru
      _
    %p202 = scmp.lt.s32.totalorder %s13, 2
    // Predicated region
    $region29: #{resnet_forward.1} parent=5 // pred_check
      %p203 = pneg %p202
    $region30: #{resnet_forward.1} parent=5 // pred_check_branch
      %205 = sbr.rel (%p203) target = $region32
    $region31: #{resnet_forward.1} parent=5 // pred_region
      // Predicated region
      $region33: #{resnet_forward.1} parent=31 // pred_check
        %p206 = pneg %p33
      $region34: #{resnet_forward.1} parent=31 // pred_check_branch
        %208 = sbr.rel (%p206) target = $region36
      $region35: #{resnet_forward.1} parent=31 // pred_region
        %p209 = scmp.lt.s32.totalorder %s13, 1
        %s210 = scalar_select %p209, %s13, 1
        %s211 = smul.addr %s210, 5
        %s212 = smul.addr %s211, 4
        %s213 = scalar_lea.vmem %s0, %s212
      $region36: #{resnet_forward.1} parent=31 // pred_fallthru
        _
    $region32: #{resnet_forward.1} parent=5 // pred_fallthru
      _
    %p214 = scmp.le.s32.totalorder 1, %s13
    %p215 = scmp.lt.s32.totalorder %s13, 3
    %p216 = pnand %p214, %p215
    %p217 = pneg %p216
    // Predicated region
    $region37: #{resnet_forward.1} parent=5 // pred_check
      _
    $region38: #{resnet_forward.1} parent=5 // pred_check_branch
      %219 = sbr.rel (%p216) target = $region40
    $region39: #{resnet_forward.1} parent=5 // pred_region
      %s220 = ssub.s32 %s13, 1
      %p221 = scmp.lt.s32.totalorder %s18, 1
      %s222 = scalar_select %p221, %s18, 1
      %s223 = smul.addr %s222, 5
      %s224 = smul.addr %s223, 4
      %s225 = scalar_lea.vmem %s0, %s224
      %p226 = pneg %p39
      %p227 = pneg %p36
      %p228 = pneg %p60
      %p229 = pneg %p57
      %p230 = pneg %p81
      %p231 = pneg %p78
      %p232 = pneg %p102
      %p233 = pneg %p99
      %p234 = pneg %p123
      %p235 = pneg %p120
      %p236 = pneg %p149
      %p237 = pneg %p146
      %p238 = scmp.lt.s32.totalorder %s18, 1
      %s239 = scalar_select %p238, %s18, 1
      %s240 = smul.addr %s239, 2
      %s241 = smul.addr %s240, 8
      %s242 = scalar_lea.vmem %s5, %s241
      %p243 = pneg %p175
      %p244 = pneg %p172
      %p245 = scmp.lt.s32.totalorder %s18, 1
      %s246 = scalar_select %p245, %s18, 1
      %s247 = smul.addr %s246, 8
      %s248 = scalar_lea.vmem %s6, %s247
      %p249 = scmp.lt.s32.totalorder %s18, 1
      %s250 = scalar_select %p249, %s18, 1
      %s251 = smul.addr %s250, 5
      %s252 = smul.addr %s251, 4
      %s253 = scalar_lea.vmem %s0, %s252
      %p254 = scmp.lt.s32.totalorder %s18, 1
      %s255 = scalar_select %p254, %s18, 1
      %s256 = smul.addr %s255, 2
      %s257 = smul.addr %s256, 8
      %s258 = scalar_lea.vmem %s5, %s257
      %p259 = scmp.lt.s32.totalorder %s18, 1
      %s260 = scalar_select %p259, %s18, 1
      %s261 = smul.addr %s260, 8
      %s262 = scalar_lea.vmem %s6, %s261
      %264 = vst [vmem:[#allocation2] sm:$0xf] 0.0
      %vm265 = vcmask 1044000
      %vm266 = vcmask 556036
      %vm267 = vmor %vm266, %vm265
      %268 = vst.msk [vmem:[#allocation2 + $0xc] sm:$0xff] %vm267, 0.0
      %269 = vst [vmem:[#allocation3] sm:$0xf] 0.0
      %270 = vst.msk [vmem:[#allocation3 + $0xc] sm:$0xff] %vm267, 0.0
      %271 = vst [vmem:[#allocation4] sm:$0xf] 0.0
      %272 = vst.msk [vmem:[#allocation4 + $0xc] sm:$0xff] %vm267, 0.0
      %273 = vst [vmem:[#allocation5] sm:$0xff] 0.0
      %vm274 = vcmask 1048096
      %275 = vst.msk [vmem:[#allocation5 + $0x18] sm:$0xff] %vm274, 0.0
      %vm276 = vcmask 556032
      %277 = vst.msk [vmem:[#allocation5 + $0x20] sm:$0xff] %vm276, 0.0
      %v278 = vld [vmem:[%s4] ss:$2 sm:$0x7]
      %s279 = scalar_lea.vmem %s4, 1
      %v280 = vld [vmem:[%s279] ss:$2 sm:$0x7]
      %v281 = vld [vmem:[%s253] sm:$0xff]
      %v282 = vld [vmem:[%s253 + $0x8] sm:$0xff]
      %v285 = vcombine.high %v281, %v281
      %v286 = vcombine.high %v282, %v282
      %v289 = vpack.c.bf16 %v281, %v281
      %v290 = vpack.c.bf16 %v285, %v285
      %v291 = vpack.c.bf16 %v282, %v282
      %v292 = vpack.c.bf16 %v286, %v286
      %v297 = vunpack.c.l.b16 %v289
      %v298 = vunpack.c.l.b16 %v290
      %v299 = vunpack.c.l.b16 %v291
      %v300 = vunpack.c.l.b16 %v292
      %v301 = vpack.c.b16 %v298, %v297
      %v302 = vpack.c.b16 %v300, %v299
      %303 = vrot.lane.b32.xlu0 %v301, 19
      %v304 = vpop.permute.xlu0 %303
      %305 = vrot.lane.b32.xlu0 %v302, 19
      %v306 = vpop.permute.xlu0 %305
      %v307 = vrot.slane %v304, 4
      %v308 = vrot.slane %v306, 4
      %vm309 = vcmask 1043456
      %v310 = vsel %vm309, %v307, %v308
      %vm311 = vcmask 154624
      %v312 = vsel %vm311, %v304, %v310
      %v313 = vsel %vm311, %v306, %v308
      %316 = vst [vmem:[#allocation6] sm:$0x33] %v312
      %vm317 = vcmask 549888
      %318 = vst.msk [vmem:[#allocation6 + $0x8] sm:$0x3] %vm317, %v313
      %v319 = vld [vmem:[%s253] sm:$0xff]
      %v320 = vld [vmem:[%s253 + $0x8] sm:$0xff]
      %v323 = vcombine.high %v319, %v319
      %v324 = vcombine.high %v320, %v320
      %v327 = vpack.c.bf16 %v319, %v319
      %v328 = vpack.c.bf16 %v323, %v323
      %v329 = vpack.c.bf16 %v320, %v320
      %v330 = vpack.c.bf16 %v324, %v324
      %v335 = vunpack.c.l.b16 %v327
      %v336 = vunpack.c.l.b16 %v328
      %v337 = vunpack.c.l.b16 %v329
      %v338 = vunpack.c.l.b16 %v330
      %v339 = vpack.c.b16 %v336, %v335
      %v340 = vpack.c.b16 %v338, %v337
      %v341 = vrot.slane %v339, 6
      %v342 = vrot.slane %v340, 6
      %343 = vrot.lane.b32.xlu0 %v341, 18
      %v344 = vpop.permute.xlu0 %343
      %345 = vrot.lane.b32.xlu0 %v342, 18
      %v346 = vpop.permute.xlu0 %345
      %v347 = vrot.slane %v344, 4
      %v348 = vrot.slane %v346, 4
      %v349 = vsel %vm309, %v347, %v348
      %vm350 = vcmask 146432
      %v351 = vsel %vm350, %v344, %v349
      %v352 = vsel %vm350, %v346, %v348
      %355 = vst [vmem:[#allocation6] sm:$0xcc] %v351
      %vm356 = vcmask 551938
      %357 = vst.msk [vmem:[#allocation6 + $0x8] sm:$0xc] %vm356, %v352
      %v358 = vld [vmem:[%s253] sm:$0xff]
      %v359 = vld [vmem:[%s253 + $0x8] sm:$0xff]
      %v362 = vcombine.high %v358, %v358
      %v363 = vcombine.high %v359, %v359
      %v366 = vpack.c.bf16 %v358, %v358
      %v367 = vpack.c.bf16 %v362, %v362
      %v368 = vpack.c.bf16 %v359, %v359
      %v369 = vpack.c.bf16 %v363, %v363
      %v374 = vunpack.c.l.b16 %v366
      %v375 = vunpack.c.l.b16 %v367
      %v376 = vunpack.c.l.b16 %v368
      %v377 = vunpack.c.l.b16 %v369
      %v378 = vpack.c.b16 %v375, %v374
      %v379 = vpack.c.b16 %v377, %v376
      %380 = vrot.lane.b32.xlu0 %v378, 17
      %v381 = vpop.permute.xlu0 %380
      %382 = vrot.lane.b32.xlu0 %v379, 17
      %v383 = vpop.permute.xlu0 %382
      %v384 = vrot.slane %v381, 4
      %v385 = vrot.slane %v383, 4
      %v386 = vsel %vm309, %v384, %v385
      %vm387 = vcmask 138240
      %v388 = vsel %vm387, %v381, %v386
      %v389 = vsel %vm387, %v383, %v385
      %392 = vst [vmem:[#allocation6 + $0xc] sm:$0x33] %v388
      %393 = vst.msk [vmem:[#allocation6 + $0x14] sm:$0x3] %vm317, %v389
      %v394 = vld [vmem:[%s253] sm:$0xff]
      %v395 = vld [vmem:[%s253 + $0x8] sm:$0xff]
      %v398 = vcombine.high %v394, %v394
      %v399 = vcombine.high %v395, %v395
      %v402 = vpack.c.bf16 %v394, %v394
      %v403 = vpack.c.bf16 %v398, %v398
      %v404 = vpack.c.bf16 %v395, %v395
      %v405 = vpack.c.bf16 %v399, %v399
      %v410 = vunpack.c.l.b16 %v402
      %v411 = vunpack.c.l.b16 %v403
      %v412 = vunpack.c.l.b16 %v404
      %v413 = vunpack.c.l.b16 %v405
      %v414 = vpack.c.b16 %v411, %v410
      %v415 = vpack.c.b16 %v413, %v412
      %v416 = vrot.slane %v414, 6
      %v417 = vrot.slane %v415, 6
      %418 = vrot.lane.b32.xlu0 %v416, 1
      %v419 = vpop.permute.xlu0 %418
      %420 = vrot.lane.b32.xlu0 %v417, 1
      %v421 = vpop.permute.xlu0 %420
      %v422 = vrot.slane %v419, 4
      %v423 = vrot.slane %v421, 4
      %v424 = vsel %vm309, %v422, %v423
      %vm425 = vcmask 7168
      %v426 = vsel %vm425, %v419, %v424
      %v427 = vsel %vm425, %v421, %v423
      %430 = vst [vmem:[#allocation6 + $0xc] sm:$0xcc] %v426
      %431 = vst.msk [vmem:[#allocation6 + $0x14] sm:$0xc] %vm356, %v427
      %v432 = vld [vmem:[%s253 + $0x4] sm:$0xff]
      %v433 = vld [vmem:[%s253 + $0xc] sm:$0xf]
      %v435 = vcombine.high %v432, %v432
      %v437 = vpack.c.bf16 %v432, %v432
      %v438 = vpack.c.bf16 %v435, %v435
      %v439 = vpack.c.bf16 %v433, %v433
      %v443 = vunpack.c.l.b16 %v437
      %v444 = vunpack.c.l.b16 %v438
      %v445 = vunpack.c.l.b16 %v439
      %v446 = vpack.c.b16 %v444, %v443
      %v447 = vpack.c.b16 %v445, %v445
      %450 = vst [vmem:[#allocation6 + $0x18] sm:$0x33] %v446
      %451 = vst.msk [vmem:[#allocation6 + $0x20] sm:$0x3] %vm317, %v447
      %v452 = vld [vmem:[%s253 + $0x4] sm:$0xff]
      %v453 = vld [vmem:[%s253 + $0xc] sm:$0xf]
      %v455 = vcombine.high %v452, %v452
      %v457 = vpack.c.bf16 %v452, %v452
      %v458 = vpack.c.bf16 %v455, %v455
      %v459 = vpack.c.bf16 %v453, %v453
      %v463 = vunpack.c.l.b16 %v457
      %v464 = vunpack.c.l.b16 %v458
      %v465 = vunpack.c.l.b16 %v459
      %v466 = vpack.c.b16 %v464, %v463
      %v467 = vpack.c.b16 %v465, %v465
      %v468 = vrot.slane %v466, 6
      %v469 = vrot.slane %v467, 6
      %470 = vrot.lane.b32.xlu0 %v468, 127
      %v471 = vpop.permute.xlu0 %470
      %472 = vrot.lane.b32.xlu0 %v469, 127
      %v473 = vpop.permute.xlu0 %472
      %v474 = vrot.slane %v471, 4
      %v475 = vrot.slane %v473, 4
      %v476 = vsel %vm309, %v474, %v475
      %vm477 = vcmask 1039360
      %v478 = vsel %vm477, %v471, %v476
      %481 = vst [vmem:[#allocation6 + $0x18] sm:$0xcc] %v478
      %482 = vst.msk [vmem:[#allocation6 + $0x20] sm:$0xc] %vm356, %v473
      %v483 = vld [vmem:[%s253 + $0x4] sm:$0xff]
      %v484 = vld [vmem:[%s253 + $0xc] sm:$0xf]
      %v486 = vcombine.high %v483, %v483
      %v488 = vpack.c.bf16 %v483, %v483
      %v489 = vpack.c.bf16 %v486, %v486
      %v490 = vpack.c.bf16 %v484, %v484
      %v494 = vunpack.c.l.b16 %v488
      %v495 = vunpack.c.l.b16 %v489
      %v496 = vunpack.c.l.b16 %v490
      %v497 = vpack.c.b16 %v495, %v494
      %v498 = vpack.c.b16 %v496, %v496
      %499 = vrot.lane.b32.xlu0 %v497, 111
      %v500 = vpop.permute.xlu0 %499
      %501 = vrot.lane.b32.xlu0 %v498, 111
      %v502 = vpop.permute.xlu0 %501
      %v503 = vrot.slane %v500, 4
      %v504 = vrot.slane %v502, 4
      %v505 = vsel %vm309, %v503, %v504
      %vm506 = vcmask 908288
      %v507 = vsel %vm506, %v500, %v505
      %510 = vst [vmem:[#allocation6 + $0x24] sm:$0x33] %v507
      %511 = vst.msk [vmem:[#allocation6 + $0x2c] sm:$0x3] %vm317, %v502
      %v512 = vld [vmem:[%s253 + $0x4] sm:$0xff]
      %v513 = vld [vmem:[%s253 + $0xc] sm:$0xf]
      %v515 = vcombine.high %v512, %v512
      %v517 = vpack.c.bf16 %v512, %v512
      %v518 = vpack.c.bf16 %v515, %v515
      %v519 = vpack.c.bf16 %v513, %v513
      %v523 = vunpack.c.l.b16 %v517
      %v524 = vunpack.c.l.b16 %v518
      %v525 = vunpack.c.l.b16 %v519
      %v526 = vpack.c.b16 %v524, %v523
      %v527 = vpack.c.b16 %v525, %v525
      %v528 = vrot.slane %v526, 6
      %v529 = vrot.slane %v527, 6
      %530 = vrot.lane.b32.xlu0 %v528, 110
      %v531 = vpop.permute.xlu0 %530
      %532 = vrot.lane.b32.xlu0 %v529, 110
      %v533 = vpop.permute.xlu0 %532
      %v534 = vrot.slane %v531, 4
      %v535 = vrot.slane %v533, 4
      %v536 = vsel %vm309, %v534, %v535
      %vm537 = vcmask 900096
      %v538 = vsel %vm537, %v531, %v536
      %541 = vst [vmem:[#allocation6 + $0x24] sm:$0xcc] %v538
      %542 = vst.msk [vmem:[#allocation6 + $0x2c] sm:$0xc] %vm356, %v533
      %v543 = vld [vmem:[%s253 + $0x4] sm:$0xff]
      %v544 = vld [vmem:[%s253 + $0xc] sm:$0xf]
      %v546 = vcombine.high %v543, %v543
      %v548 = vpack.c.bf16 %v543, %v543
      %v549 = vpack.c.bf16 %v546, %v546
      %v550 = vpack.c.bf16 %v544, %v544
      %v554 = vunpack.c.l.b16 %v548
      %v555 = vunpack.c.l.b16 %v549
      %v556 = vunpack.c.l.b16 %v550
      %v557 = vpack.c.b16 %v555, %v554
      %v558 = vpack.c.b16 %v556, %v556
      %559 = vrot.lane.b32.xlu0 %v557, 109
      %v560 = vpop.permute.xlu0 %559
      %561 = vrot.lane.b32.xlu0 %v558, 109
      %v562 = vpop.permute.xlu0 %561
      %v563 = vrot.slane %v560, 4
      %v564 = vrot.slane %v562, 4
      %v565 = vsel %vm309, %v563, %v564
      %vm566 = vcmask 891904
      %v567 = vsel %vm566, %v560, %v565
      %570 = vst [vmem:[#allocation6 + $0x30] sm:$0x33] %v567
      %571 = vst.msk [vmem:[#allocation6 + $0x38] sm:$0x3] %vm317, %v562
      %v572 = vld [vmem:[%s1] sm:$0x3]
      %v573 = vld [vmem:[#allocation6] sm:$0xff]
      %v574 = vld [vmem:[#allocation6 + $0x8] sm:$0xf]
      %v575 = vld [vmem:[#allocation6 + $0xc] sm:$0xff]
      %v576 = vld [vmem:[#allocation6 + $0x14] sm:$0xf]
      %v577 = vld [vmem:[#allocation6 + $0x18] sm:$0xff]
      %v578 = vld [vmem:[#allocation6 + $0x20] sm:$0xf]
      %v579 = vld [vmem:[#allocation6 + $0x24] sm:$0xff]
      %v580 = vld [vmem:[#allocation6 + $0x2c] sm:$0xf]
      %v581 = vld [vmem:[#allocation6 + $0x30] sm:$0x33]
      %v582 = vld [vmem:[#allocation6 + $0x38] sm:$0x3]
      %v593 = vunpack.c.l.b16 %v573
      %v594 = vunpack.c.h.b16 %v573
      %v595 = vunpack.c.l.b16 %v574
      %v596 = vunpack.c.l.b16 %v575
      %v597 = vunpack.c.h.b16 %v575
      %v598 = vunpack.c.l.b16 %v576
      %v599 = vunpack.c.l.b16 %v577
      %v600 = vunpack.c.h.b16 %v577
      %v601 = vunpack.c.l.b16 %v578
      %v602 = vunpack.c.l.b16 %v579
      %v603 = vunpack.c.h.b16 %v579
      %v604 = vunpack.c.l.b16 %v580
      %v605 = vunpack.c.l.b16 %v581
      %v606 = vunpack.c.h.b16 %v581
      %v607 = vunpack.c.l.b16 %v582
      %v608 = vpack.c.b16 %v596, %v593
      %v609 = vpack.c.b16 %v597, %v594
      %v610 = vpack.c.b16 %v598, %v595
      %v611 = vpack.c.b16 %v602, %v599
      %v612 = vpack.c.b16 %v603, %v600
      %v613 = vpack.c.b16 %v604, %v601
      %v614 = vpack.c.b16 %v605, %v605
      %v615 = vpack.c.b16 %v606, %v606
      %v616 = vpack.c.b16 %v607, %v607
      %vm623 = vcmask 293888
      %v625 = vsel %vm623, %v572, 0
      %vm627 = vcmask 1041408
      %v629 = vsel %vm627, %v614, 0
      %v632 = vsel %vm627, %v615, 0
      %v635 = vsel %vm627, %v616, 0
      %637 = vmatprep.subr.bf16.mxu0 0
      %638 = vmatpush1.bf16.msra.mxu0 0
      %639 = vmatprep.subr.bf16.mxu0 0
      %640 = vmatpush1.bf16.msra.mxu0 0
      %641 = vmatprep.subr.bf16.mxu0 0
      %642 = vmatpush1.bf16.msra.mxu0 0
      %643 = vmatprep.subr.bf16.mxu0 0
      %644 = vmatpush1.bf16.msra.mxu0 0
      %645 = vmatprep.subr.bf16.mxu0 0
      %646 = vmatpush1.bf16.msra.mxu0 0
      %647 = vmatprep.subr.bf16.mxu0 %v632
      %648 = vmatpush1.bf16.msra.mxu0 %v629
      %649 = vmatprep.subr.bf16.mxu0 %v612
      %650 = vmatpush1.bf16.msra.mxu0 %v611
      %651 = vmatprep.subr.bf16.mxu0 %v609
      %652 = vmatpush1.bf16.msra.mxu0 %v608
      %653 = vmatprep.subr.bf16.mxu0 0
      %654 = vmatpush2.bf16.msra.mxu0 0
      %655 = vmatprep.subr.bf16.mxu0 0
      %656 = vmatpush2.bf16.msra.mxu0 0
      %657 = vmatprep.subr.bf16.mxu0 0
      %658 = vmatpush2.bf16.msra.mxu0 0
      %659 = vmatprep.subr.bf16.mxu0 0
      %660 = vmatpush2.bf16.msra.mxu0 0
      %661 = vmatprep.subr.bf16.mxu0 0
      %662 = vmatpush2.bf16.msra.mxu0 0
      %663 = vmatprep.subr.bf16.mxu0 0
      %664 = vmatpush2.bf16.msra.mxu0 0
      %665 = vmatprep.subr.bf16.mxu0 0
      %666 = vmatpush2.bf16.msra.mxu0 0
      %667 = vmatprep.subr.bf16.mxu0 0
      %668 = vmatpush2.bf16.msra.mxu0 0
      %669 = vmatprep.mubr.bf16.mxu0 0
      %670 = vmatmul.mubr.bf16.gmra.mxu0 %v625
      %v671 = vpop.f32.mrf.mxu0
      %v672 = vadd.f32 0.0, %v671
      %v673 = vpop.f32.mrf.mxu0
      %v674 = vadd.f32 0.0, %v673
      %v675 = vpop.f32.mrf.mxu0
      %v676 = vpop.f32.mrf.mxu0
      %677 = vdwg.mxu0
      %678 = vmatprep.subr.bf16.mxu0 0
      %679 = vmatpush1.bf16.msra.mxu0 0
      %680 = vmatprep.subr.bf16.mxu0 0
      %681 = vmatpush1.bf16.msra.mxu0 0
      %682 = vmatprep.subr.bf16.mxu0 0
      %683 = vmatpush1.bf16.msra.mxu0 0
      %684 = vmatprep.subr.bf16.mxu0 0
      %685 = vmatpush1.bf16.msra.mxu0 0
      %686 = vmatprep.subr.bf16.mxu0 0
      %687 = vmatpush1.bf16.msra.mxu0 0
      %688 = vmatprep.subr.bf16.mxu0 0
      %689 = vmatpush1.bf16.msra.mxu0 %v635
      %690 = vmatprep.subr.bf16.mxu0 0
      %691 = vmatpush1.bf16.msra.mxu0 %v613
      %692 = vmatprep.subr.bf16.mxu0 0
      %693 = vmatpush1.bf16.msra.mxu0 %v610
      %694 = vmatprep.subr.bf16.mxu0 0
      %695 = vmatpush2.bf16.msra.mxu0 0
      %696 = vmatprep.subr.bf16.mxu0 0
      %697 = vmatpush2.bf16.msra.mxu0 0
      %698 = vmatprep.subr.bf16.mxu0 0
      %699 = vmatpush2.bf16.msra.mxu0 0
      %700 = vmatprep.subr.bf16.mxu0 0
      %701 = vmatpush2.bf16.msra.mxu0 0
      %702 = vmatprep.subr.bf16.mxu0 0
      %703 = vmatpush2.bf16.msra.mxu0 0
      %704 = vmatprep.subr.bf16.mxu0 0
      %705 = vmatpush2.bf16.msra.mxu0 0
      %706 = vmatprep.subr.bf16.mxu0 0
      %707 = vmatpush2.bf16.msra.mxu0 0
      %708 = vmatprep.subr.bf16.mxu0 0
      %709 = vmatpush2.bf16.msra.mxu0 0
      %710 = vmatprep.mubr.bf16.mxu0 0
      %711 = vmatmul.mubr.bf16.gmra.mxu0 %v625
      %v712 = vpop.f32.mrf.mxu0
      %v713 = vadd.f32 0.0, %v712
      %v714 = vpop.f32.mrf.mxu0
      %v715 = vpop.f32.mrf.mxu0
      %v716 = vpop.f32.mrf.mxu0
      %717 = vdwg.mxu0
      %v718 = vld [vmem:[%s2] sm:$0xf]
      %720 = vset.pattern.permute.xlu0 0
      %721 = vperm.xlu0 %720, %v718
      %v722 = vpop.permute.xlu0 %721
      %v724 = vmul.f32 %v672, %v722
      %v725 = vmul.f32 %v674, %v722
      %v726 = vmul.f32 %v713, %v722
      %727 = vset.pattern.permute.xlu0 1
      %728 = vperm.xlu0 %727, %v718
      %v729 = vpop.permute.xlu0 %728
      %v731 = vadd.f32 %v724, %v729
      %v732 = vadd.f32 %v725, %v729
      %v733 = vadd.f32 %v726, %v729
      %v734 = vmax.f32 %v731, 0.0
      %v735 = vmax.f32 %v732, 0.0
      %v736 = vmax.f32 %v733, 0.0
      %v738 = vlaneseq
      %v739 = vshrl.u32 %v738, 7
      %v740 = vsub.s32 0, %v739
      %v741 = vrot.slane %v278, %v740
      %v742 = vlaneseq
      %v743 = vshrl.u32 %v742, 7
      %v744 = vsub.s32 1, %v743
      %v745 = vrot.slane %v278, %v744
      %v746 = vlaneseq
      %v747 = vshrl.u32 %v746, 7
      %v748 = vsub.s32 2, %v747
      %v749 = vrot.slane %v278, %v748
      %v753 = vmul.f32 %v734, %v741
      %v754 = vmul.f32 %v735, %v745
      %v755 = vmul.f32 %v736, %v749
      %v758 = vcombine.low %v753, %v754
      %760 = vst [vmem:[#allocation2 + $0x4] sm:$0xff] %v758
      %vm761 = vcmask 551936
      %762 = vst.msk [vmem:[#allocation2 + $0xc] sm:$0xf] %vm761, %v755
      %v763 = vld [vmem:[#allocation2] sm:$0xff]
      %v764 = vld [vmem:[#allocation2 + $0x8] sm:$0xff]
      %v767 = vcombine.high %v763, %v763
      %v768 = vcombine.high %v764, %v764
      %v771 = vpack.c.bf16 %v763, %v763
      %v772 = vpack.c.bf16 %v767, %v767
      %v773 = vpack.c.bf16 %v764, %v764
      %v774 = vpack.c.bf16 %v768, %v768
      %v779 = vunpack.c.l.b16 %v771
      %v780 = vunpack.c.l.b16 %v772
      %v781 = vunpack.c.l.b16 %v773
      %v782 = vunpack.c.l.b16 %v774
      %v783 = vpack.c.b16 %v780, %v779
      %v784 = vpack.c.b16 %v782, %v781
      %785 = vrot.lane.b32.xlu0 %v783, 19
      %v786 = vpop.permute.xlu0 %785
      %787 = vrot.lane.b32.xlu0 %v784, 19
      %v788 = vpop.permute.xlu0 %787
      %v789 = vrot.slane %v786, 4
      %v790 = vrot.slane %v788, 4
      %v791 = vsel %vm309, %v789, %v790
      %v792 = vsel %vm311, %v786, %v791
      %v793 = vsel %vm311, %v788, %v790
      %796 = vst [vmem:[#allocation6] sm:$0x33] %v792
      %797 = vst.msk [vmem:[#allocation6 + $0x8] sm:$0x3] %vm317, %v793
      %v798 = vld [vmem:[#allocation2] sm:$0xff]
      %v799 = vld [vmem:[#allocation2 + $0x8] sm:$0xff]
      %v802 = vcombine.high %v798, %v798
      %v803 = vcombine.high %v799, %v799
      %v806 = vpack.c.bf16 %v798, %v798
      %v807 = vpack.c.bf16 %v802, %v802
      %v808 = vpack.c.bf16 %v799, %v799
      %v809 = vpack.c.bf16 %v803, %v803
      %v814 = vunpack.c.l.b16 %v806
      %v815 = vunpack.c.l.b16 %v807
      %v816 = vunpack.c.l.b16 %v808
      %v817 = vunpack.c.l.b16 %v809
      %v818 = vpack.c.b16 %v815, %v814
      %v819 = vpack.c.b16 %v817, %v816
      %v820 = vrot.slane %v818, 6
      %v821 = vrot.slane %v819, 6
      %822 = vrot.lane.b32.xlu0 %v820, 18
      %v823 = vpop.permute.xlu0 %822
      %824 = vrot.lane.b32.xlu0 %v821, 18
      %v825 = vpop.permute.xlu0 %824
      %v826 = vrot.slane %v823, 4
      %v827 = vrot.slane %v825, 4
      %v828 = vsel %vm309, %v826, %v827
      %v829 = vsel %vm350, %v823, %v828
      %v830 = vsel %vm350, %v825, %v827
      %833 = vst [vmem:[#allocation6] sm:$0xcc] %v829
      %834 = vst.msk [vmem:[#allocation6 + $0x8] sm:$0xc] %vm356, %v830
      %v835 = vld [vmem:[#allocation2] sm:$0xff]
      %v836 = vld [vmem:[#allocation2 + $0x8] sm:$0xff]
      %v839 = vcombine.high %v835, %v835
      %v840 = vcombine.high %v836, %v836
      %v843 = vpack.c.bf16 %v835, %v835
      %v844 = vpack.c.bf16 %v839, %v839
      %v845 = vpack.c.bf16 %v836, %v836
      %v846 = vpack.c.bf16 %v840, %v840
      %v851 = vunpack.c.l.b16 %v843
      %v852 = vunpack.c.l.b16 %v844
      %v853 = vunpack.c.l.b16 %v845
      %v854 = vunpack.c.l.b16 %v846
      %v855 = vpack.c.b16 %v852, %v851
      %v856 = vpack.c.b16 %v854, %v853
      %857 = vrot.lane.b32.xlu0 %v855, 17
      %v858 = vpop.permute.xlu0 %857
      %859 = vrot.lane.b32.xlu0 %v856, 17
      %v860 = vpop.permute.xlu0 %859
      %v861 = vrot.slane %v858, 4
      %v862 = vrot.slane %v860, 4
      %v863 = vsel %vm309, %v861, %v862
      %v864 = vsel %vm387, %v858, %v863
      %v865 = vsel %vm387, %v860, %v862
      %868 = vst [vmem:[#allocation6 + $0xc] sm:$0x33] %v864
      %869 = vst.msk [vmem:[#allocation6 + $0x14] sm:$0x3] %vm317, %v865
      %v870 = vld [vmem:[#allocation2] sm:$0xff]
      %v871 = vld [vmem:[#allocation2 + $0x8] sm:$0xff]
      %v874 = vcombine.high %v870, %v870
      %v875 = vcombine.high %v871, %v871
      %v878 = vpack.c.bf16 %v870, %v870
      %v879 = vpack.c.bf16 %v874, %v874
      %v880 = vpack.c.bf16 %v871, %v871
      %v881 = vpack.c.bf16 %v875, %v875
      %v886 = vunpack.c.l.b16 %v878
      %v887 = vunpack.c.l.b16 %v879
      %v888 = vunpack.c.l.b16 %v880
      %v889 = vunpack.c.l.b16 %v881
      %v890 = vpack.c.b16 %v887, %v886
      %v891 = vpack.c.b16 %v889, %v888
      %v892 = vrot.slane %v890, 6
      %v893 = vrot.slane %v891, 6
      %894 = vrot.lane.b32.xlu0 %v892, 1
      %v895 = vpop.permute.xlu0 %894
      %896 = vrot.lane.b32.xlu0 %v893, 1
      %v897 = vpop.permute.xlu0 %896
      %v898 = vrot.slane %v895, 4
      %v899 = vrot.slane %v897, 4
      %v900 = vsel %vm309, %v898, %v899
      %v901 = vsel %vm425, %v895, %v900
      %v902 = vsel %vm425, %v897, %v899
      %905 = vst [vmem:[#allocation6 + $0xc] sm:$0xcc] %v901
      %906 = vst.msk [vmem:[#allocation6 + $0x14] sm:$0xc] %vm356, %v902
      %v907 = vld [vmem:[#allocation2 + $0x4] sm:$0xff]
      %v908 = vld [vmem:[#allocation2 + $0xc] sm:$0xf]
      %v910 = vcombine.high %v907, %v907
      %v912 = vpack.c.bf16 %v907, %v907
      %v913 = vpack.c.bf16 %v910, %v910
      %v914 = vpack.c.bf16 %v908, %v908
      %v918 = vunpack.c.l.b16 %v912
      %v919 = vunpack.c.l.b16 %v913
      %v920 = vunpack.c.l.b16 %v914
      %v921 = vpack.c.b16 %v919, %v918
      %v922 = vpack.c.b16 %v920, %v920
      %925 = vst [vmem:[#allocation6 + $0x18] sm:$0x33] %v921
      %926 = vst.msk [vmem:[#allocation6 + $0x20] sm:$0x3] %vm317, %v922
      %v927 = vld [vmem:[#allocation2 + $0x4] sm:$0xff]
      %v928 = vld [vmem:[#allocation2 + $0xc] sm:$0xf]
      %v930 = vcombine.high %v927, %v927
      %v932 = vpack.c.bf16 %v927, %v927
      %v933 = vpack.c.bf16 %v930, %v930
      %v934 = vpack.c.bf16 %v928, %v928
      %v938 = vunpack.c.l.b16 %v932
      %v939 = vunpack.c.l.b16 %v933
      %v940 = vunpack.c.l.b16 %v934
      %v941 = vpack.c.b16 %v939, %v938
      %v942 = vpack.c.b16 %v940, %v940
      %v943 = vrot.slane %v941, 6
      %v944 = vrot.slane %v942, 6
      %945 = vrot.lane.b32.xlu0 %v943, 127
      %v946 = vpop.permute.xlu0 %945
      %947 = vrot.lane.b32.xlu0 %v944, 127
      %v948 = vpop.permute.xlu0 %947
      %v949 = vrot.slane %v946, 4
      %v950 = vrot.slane %v948, 4
      %v951 = vsel %vm309, %v949, %v950
      %v952 = vsel %vm477, %v946, %v951
      %955 = vst [vmem:[#allocation6 + $0x18] sm:$0xcc] %v952
      %956 = vst.msk [vmem:[#allocation6 + $0x20] sm:$0xc] %vm356, %v948
      %v957 = vld [vmem:[#allocation2 + $0x4] sm:$0xff]
      %v958 = vld [vmem:[#allocation2 + $0xc] sm:$0xf]
      %v960 = vcombine.high %v957, %v957
      %v962 = vpack.c.bf16 %v957, %v957
      %v963 = vpack.c.bf16 %v960, %v960
      %v964 = vpack.c.bf16 %v958, %v958
      %v968 = vunpack.c.l.b16 %v962
      %v969 = vunpack.c.l.b16 %v963
      %v970 = vunpack.c.l.b16 %v964
      %v971 = vpack.c.b16 %v969, %v968
      %v972 = vpack.c.b16 %v970, %v970
      %973 = vrot.lane.b32.xlu0 %v971, 111
      %v974 = vpop.permute.xlu0 %973
      %975 = vrot.lane.b32.xlu0 %v972, 111
      %v976 = vpop.permute.xlu0 %975
      %v977 = vrot.slane %v974, 4
      %v978 = vrot.slane %v976, 4
      %v979 = vsel %vm309, %v977, %v978
      %v980 = vsel %vm506, %v974, %v979
      %983 = vst [vmem:[#allocation6 + $0x24] sm:$0x33] %v980
      %984 = vst.msk [vmem:[#allocation6 + $0x2c] sm:$0x3] %vm317, %v976
      %v985 = vld [vmem:[#allocation2 + $0x4] sm:$0xff]
      %v986 = vld [vmem:[#allocation2 + $0xc] sm:$0xf]
      %v988 = vcombine.high %v985, %v985
      %v990 = vpack.c.bf16 %v985, %v985
      %v991 = vpack.c.bf16 %v988, %v988
      %v992 = vpack.c.bf16 %v986, %v986
      %v996 = vunpack.c.l.b16 %v990
      %v997 = vunpack.c.l.b16 %v991
      %v998 = vunpack.c.l.b16 %v992
      %v999 = vpack.c.b16 %v997, %v996
      %v1000 = vpack.c.b16 %v998, %v998
      %v1001 = vrot.slane %v999, 6
      %v1002 = vrot.slane %v1000, 6
      %1003 = vrot.lane.b32.xlu0 %v1001, 110
      %v1004 = vpop.permute.xlu0 %1003
      %1005 = vrot.lane.b32.xlu0 %v1002, 110
      %v1006 = vpop.permute.xlu0 %1005
      %v1007 = vrot.slane %v1004, 4
      %v1008 = vrot.slane %v1006, 4
      %v1009 = vsel %vm309, %v1007, %v1008
      %v1010 = vsel %vm537, %v1004, %v1009
      %1013 = vst [vmem:[#allocation6 + $0x24] sm:$0xcc] %v1010
      %1014 = vst.msk [vmem:[#allocation6 + $0x2c] sm:$0xc] %vm356, %v1006
      %v1015 = vld [vmem:[#allocation2 + $0x4] sm:$0xff]
      %v1016 = vld [vmem:[#allocation2 + $0xc] sm:$0xf]
      %v1018 = vcombine.high %v1015, %v1015
      %v1020 = vpack.c.bf16 %v1015, %v1015
      %v1021 = vpack.c.bf16 %v1018, %v1018
      %v1022 = vpack.c.bf16 %v1016, %v1016
      %v1026 = vunpack.c.l.b16 %v1020
      %v1027 = vunpack.c.l.b16 %v1021
      %v1028 = vunpack.c.l.b16 %v1022
      %v1029 = vpack.c.b16 %v1027, %v1026
      %v1030 = vpack.c.b16 %v1028, %v1028
      %1031 = vrot.lane.b32.xlu0 %v1029, 109
      %v1032 = vpop.permute.xlu0 %1031
      %1033 = vrot.lane.b32.xlu0 %v1030, 109
      %v1034 = vpop.permute.xlu0 %1033
      %v1035 = vrot.slane %v1032, 4
      %v1036 = vrot.slane %v1034, 4
      %v1037 = vsel %vm309, %v1035, %v1036
      %v1038 = vsel %vm566, %v1032, %v1037
      %1041 = vst [vmem:[#allocation6 + $0x30] sm:$0x33] %v1038
      %1042 = vst.msk [vmem:[#allocation6 + $0x38] sm:$0x3] %vm317, %v1034
      %v1043 = vld [vmem:[%s1] sm:$0xc]
      %v1044 = vld [vmem:[#allocation6] sm:$0xff]
      %v1045 = vld [vmem:[#allocation6 + $0x8] sm:$0xf]
      %v1046 = vld [vmem:[#allocation6 + $0xc] sm:$0xff]
      %v1047 = vld [vmem:[#allocation6 + $0x14] sm:$0xf]
      %v1048 = vld [vmem:[#allocation6 + $0x18] sm:$0xff]
      %v1049 = vld [vmem:[#allocation6 + $0x20] sm:$0xf]
      %v1050 = vld [vmem:[#allocation6 + $0x24] sm:$0xff]
      %v1051 = vld [vmem:[#allocation6 + $0x2c] sm:$0xf]
      %v1052 = vld [vmem:[#allocation6 + $0x30] sm:$0x33]
      %v1053 = vld [vmem:[#allocation6 + $0x38] sm:$0x3]
      %v1055 = vunpack.c.l.b16 %v1043
      %v1056 = vpack.c.b16 %v1055, %v1055
      %v1057 = vrot.slane %v1056, 2
      %v1068 = vunpack.c.l.b16 %v1044
      %v1069 = vunpack.c.h.b16 %v1044
      %v1070 = vunpack.c.l.b16 %v1045
      %v1071 = vunpack.c.l.b16 %v1046
      %v1072 = vunpack.c.h.b16 %v1046
      %v1073 = vunpack.c.l.b16 %v1047
      %v1074 = vunpack.c.l.b16 %v1048
      %v1075 = vunpack.c.h.b16 %v1048
      %v1076 = vunpack.c.l.b16 %v1049
      %v1077 = vunpack.c.l.b16 %v1050
      %v1078 = vunpack.c.h.b16 %v1050
      %v1079 = vunpack.c.l.b16 %v1051
      %v1080 = vunpack.c.l.b16 %v1052
      %v1081 = vunpack.c.h.b16 %v1052
      %v1082 = vunpack.c.l.b16 %v1053
      %v1083 = vpack.c.b16 %v1071, %v1068
      %v1084 = vpack.c.b16 %v1072, %v1069
      %v1085 = vpack.c.b16 %v1073, %v1070
      %v1086 = vpack.c.b16 %v1077, %v1074
      %v1087 = vpack.c.b16 %v1078, %v1075
      %v1088 = vpack.c.b16 %v1079, %v1076
      %v1089 = vpack.c.b16 %v1080, %v1080
      %v1090 = vpack.c.b16 %v1081, %v1081
      %v1091 = vpack.c.b16 %v1082, %v1082
      %v1099 = vsel %vm623, %v1057, 0
      %v1102 = vsel %vm627, %v1089, 0
      %v1105 = vsel %vm627, %v1090, 0
      %v1108 = vsel %vm627, %v1091, 0
      %1110 = vmatprep.subr.bf16.mxu0 0
      %1111 = vmatpush1.bf16.msra.mxu0 0
      %1112 = vmatprep.subr.bf16.mxu0 0
      %1113 = vmatpush1.bf16.msra.mxu0 0
      %1114 = vmatprep.subr.bf16.mxu0 0
      %1115 = vmatpush1.bf16.msra.mxu0 0
      %1116 = vmatprep.subr.bf16.mxu0 0
      %1117 = vmatpush1.bf16.msra.mxu0 0
      %1118 = vmatprep.subr.bf16.mxu0 0
      %1119 = vmatpush1.bf16.msra.mxu0 0
      %1120 = vmatprep.subr.bf16.mxu0 %v1105
      %1121 = vmatpush1.bf16.msra.mxu0 %v1102
      %1122 = vmatprep.subr.bf16.mxu0 %v1087
      %1123 = vmatpush1.bf16.msra.mxu0 %v1086
      %1124 = vmatprep.subr.bf16.mxu0 %v1084
      %1125 = vmatpush1.bf16.msra.mxu0 %v1083
      %1126 = vmatprep.subr.bf16.mxu0 0
      %1127 = vmatpush2.bf16.msra.mxu0 0
      %1128 = vmatprep.subr.bf16.mxu0 0
      %1129 = vmatpush2.bf16.msra.mxu0 0
      %1130 = vmatprep.subr.bf16.mxu0 0
      %1131 = vmatpush2.bf16.msra.mxu0 0
      %1132 = vmatprep.subr.bf16.mxu0 0
      %1133 = vmatpush2.bf16.msra.mxu0 0
      %1134 = vmatprep.subr.bf16.mxu0 0
      %1135 = vmatpush2.bf16.msra.mxu0 0
      %1136 = vmatprep.subr.bf16.mxu0 0
      %1137 = vmatpush2.bf16.msra.mxu0 0
      %1138 = vmatprep.subr.bf16.mxu0 0
      %1139 = vmatpush2.bf16.msra.mxu0 0
      %1140 = vmatprep.subr.bf16.mxu0 0
      %1141 = vmatpush2.bf16.msra.mxu0 0
      %1142 = vmatprep.mubr.bf16.mxu0 0
      %1143 = vmatmul.mubr.bf16.gmra.mxu0 %v1099
      %v1144 = vpop.f32.mrf.mxu0
      %v1145 = vadd.f32 0.0, %v1144
      %v1146 = vpop.f32.mrf.mxu0
      %v1147 = vadd.f32 0.0, %v1146
      %v1148 = vpop.f32.mrf.mxu0
      %v1149 = vpop.f32.mrf.mxu0
      %1150 = vdwg.mxu0
      %1151 = vmatprep.subr.bf16.mxu0 0
      %1152 = vmatpush1.bf16.msra.mxu0 0
      %1153 = vmatprep.subr.bf16.mxu0 0
      %1154 = vmatpush1.bf16.msra.mxu0 0
      %1155 = vmatprep.subr.bf16.mxu0 0
      %1156 = vmatpush1.bf16.msra.mxu0 0
      %1157 = vmatprep.subr.bf16.mxu0 0
      %1158 = vmatpush1.bf16.msra.mxu0 0
      %1159 = vmatprep.subr.bf16.mxu0 0
      %1160 = vmatpush1.bf16.msra.mxu0 0
      %1161 = vmatprep.subr.bf16.mxu0 0
      %1162 = vmatpush1.bf16.msra.mxu0 %v1108
      %1163 = vmatprep.subr.bf16.mxu0 0
      %1164 = vmatpush1.bf16.msra.mxu0 %v1088
      %1165 = vmatprep.subr.bf16.mxu0 0
      %1166 = vmatpush1.bf16.msra.mxu0 %v1085
      %1167 = vmatprep.subr.bf16.mxu0 0
      %1168 = vmatpush2.bf16.msra.mxu0 0
      %1169 = vmatprep.subr.bf16.mxu0 0
      %1170 = vmatpush2.bf16.msra.mxu0 0
      %1171 = vmatprep.subr.bf16.mxu0 0
      %1172 = vmatpush2.bf16.msra.mxu0 0
      %1173 = vmatprep.subr.bf16.mxu0 0
      %1174 = vmatpush2.bf16.msra.mxu0 0
      %1175 = vmatprep.subr.bf16.mxu0 0
      %1176 = vmatpush2.bf16.msra.mxu0 0
      %1177 = vmatprep.subr.bf16.mxu0 0
      %1178 = vmatpush2.bf16.msra.mxu0 0
      %1179 = vmatprep.subr.bf16.mxu0 0
      %1180 = vmatpush2.bf16.msra.mxu0 0
      %1181 = vmatprep.subr.bf16.mxu0 0
      %1182 = vmatpush2.bf16.msra.mxu0 0
      %1183 = vmatprep.mubr.bf16.mxu0 0
      %1184 = vmatmul.mubr.bf16.gmra.mxu0 %v1099
      %v1185 = vpop.f32.mrf.mxu0
      %v1186 = vadd.f32 0.0, %v1185
      %v1187 = vpop.f32.mrf.mxu0
      %v1188 = vpop.f32.mrf.mxu0
      %v1189 = vpop.f32.mrf.mxu0
      %1190 = vdwg.mxu0
      %v1191 = vld [vmem:[%s2] sm:$0xf]
      %1193 = vset.pattern.permute.xlu0 2
      %1194 = vperm.xlu0 %1193, %v1191
      %v1195 = vpop.permute.xlu0 %1194
      %v1197 = vmul.f32 %v1145, %v1195
      %v1198 = vmul.f32 %v1147, %v1195
      %v1199 = vmul.f32 %v1186, %v1195
      %1200 = vset.pattern.permute.xlu0 3
      %1201 = vperm.xlu0 %1200, %v1191
      %v1202 = vpop.permute.xlu0 %1201
      %v1204 = vadd.f32 %v1197, %v1202
      %v1205 = vadd.f32 %v1198, %v1202
      %v1206 = vadd.f32 %v1199, %v1202
      %v1207 = vmax.f32 %v1204, 0.0
      %v1208 = vmax.f32 %v1205, 0.0
      %v1209 = vmax.f32 %v1206, 0.0
      %v1210 = vmul.f32 %v1207, %v741
      %v1211 = vmul.f32 %v1208, %v745
      %v1212 = vmul.f32 %v1209, %v749
      %v1215 = vcombine.low %v1210, %v1211
      %1217 = vst [vmem:[#allocation3 + $0x4] sm:$0xff] %v1215
      %1218 = vst.msk [vmem:[#allocation3 + $0xc] sm:$0xf] %vm761, %v1212
      %v1219 = vld [vmem:[#allocation3] sm:$0xff]
      %v1220 = vld [vmem:[#allocation3 + $0x8] sm:$0xff]
      %v1223 = vcombine.high %v1219, %v1219
      %v1224 = vcombine.high %v1220, %v1220
      %v1227 = vpack.c.bf16 %v1219, %v1219
      %v1228 = vpack.c.bf16 %v1223, %v1223
      %v1229 = vpack.c.bf16 %v1220, %v1220
      %v1230 = vpack.c.bf16 %v1224, %v1224
      %v1235 = vunpack.c.l.b16 %v1227
      %v1236 = vunpack.c.l.b16 %v1228
      %v1237 = vunpack.c.l.b16 %v1229
      %v1238 = vunpack.c.l.b16 %v1230
      %v1239 = vpack.c.b16 %v1236, %v1235
      %v1240 = vpack.c.b16 %v1238, %v1237
      %1241 = vrot.lane.b32.xlu0 %v1239, 19
      %v1242 = vpop.permute.xlu0 %1241
      %1243 = vrot.lane.b32.xlu0 %v1240, 19
      %v1244 = vpop.permute.xlu0 %1243
      %v1245 = vrot.slane %v1242, 4
      %v1246 = vrot.slane %v1244, 4
      %v1247 = vsel %vm309, %v1245, %v1246
      %v1248 = vsel %vm311, %v1242, %v1247
      %v1249 = vsel %vm311, %v1244, %v1246
      %1252 = vst [vmem:[#allocation6] sm:$0x33] %v1248
      %1253 = vst.msk [vmem:[#allocation6 + $0x8] sm:$0x3] %vm317, %v1249
      %v1254 = vld [vmem:[#allocation3] sm:$0xff]
      %v1255 = vld [vmem:[#allocation3 + $0x8] sm:$0xff]
      %v1258 = vcombine.high %v1254, %v1254
      %v1259 = vcombine.high %v1255, %v1255
      %v1262 = vpack.c.bf16 %v1254, %v1254
      %v1263 = vpack.c.bf16 %v1258, %v1258
      %v1264 = vpack.c.bf16 %v1255, %v1255
      %v1265 = vpack.c.bf16 %v1259, %v1259
      %v1270 = vunpack.c.l.b16 %v1262
      %v1271 = vunpack.c.l.b16 %v1263
      %v1272 = vunpack.c.l.b16 %v1264
      %v1273 = vunpack.c.l.b16 %v1265
      %v1274 = vpack.c.b16 %v1271, %v1270
      %v1275 = vpack.c.b16 %v1273, %v1272
      %v1276 = vrot.slane %v1274, 6
      %v1277 = vrot.slane %v1275, 6
      %1278 = vrot.lane.b32.xlu0 %v1276, 18
      %v1279 = vpop.permute.xlu0 %1278
      %1280 = vrot.lane.b32.xlu0 %v1277, 18
      %v1281 = vpop.permute.xlu0 %1280
      %v1282 = vrot.slane %v1279, 4
      %v1283 = vrot.slane %v1281, 4
      %v1284 = vsel %vm309, %v1282, %v1283
      %v1285 = vsel %vm350, %v1279, %v1284
      %v1286 = vsel %vm350, %v1281, %v1283
      %1289 = vst [vmem:[#allocation6] sm:$0xcc] %v1285
      %1290 = vst.msk [vmem:[#allocation6 + $0x8] sm:$0xc] %vm356, %v1286
      %v1291 = vld [vmem:[#allocation3] sm:$0xff]
      %v1292 = vld [vmem:[#allocation3 + $0x8] sm:$0xff]
      %v1295 = vcombine.high %v1291, %v1291
      %v1296 = vcombine.high %v1292, %v1292
      %v1299 = vpack.c.bf16 %v1291, %v1291
      %v1300 = vpack.c.bf16 %v1295, %v1295
      %v1301 = vpack.c.bf16 %v1292, %v1292
      %v1302 = vpack.c.bf16 %v1296, %v1296
      %v1307 = vunpack.c.l.b16 %v1299
      %v1308 = vunpack.c.l.b16 %v1300
      %v1309 = vunpack.c.l.b16 %v1301
      %v1310 = vunpack.c.l.b16 %v1302
      %v1311 = vpack.c.b16 %v1308, %v1307
      %v1312 = vpack.c.b16 %v1310, %v1309
      %1313 = vrot.lane.b32.xlu0 %v1311, 17
      %v1314 = vpop.permute.xlu0 %1313
      %1315 = vrot.lane.b32.xlu0 %v1312, 17
      %v1316 = vpop.permute.xlu0 %1315
      %v1317 = vrot.slane %v1314, 4
      %v1318 = vrot.slane %v1316, 4
      %v1319 = vsel %vm309, %v1317, %v1318
      %v1320 = vsel %vm387, %v1314, %v1319
      %v1321 = vsel %vm387, %v1316, %v1318
      %1324 = vst [vmem:[#allocation6 + $0xc] sm:$0x33] %v1320
      %1325 = vst.msk [vmem:[#allocation6 + $0x14] sm:$0x3] %vm317, %v1321
      %v1326 = vld [vmem:[#allocation3] sm:$0xff]
      %v1327 = vld [vmem:[#allocation3 + $0x8] sm:$0xff]
      %v1330 = vcombine.high %v1326, %v1326
      %v1331 = vcombine.high %v1327, %v1327
      %v1334 = vpack.c.bf16 %v1326, %v1326
      %v1335 = vpack.c.bf16 %v1330, %v1330
      %v1336 = vpack.c.bf16 %v1327, %v1327
      %v1337 = vpack.c.bf16 %v1331, %v1331
      %v1342 = vunpack.c.l.b16 %v1334
      %v1343 = vunpack.c.l.b16 %v1335
      %v1344 = vunpack.c.l.b16 %v1336
      %v1345 = vunpack.c.l.b16 %v1337
      %v1346 = vpack.c.b16 %v1343, %v1342
      %v1347 = vpack.c.b16 %v1345, %v1344
      %v1348 = vrot.slane %v1346, 6
      %v1349 = vrot.slane %v1347, 6
      %1350 = vrot.lane.b32.xlu0 %v1348, 1
      %v1351 = vpop.permute.xlu0 %1350
      %1352 = vrot.lane.b32.xlu0 %v1349, 1
      %v1353 = vpop.permute.xlu0 %1352
      %v1354 = vrot.slane %v1351, 4
      %v1355 = vrot.slane %v1353, 4
      %v1356 = vsel %vm309, %v1354, %v1355
      %v1357 = vsel %vm425, %v1351, %v1356
      %v1358 = vsel %vm425, %v1353, %v1355
      %1361 = vst [vmem:[#allocation6 + $0xc] sm:$0xcc] %v1357
      %1362 = vst.msk [vmem:[#allocation6 + $0x14] sm:$0xc] %vm356, %v1358
      %v1363 = vld [vmem:[#allocation3 + $0x4] sm:$0xff]
      %v1364 = vld [vmem:[#allocation3 + $0xc] sm:$0xf]
      %v1366 = vcombine.high %v1363, %v1363
      %v1368 = vpack.c.bf16 %v1363, %v1363
      %v1369 = vpack.c.bf16 %v1366, %v1366
      %v1370 = vpack.c.bf16 %v1364, %v1364
      %v1374 = vunpack.c.l.b16 %v1368
      %v1375 = vunpack.c.l.b16 %v1369
      %v1376 = vunpack.c.l.b16 %v1370
      %v1377 = vpack.c.b16 %v1375, %v1374
      %v1378 = vpack.c.b16 %v1376, %v1376
      %1381 = vst [vmem:[#allocation6 + $0x18] sm:$0x33] %v1377
      %1382 = vst.msk [vmem:[#allocation6 + $0x20] sm:$0x3] %vm317, %v1378
      %v1383 = vld [vmem:[#allocation3 + $0x4] sm:$0xff]
      %v1384 = vld [vmem:[#allocation3 + $0xc] sm:$0xf]
      %v1386 = vcombine.high %v1383, %v1383
      %v1388 = vpack.c.bf16 %v1383, %v1383
      %v1389 = vpack.c.bf16 %v1386, %v1386
      %v1390 = vpack.c.bf16 %v1384, %v1384
      %v1394 = vunpack.c.l.b16 %v1388
      %v1395 = vunpack.c.l.b16 %v1389
      %v1396 = vunpack.c.l.b16 %v1390
      %v1397 = vpack.c.b16 %v1395, %v1394
      %v1398 = vpack.c.b16 %v1396, %v1396
      %v1399 = vrot.slane %v1397, 6
      %v1400 = vrot.slane %v1398, 6
      %1401 = vrot.lane.b32.xlu0 %v1399, 127
      %v1402 = vpop.permute.xlu0 %1401
      %1403 = vrot.lane.b32.xlu0 %v1400, 127
      %v1404 = vpop.permute.xlu0 %1403
      %v1405 = vrot.slane %v1402, 4
      %v1406 = vrot.slane %v1404, 4
      %v1407 = vsel %vm309, %v1405, %v1406
      %v1408 = vsel %vm477, %v1402, %v1407
      %1411 = vst [vmem:[#allocation6 + $0x18] sm:$0xcc] %v1408
      %1412 = vst.msk [vmem:[#allocation6 + $0x20] sm:$0xc] %vm356, %v1404
      %v1413 = vld [vmem:[#allocation3 + $0x4] sm:$0xff]
      %v1414 = vld [vmem:[#allocation3 + $0xc] sm:$0xf]
      %v1416 = vcombine.high %v1413, %v1413
      %v1418 = vpack.c.bf16 %v1413, %v1413
      %v1419 = vpack.c.bf16 %v1416, %v1416
      %v1420 = vpack.c.bf16 %v1414, %v1414
      %v1424 = vunpack.c.l.b16 %v1418
      %v1425 = vunpack.c.l.b16 %v1419
      %v1426 = vunpack.c.l.b16 %v1420
      %v1427 = vpack.c.b16 %v1425, %v1424
      %v1428 = vpack.c.b16 %v1426, %v1426
      %1429 = vrot.lane.b32.xlu0 %v1427, 111
      %v1430 = vpop.permute.xlu0 %1429
      %1431 = vrot.lane.b32.xlu0 %v1428, 111
      %v1432 = vpop.permute.xlu0 %1431
      %v1433 = vrot.slane %v1430, 4
      %v1434 = vrot.slane %v1432, 4
      %v1435 = vsel %vm309, %v1433, %v1434
      %v1436 = vsel %vm506, %v1430, %v1435
      %1439 = vst [vmem:[#allocation6 + $0x24] sm:$0x33] %v1436
      %1440 = vst.msk [vmem:[#allocation6 + $0x2c] sm:$0x3] %vm317, %v1432
      %v1441 = vld [vmem:[#allocation3 + $0x4] sm:$0xff]
      %v1442 = vld [vmem:[#allocation3 + $0xc] sm:$0xf]
      %v1444 = vcombine.high %v1441, %v1441
      %v1446 = vpack.c.bf16 %v1441, %v1441
      %v1447 = vpack.c.bf16 %v1444, %v1444
      %v1448 = vpack.c.bf16 %v1442, %v1442
      %v1452 = vunpack.c.l.b16 %v1446
      %v1453 = vunpack.c.l.b16 %v1447
      %v1454 = vunpack.c.l.b16 %v1448
      %v1455 = vpack.c.b16 %v1453, %v1452
      %v1456 = vpack.c.b16 %v1454, %v1454
      %v1457 = vrot.slane %v1455, 6
      %v1458 = vrot.slane %v1456, 6
      %1459 = vrot.lane.b32.xlu0 %v1457, 110
      %v1460 = vpop.permute.xlu0 %1459
      %1461 = vrot.lane.b32.xlu0 %v1458, 110
      %v1462 = vpop.permute.xlu0 %1461
      %v1463 = vrot.slane %v1460, 4
      %v1464 = vrot.slane %v1462, 4
      %v1465 = vsel %vm309, %v1463, %v1464
      %v1466 = vsel %vm537, %v1460, %v1465
      %1469 = vst [vmem:[#allocation6 + $0x24] sm:$0xcc] %v1466
      %1470 = vst.msk [vmem:[#allocation6 + $0x2c] sm:$0xc] %vm356, %v1462
      %v1471 = vld [vmem:[#allocation3 + $0x4] sm:$0xff]
      %v1472 = vld [vmem:[#allocation3 + $0xc] sm:$0xf]
      %v1474 = vcombine.high %v1471, %v1471
      %v1476 = vpack.c.bf16 %v1471, %v1471
      %v1477 = vpack.c.bf16 %v1474, %v1474
      %v1478 = vpack.c.bf16 %v1472, %v1472
      %v1482 = vunpack.c.l.b16 %v1476
      %v1483 = vunpack.c.l.b16 %v1477
      %v1484 = vunpack.c.l.b16 %v1478
      %v1485 = vpack.c.b16 %v1483, %v1482
      %v1486 = vpack.c.b16 %v1484, %v1484
      %1487 = vrot.lane.b32.xlu0 %v1485, 109
      %v1488 = vpop.permute.xlu0 %1487
      %1489 = vrot.lane.b32.xlu0 %v1486, 109
      %v1490 = vpop.permute.xlu0 %1489
      %v1491 = vrot.slane %v1488, 4
      %v1492 = vrot.slane %v1490, 4
      %v1493 = vsel %vm309, %v1491, %v1492
      %v1494 = vsel %vm566, %v1488, %v1493
      %1497 = vst [vmem:[#allocation6 + $0x30] sm:$0x33] %v1494
      %1498 = vst.msk [vmem:[#allocation6 + $0x38] sm:$0x3] %vm317, %v1490
      %v1499 = vld [vmem:[%s1 + $0x4] sm:$0x3]
      %v1500 = vld [vmem:[#allocation6] sm:$0xff]
      %v1501 = vld [vmem:[#allocation6 + $0x8] sm:$0xf]
      %v1502 = vld [vmem:[#allocation6 + $0xc] sm:$0xff]
      %v1503 = vld [vmem:[#allocation6 + $0x14] sm:$0xf]
      %v1504 = vld [vmem:[#allocation6 + $0x18] sm:$0xff]
      %v1505 = vld [vmem:[#allocation6 + $0x20] sm:$0xf]
      %v1506 = vld [vmem:[#allocation6 + $0x24] sm:$0xff]
      %v1507 = vld [vmem:[#allocation6 + $0x2c] sm:$0xf]
      %v1508 = vld [vmem:[#allocation6 + $0x30] sm:$0x33]
      %v1509 = vld [vmem:[#allocation6 + $0x38] sm:$0x3]
      %v1520 = vunpack.c.l.b16 %v1500
      %v1521 = vunpack.c.h.b16 %v1500
      %v1522 = vunpack.c.l.b16 %v1501
      %v1523 = vunpack.c.l.b16 %v1502
      %v1524 = vunpack.c.h.b16 %v1502
      %v1525 = vunpack.c.l.b16 %v1503
      %v1526 = vunpack.c.l.b16 %v1504
      %v1527 = vunpack.c.h.b16 %v1504
      %v1528 = vunpack.c.l.b16 %v1505
      %v1529 = vunpack.c.l.b16 %v1506
      %v1530 = vunpack.c.h.b16 %v1506
      %v1531 = vunpack.c.l.b16 %v1507
      %v1532 = vunpack.c.l.b16 %v1508
      %v1533 = vunpack.c.h.b16 %v1508
      %v1534 = vunpack.c.l.b16 %v1509
      %v1535 = vpack.c.b16 %v1523, %v1520
      %v1536 = vpack.c.b16 %v1524, %v1521
      %v1537 = vpack.c.b16 %v1525, %v1522
      %v1538 = vpack.c.b16 %v1529, %v1526
      %v1539 = vpack.c.b16 %v1530, %v1527
      %v1540 = vpack.c.b16 %v1531, %v1528
      %v1541 = vpack.c.b16 %v1532, %v1532
      %v1542 = vpack.c.b16 %v1533, %v1533
      %v1543 = vpack.c.b16 %v1534, %v1534
      %v1551 = vsel %vm623, %v1499, 0
      %v1554 = vsel %vm627, %v1541, 0
      %v1557 = vsel %vm627, %v1542, 0
      %v1560 = vsel %vm627, %v1543, 0
      %1562 = vmatprep.subr.bf16.mxu0 0
      %1563 = vmatpush1.bf16.msra.mxu0 0
      %1564 = vmatprep.subr.bf16.mxu0 0
      %1565 = vmatpush1.bf16.msra.mxu0 0
      %1566 = vmatprep.subr.bf16.mxu0 0
      %1567 = vmatpush1.bf16.msra.mxu0 0
      %1568 = vmatprep.subr.bf16.mxu0 0
      %1569 = vmatpush1.bf16.msra.mxu0 0
      %1570 = vmatprep.subr.bf16.mxu0 0
      %1571 = vmatpush1.bf16.msra.mxu0 0
      %1572 = vmatprep.subr.bf16.mxu0 %v1557
      %1573 = vmatpush1.bf16.msra.mxu0 %v1554
      %1574 = vmatprep.subr.bf16.mxu0 %v1539
      %1575 = vmatpush1.bf16.msra.mxu0 %v1538
      %1576 = vmatprep.subr.bf16.mxu0 %v1536
      %1577 = vmatpush1.bf16.msra.mxu0 %v1535
      %1578 = vmatprep.subr.bf16.mxu0 0
      %1579 = vmatpush2.bf16.msra.mxu0 0
      %1580 = vmatprep.subr.bf16.mxu0 0
      %1581 = vmatpush2.bf16.msra.mxu0 0
      %1582 = vmatprep.subr.bf16.mxu0 0
      %1583 = vmatpush2.bf16.msra.mxu0 0
      %1584 = vmatprep.subr.bf16.mxu0 0
      %1585 = vmatpush2.bf16.msra.mxu0 0
      %1586 = vmatprep.subr.bf16.mxu0 0
      %1587 = vmatpush2.bf16.msra.mxu0 0
      %1588 = vmatprep.subr.bf16.mxu0 0
      %1589 = vmatpush2.bf16.msra.mxu0 0
      %1590 = vmatprep.subr.bf16.mxu0 0
      %1591 = vmatpush2.bf16.msra.mxu0 0
      %1592 = vmatprep.subr.bf16.mxu0 0
      %1593 = vmatpush2.bf16.msra.mxu0 0
      %1594 = vmatprep.mubr.bf16.mxu0 0
      %1595 = vmatmul.mubr.bf16.gmra.mxu0 %v1551
      %v1596 = vpop.f32.mrf.mxu0
      %v1597 = vadd.f32 0.0, %v1596
      %v1598 = vpop.f32.mrf.mxu0
      %v1599 = vadd.f32 0.0, %v1598
      %v1600 = vpop.f32.mrf.mxu0
      %v1601 = vpop.f32.mrf.mxu0
      %1602 = vdwg.mxu0
      %1603 = vmatprep.subr.bf16.mxu0 0
      %1604 = vmatpush1.bf16.msra.mxu0 0
      %1605 = vmatprep.subr.bf16.mxu0 0
      %1606 = vmatpush1.bf16.msra.mxu0 0
      %1607 = vmatprep.subr.bf16.mxu0 0
      %1608 = vmatpush1.bf16.msra.mxu0 0
      %1609 = vmatprep.subr.bf16.mxu0 0
      %1610 = vmatpush1.bf16.msra.mxu0 0
      %1611 = vmatprep.subr.bf16.mxu0 0
      %1612 = vmatpush1.bf16.msra.mxu0 0
      %1613 = vmatprep.subr.bf16.mxu0 0
      %1614 = vmatpush1.bf16.msra.mxu0 %v1560
      %1615 = vmatprep.subr.bf16.mxu0 0
      %1616 = vmatpush1.bf16.msra.mxu0 %v1540
      %1617 = vmatprep.subr.bf16.mxu0 0
      %1618 = vmatpush1.bf16.msra.mxu0 %v1537
      %1619 = vmatprep.subr.bf16.mxu0 0
      %1620 = vmatpush2.bf16.msra.mxu0 0
      %1621 = vmatprep.subr.bf16.mxu0 0
      %1622 = vmatpush2.bf16.msra.mxu0 0
      %1623 = vmatprep.subr.bf16.mxu0 0
      %1624 = vmatpush2.bf16.msra.mxu0 0
      %1625 = vmatprep.subr.bf16.mxu0 0
      %1626 = vmatpush2.bf16.msra.mxu0 0
      %1627 = vmatprep.subr.bf16.mxu0 0
      %1628 = vmatpush2.bf16.msra.mxu0 0
      %1629 = vmatprep.subr.bf16.mxu0 0
      %1630 = vmatpush2.bf16.msra.mxu0 0
      %1631 = vmatprep.subr.bf16.mxu0 0
      %1632 = vmatpush2.bf16.msra.mxu0 0
      %1633 = vmatprep.subr.bf16.mxu0 0
      %1634 = vmatpush2.bf16.msra.mxu0 0
      %1635 = vmatprep.mubr.bf16.mxu0 0
      %1636 = vmatmul.mubr.bf16.gmra.mxu0 %v1551
      %v1637 = vpop.f32.mrf.mxu0
      %v1638 = vadd.f32 0.0, %v1637
      %v1639 = vpop.f32.mrf.mxu0
      %v1640 = vpop.f32.mrf.mxu0
      %v1641 = vpop.f32.mrf.mxu0
      %1642 = vdwg.mxu0
      %v1643 = vld [vmem:[%s2] sm:$0xf]
      %1645 = vset.pattern.permute.xlu0 4
      %1646 = vperm.xlu0 %1645, %v1643
      %v1647 = vpop.permute.xlu0 %1646
      %v1649 = vmul.f32 %v1597, %v1647
      %v1650 = vmul.f32 %v1599, %v1647
      %v1651 = vmul.f32 %v1638, %v1647
      %1652 = vset.pattern.permute.xlu0 5
      %1653 = vperm.xlu0 %1652, %v1643
      %v1654 = vpop.permute.xlu0 %1653
      %v1656 = vadd.f32 %v1649, %v1654
      %v1657 = vadd.f32 %v1650, %v1654
      %v1658 = vadd.f32 %v1651, %v1654
      %v1659 = vadd.f32 %v1656, %v734
      %v1660 = vadd.f32 %v1657, %v735
      %v1661 = vadd.f32 %v1658, %v736
      %v1662 = vmax.f32 %v1659, 0.0
      %v1663 = vmax.f32 %v1660, 0.0
      %v1664 = vmax.f32 %v1661, 0.0
      %v1665 = vmul.f32 %v1662, %v741
      %v1666 = vmul.f32 %v1663, %v745
      %v1667 = vmul.f32 %v1664, %v749
      %v1670 = vcombine.low %v1665, %v1666
      %1672 = vst [vmem:[#allocation4 + $0x4] sm:$0xff] %v1670
      %1673 = vst.msk [vmem:[#allocation4 + $0xc] sm:$0xf] %vm761, %v1667
      %v1674 = vld [vmem:[#allocation4] sm:$0xff]
      %v1675 = vld [vmem:[#allocation4 + $0x8] sm:$0xff]
      %v1678 = vcombine.high %v1674, %v1674
      %v1679 = vcombine.high %v1675, %v1675
      %v1682 = vpack.c.bf16 %v1674, %v1674
      %v1683 = vpack.c.bf16 %v1678, %v1678
      %v1684 = vpack.c.bf16 %v1675, %v1675
      %v1685 = vpack.c.bf16 %v1679, %v1679
      %v1690 = vunpack.c.l.b16 %v1682
      %v1691 = vunpack.c.l.b16 %v1683
      %v1692 = vunpack.c.l.b16 %v1684
      %v1693 = vunpack.c.l.b16 %v1685
      %v1694 = vpack.c.b16 %v1691, %v1690
      %v1695 = vpack.c.b16 %v1693, %v1692
      %1696 = vrot.lane.b32.xlu0 %v1694, 19
      %v1697 = vpop.permute.xlu0 %1696
      %1698 = vrot.lane.b32.xlu0 %v1695, 19
      %v1699 = vpop.permute.xlu0 %1698
      %v1700 = vrot.slane %v1697, 4
      %v1701 = vrot.slane %v1699, 4
      %v1702 = vsel %vm309, %v1700, %v1701
      %v1703 = vsel %vm311, %v1697, %v1702
      %v1704 = vsel %vm311, %v1699, %v1701
      %1707 = vst [vmem:[#allocation6] sm:$0x33] %v1703
      %1708 = vst.msk [vmem:[#allocation6 + $0x8] sm:$0x3] %vm317, %v1704
      %v1709 = vld [vmem:[#allocation4] sm:$0xff]
      %v1710 = vld [vmem:[#allocation4 + $0x8] sm:$0xff]
      %v1713 = vcombine.high %v1709, %v1709
      %v1714 = vcombine.high %v1710, %v1710
      %v1717 = vpack.c.bf16 %v1709, %v1709
      %v1718 = vpack.c.bf16 %v1713, %v1713
      %v1719 = vpack.c.bf16 %v1710, %v1710
      %v1720 = vpack.c.bf16 %v1714, %v1714
      %v1725 = vunpack.c.l.b16 %v1717
      %v1726 = vunpack.c.l.b16 %v1718
      %v1727 = vunpack.c.l.b16 %v1719
      %v1728 = vunpack.c.l.b16 %v1720
      %v1729 = vpack.c.b16 %v1726, %v1725
      %v1730 = vpack.c.b16 %v1728, %v1727
      %v1731 = vrot.slane %v1729, 6
      %v1732 = vrot.slane %v1730, 6
      %1733 = vrot.lane.b32.xlu0 %v1731, 18
      %v1734 = vpop.permute.xlu0 %1733
      %1735 = vrot.lane.b32.xlu0 %v1732, 18
      %v1736 = vpop.permute.xlu0 %1735
      %v1737 = vrot.slane %v1734, 4
      %v1738 = vrot.slane %v1736, 4
      %v1739 = vsel %vm309, %v1737, %v1738
      %v1740 = vsel %vm350, %v1734, %v1739
      %v1741 = vsel %vm350, %v1736, %v1738
      %1744 = vst [vmem:[#allocation6] sm:$0xcc] %v1740
      %1745 = vst.msk [vmem:[#allocation6 + $0x8] sm:$0xc] %vm356, %v1741
      %v1746 = vld [vmem:[#allocation4] sm:$0xff]
      %v1747 = vld [vmem:[#allocation4 + $0x8] sm:$0xff]
      %v1750 = vcombine.high %v1746, %v1746
      %v1751 = vcombine.high %v1747, %v1747
      %v1754 = vpack.c.bf16 %v1746, %v1746
      %v1755 = vpack.c.bf16 %v1750, %v1750
      %v1756 = vpack.c.bf16 %v1747, %v1747
      %v1757 = vpack.c.bf16 %v1751, %v1751
      %v1762 = vunpack.c.l.b16 %v1754
      %v1763 = vunpack.c.l.b16 %v1755
      %v1764 = vunpack.c.l.b16 %v1756
      %v1765 = vunpack.c.l.b16 %v1757
      %v1766 = vpack.c.b16 %v1763, %v1762
      %v1767 = vpack.c.b16 %v1765, %v1764
      %1768 = vrot.lane.b32.xlu0 %v1766, 17
      %v1769 = vpop.permute.xlu0 %1768
      %1770 = vrot.lane.b32.xlu0 %v1767, 17
      %v1771 = vpop.permute.xlu0 %1770
      %v1772 = vrot.slane %v1769, 4
      %v1773 = vrot.slane %v1771, 4
      %v1774 = vsel %vm309, %v1772, %v1773
      %v1775 = vsel %vm387, %v1769, %v1774
      %v1776 = vsel %vm387, %v1771, %v1773
      %1779 = vst [vmem:[#allocation6 + $0xc] sm:$0x33] %v1775
      %1780 = vst.msk [vmem:[#allocation6 + $0x14] sm:$0x3] %vm317, %v1776
      %v1781 = vld [vmem:[#allocation4] sm:$0xff]
      %v1782 = vld [vmem:[#allocation4 + $0x8] sm:$0xff]
      %v1785 = vcombine.high %v1781, %v1781
      %v1786 = vcombine.high %v1782, %v1782
      %v1789 = vpack.c.bf16 %v1781, %v1781
      %v1790 = vpack.c.bf16 %v1785, %v1785
      %v1791 = vpack.c.bf16 %v1782, %v1782
      %v1792 = vpack.c.bf16 %v1786, %v1786
      %v1797 = vunpack.c.l.b16 %v1789
      %v1798 = vunpack.c.l.b16 %v1790
      %v1799 = vunpack.c.l.b16 %v1791
      %v1800 = vunpack.c.l.b16 %v1792
      %v1801 = vpack.c.b16 %v1798, %v1797
      %v1802 = vpack.c.b16 %v1800, %v1799
      %v1803 = vrot.slane %v1801, 6
      %v1804 = vrot.slane %v1802, 6
      %1805 = vrot.lane.b32.xlu0 %v1803, 1
      %v1806 = vpop.permute.xlu0 %1805
      %1807 = vrot.lane.b32.xlu0 %v1804, 1
      %v1808 = vpop.permute.xlu0 %1807
      %v1809 = vrot.slane %v1806, 4
      %v1810 = vrot.slane %v1808, 4
      %v1811 = vsel %vm309, %v1809, %v1810
      %v1812 = vsel %vm425, %v1806, %v1811
      %v1813 = vsel %vm425, %v1808, %v1810
      %1816 = vst [vmem:[#allocation6 + $0xc] sm:$0xcc] %v1812
      %1817 = vst.msk [vmem:[#allocation6 + $0x14] sm:$0xc] %vm356, %v1813
      %v1818 = vld [vmem:[#allocation4 + $0x4] sm:$0xff]
      %v1819 = vld [vmem:[#allocation4 + $0xc] sm:$0xf]
      %v1821 = vcombine.high %v1818, %v1818
      %v1823 = vpack.c.bf16 %v1818, %v1818
      %v1824 = vpack.c.bf16 %v1821, %v1821
      %v1825 = vpack.c.bf16 %v1819, %v1819
      %v1829 = vunpack.c.l.b16 %v1823
      %v1830 = vunpack.c.l.b16 %v1824
      %v1831 = vunpack.c.l.b16 %v1825
      %v1832 = vpack.c.b16 %v1830, %v1829
      %v1833 = vpack.c.b16 %v1831, %v1831
      %1836 = vst [vmem:[#allocation6 + $0x18] sm:$0x33] %v1832
      %1837 = vst.msk [vmem:[#allocation6 + $0x20] sm:$0x3] %vm317, %v1833
      %v1838 = vld [vmem:[#allocation4 + $0x4] sm:$0xff]
      %v1839 = vld [vmem:[#allocation4 + $0xc] sm:$0xf]
      %v1841 = vcombine.high %v1838, %v1838
      %v1843 = vpack.c.bf16 %v1838, %v1838
      %v1844 = vpack.c.bf16 %v1841, %v1841
      %v1845 = vpack.c.bf16 %v1839, %v1839
      %v1849 = vunpack.c.l.b16 %v1843
      %v1850 = vunpack.c.l.b16 %v1844
      %v1851 = vunpack.c.l.b16 %v1845
      %v1852 = vpack.c.b16 %v1850, %v1849
      %v1853 = vpack.c.b16 %v1851, %v1851
      %v1854 = vrot.slane %v1852, 6
      %v1855 = vrot.slane %v1853, 6
      %1856 = vrot.lane.b32.xlu0 %v1854, 127
      %v1857 = vpop.permute.xlu0 %1856
      %1858 = vrot.lane.b32.xlu0 %v1855, 127
      %v1859 = vpop.permute.xlu0 %1858
      %v1860 = vrot.slane %v1857, 4
      %v1861 = vrot.slane %v1859, 4
      %v1862 = vsel %vm309, %v1860, %v1861
      %v1863 = vsel %vm477, %v1857, %v1862
      %1866 = vst [vmem:[#allocation6 + $0x18] sm:$0xcc] %v1863
      %1867 = vst.msk [vmem:[#allocation6 + $0x20] sm:$0xc] %vm356, %v1859
      %v1868 = vld [vmem:[#allocation4 + $0x4] sm:$0xff]
      %v1869 = vld [vmem:[#allocation4 + $0xc] sm:$0xf]
      %v1871 = vcombine.high %v1868, %v1868
      %v1873 = vpack.c.bf16 %v1868, %v1868
      %v1874 = vpack.c.bf16 %v1871, %v1871
      %v1875 = vpack.c.bf16 %v1869, %v1869
      %v1879 = vunpack.c.l.b16 %v1873
      %v1880 = vunpack.c.l.b16 %v1874
      %v1881 = vunpack.c.l.b16 %v1875
      %v1882 = vpack.c.b16 %v1880, %v1879
      %v1883 = vpack.c.b16 %v1881, %v1881
      %1884 = vrot.lane.b32.xlu0 %v1882, 111
      %v1885 = vpop.permute.xlu0 %1884
      %1886 = vrot.lane.b32.xlu0 %v1883, 111
      %v1887 = vpop.permute.xlu0 %1886
      %v1888 = vrot.slane %v1885, 4
      %v1889 = vrot.slane %v1887, 4
      %v1890 = vsel %vm309, %v1888, %v1889
      %v1891 = vsel %vm506, %v1885, %v1890
      %1894 = vst [vmem:[#allocation6 + $0x24] sm:$0x33] %v1891
      %1895 = vst.msk [vmem:[#allocation6 + $0x2c] sm:$0x3] %vm317, %v1887
      %v1896 = vld [vmem:[#allocation4 + $0x4] sm:$0xff]
      %v1897 = vld [vmem:[#allocation4 + $0xc] sm:$0xf]
      %v1899 = vcombine.high %v1896, %v1896
      %v1901 = vpack.c.bf16 %v1896, %v1896
      %v1902 = vpack.c.bf16 %v1899, %v1899
      %v1903 = vpack.c.bf16 %v1897, %v1897
      %v1907 = vunpack.c.l.b16 %v1901
      %v1908 = vunpack.c.l.b16 %v1902
      %v1909 = vunpack.c.l.b16 %v1903
      %v1910 = vpack.c.b16 %v1908, %v1907
      %v1911 = vpack.c.b16 %v1909, %v1909
      %v1912 = vrot.slane %v1910, 6
      %v1913 = vrot.slane %v1911, 6
      %1914 = vrot.lane.b32.xlu0 %v1912, 110
      %v1915 = vpop.permute.xlu0 %1914
      %1916 = vrot.lane.b32.xlu0 %v1913, 110
      %v1917 = vpop.permute.xlu0 %1916
      %v1918 = vrot.slane %v1915, 4
      %v1919 = vrot.slane %v1917, 4
      %v1920 = vsel %vm309, %v1918, %v1919
      %v1921 = vsel %vm537, %v1915, %v1920
      %1924 = vst [vmem:[#allocation6 + $0x24] sm:$0xcc] %v1921
      %1925 = vst.msk [vmem:[#allocation6 + $0x2c] sm:$0xc] %vm356, %v1917
      %v1926 = vld [vmem:[#allocation4 + $0x4] sm:$0xff]
      %v1927 = vld [vmem:[#allocation4 + $0xc] sm:$0xf]
      %v1929 = vcombine.high %v1926, %v1926
      %v1931 = vpack.c.bf16 %v1926, %v1926
      %v1932 = vpack.c.bf16 %v1929, %v1929
      %v1933 = vpack.c.bf16 %v1927, %v1927
      %v1937 = vunpack.c.l.b16 %v1931
      %v1938 = vunpack.c.l.b16 %v1932
      %v1939 = vunpack.c.l.b16 %v1933
      %v1940 = vpack.c.b16 %v1938, %v1937
      %v1941 = vpack.c.b16 %v1939, %v1939
      %1942 = vrot.lane.b32.xlu0 %v1940, 109
      %v1943 = vpop.permute.xlu0 %1942
      %1944 = vrot.lane.b32.xlu0 %v1941, 109
      %v1945 = vpop.permute.xlu0 %1944
      %v1946 = vrot.slane %v1943, 4
      %v1947 = vrot.slane %v1945, 4
      %v1948 = vsel %vm309, %v1946, %v1947
      %v1949 = vsel %vm566, %v1943, %v1948
      %1952 = vst [vmem:[#allocation6 + $0x30] sm:$0x33] %v1949
      %1953 = vst.msk [vmem:[#allocation6 + $0x38] sm:$0x3] %vm317, %v1945
      %v1954 = vld [vmem:[%s1 + $0x4] sm:$0xc]
      %v1955 = vld [vmem:[%s1 + $0x8] sm:$0x3]
      %v1956 = vld [vmem:[#allocation6] sm:$0xff]
      %v1957 = vld [vmem:[#allocation6 + $0x8] sm:$0xf]
      %v1958 = vld [vmem:[#allocation6 + $0xc] sm:$0xff]
      %v1959 = vld [vmem:[#allocation6 + $0x14] sm:$0xf]
      %v1960 = vld [vmem:[#allocation6 + $0x18] sm:$0xff]
      %v1961 = vld [vmem:[#allocation6 + $0x20] sm:$0xf]
      %v1962 = vld [vmem:[#allocation6 + $0x24] sm:$0xff]
      %v1963 = vld [vmem:[#allocation6 + $0x2c] sm:$0xf]
      %v1964 = vld [vmem:[#allocation6 + $0x30] sm:$0x33]
      %v1965 = vld [vmem:[#allocation6 + $0x38] sm:$0x3]
      %v1968 = vunpack.c.l.b16 %v1954
      %v1969 = vunpack.c.l.b16 %v1955
      %v1970 = vpack.c.b16 %v1969, %v1968
      %v1971 = vrot.slane %v1970, 2
      %v1982 = vunpack.c.l.b16 %v1956
      %v1983 = vunpack.c.h.b16 %v1956
      %v1984 = vunpack.c.l.b16 %v1957
      %v1985 = vunpack.c.l.b16 %v1958
      %v1986 = vunpack.c.h.b16 %v1958
      %v1987 = vunpack.c.l.b16 %v1959
      %v1988 = vunpack.c.l.b16 %v1960
      %v1989 = vunpack.c.h.b16 %v1960
      %v1990 = vunpack.c.l.b16 %v1961
      %v1991 = vunpack.c.l.b16 %v1962
      %v1992 = vunpack.c.h.b16 %v1962
      %v1993 = vunpack.c.l.b16 %v1963
      %v1994 = vunpack.c.l.b16 %v1964
      %v1995 = vunpack.c.h.b16 %v1964
      %v1996 = vunpack.c.l.b16 %v1965
      %v1997 = vpack.c.b16 %v1985, %v1982
      %v1998 = vpack.c.b16 %v1986, %v1983
      %v1999 = vpack.c.b16 %v1987, %v1984
      %v2000 = vpack.c.b16 %v1991, %v1988
      %v2001 = vpack.c.b16 %v1992, %v1989
      %v2002 = vpack.c.b16 %v1993, %v1990
      %v2003 = vpack.c.b16 %v1994, %v1994
      %v2004 = vpack.c.b16 %v1995, %v1995
      %v2005 = vpack.c.b16 %v1996, %v1996
      %v2013 = vsel %vm623, %v1971, 0
      %v2016 = vsel %vm627, %v2003, 0
      %v2019 = vsel %vm627, %v2004, 0
      %v2022 = vsel %vm627, %v2005, 0
      %2024 = vmatprep.subr.bf16.mxu0 0
      %2025 = vmatpush1.bf16.msra.mxu0 0
      %2026 = vmatprep.subr.bf16.mxu0 0
      %2027 = vmatpush1.bf16.msra.mxu0 0
      %2028 = vmatprep.subr.bf16.mxu0 0
      %2029 = vmatpush1.bf16.msra.mxu0 0
      %2030 = vmatprep.subr.bf16.mxu0 0
      %2031 = vmatpush1.bf16.msra.mxu0 0
      %2032 = vmatprep.subr.bf16.mxu0 0
      %2033 = vmatpush1.bf16.msra.mxu0 0
      %2034 = vmatprep.subr.bf16.mxu0 %v2019
      %2035 = vmatpush1.bf16.msra.mxu0 %v2016
      %2036 = vmatprep.subr.bf16.mxu0 %v2001
      %2037 = vmatpush1.bf16.msra.mxu0 %v2000
      %2038 = vmatprep.subr.bf16.mxu0 %v1998
      %2039 = vmatpush1.bf16.msra.mxu0 %v1997
      %2040 = vmatprep.subr.bf16.mxu0 0
      %2041 = vmatpush2.bf16.msra.mxu0 0
      %2042 = vmatprep.subr.bf16.mxu0 0
      %2043 = vmatpush2.bf16.msra.mxu0 0
      %2044 = vmatprep.subr.bf16.mxu0 0
      %2045 = vmatpush2.bf16.msra.mxu0 0
      %2046 = vmatprep.subr.bf16.mxu0 0
      %2047 = vmatpush2.bf16.msra.mxu0 0
      %2048 = vmatprep.subr.bf16.mxu0 0
      %2049 = vmatpush2.bf16.msra.mxu0 0
      %2050 = vmatprep.subr.bf16.mxu0 0
      %2051 = vmatpush2.bf16.msra.mxu0 0
      %2052 = vmatprep.subr.bf16.mxu0 0
      %2053 = vmatpush2.bf16.msra.mxu0 0
      %2054 = vmatprep.subr.bf16.mxu0 0
      %2055 = vmatpush2.bf16.msra.mxu0 0
      %2056 = vmatprep.mubr.bf16.mxu0 0
      %2057 = vmatmul.mubr.bf16.gmra.mxu0 %v2013
      %v2058 = vpop.f32.mrf.mxu0
      %v2059 = vadd.f32 0.0, %v2058
      %v2060 = vpop.f32.mrf.mxu0
      %v2061 = vadd.f32 0.0, %v2060
      %v2062 = vpop.f32.mrf.mxu0
      %v2063 = vpop.f32.mrf.mxu0
      %2064 = vdwg.mxu0
      %2065 = vmatprep.subr.bf16.mxu0 0
      %2066 = vmatpush1.bf16.msra.mxu0 0
      %2067 = vmatprep.subr.bf16.mxu0 0
      %2068 = vmatpush1.bf16.msra.mxu0 0
      %2069 = vmatprep.subr.bf16.mxu0 0
      %2070 = vmatpush1.bf16.msra.mxu0 0
      %2071 = vmatprep.subr.bf16.mxu0 0
      %2072 = vmatpush1.bf16.msra.mxu0 0
      %2073 = vmatprep.subr.bf16.mxu0 0
      %2074 = vmatpush1.bf16.msra.mxu0 0
      %2075 = vmatprep.subr.bf16.mxu0 0
      %2076 = vmatpush1.bf16.msra.mxu0 %v2022
      %2077 = vmatprep.subr.bf16.mxu0 0
      %2078 = vmatpush1.bf16.msra.mxu0 %v2002
      %2079 = vmatprep.subr.bf16.mxu0 0
      %2080 = vmatpush1.bf16.msra.mxu0 %v1999
      %2081 = vmatprep.subr.bf16.mxu0 0
      %2082 = vmatpush2.bf16.msra.mxu0 0
      %2083 = vmatprep.subr.bf16.mxu0 0
      %2084 = vmatpush2.bf16.msra.mxu0 0
      %2085 = vmatprep.subr.bf16.mxu0 0
      %2086 = vmatpush2.bf16.msra.mxu0 0
      %2087 = vmatprep.subr.bf16.mxu0 0
      %2088 = vmatpush2.bf16.msra.mxu0 0
      %2089 = vmatprep.subr.bf16.mxu0 0
      %2090 = vmatpush2.bf16.msra.mxu0 0
      %2091 = vmatprep.subr.bf16.mxu0 0
      %2092 = vmatpush2.bf16.msra.mxu0 0
      %2093 = vmatprep.subr.bf16.mxu0 0
      %2094 = vmatpush2.bf16.msra.mxu0 0
      %2095 = vmatprep.subr.bf16.mxu0 0
      %2096 = vmatpush2.bf16.msra.mxu0 0
      %2097 = vmatprep.mubr.bf16.mxu0 0
      %2098 = vmatmul.mubr.bf16.gmra.mxu0 %v2013
      %v2099 = vpop.f32.mrf.mxu0
      %v2100 = vadd.f32 0.0, %v2099
      %v2101 = vpop.f32.mrf.mxu0
      %v2102 = vpop.f32.mrf.mxu0
      %v2103 = vpop.f32.mrf.mxu0
      %2104 = vdwg.mxu0
      %v2105 = vld [vmem:[%s2] sm:$0xff]
      %2107 = vset.pattern.permute.xlu0 6
      %2108 = vperm.xlu0 %2107, %v2105
      %v2109 = vpop.permute.xlu0 %2108
      %v2111 = vmul.f32 %v2059, %v2109
      %v2112 = vmul.f32 %v2061, %v2109
      %v2113 = vmul.f32 %v2100, %v2109
      %2114 = vset.pattern.permute.xlu0 7
      %2115 = vperm.xlu0 %2114, %v2105
      %v2116 = vpop.permute.xlu0 %2115
      %v2118 = vadd.f32 %v2111, %v2116
      %v2119 = vadd.f32 %v2112, %v2116
      %v2120 = vadd.f32 %v2113, %v2116
      %v2121 = vmax.f32 %v2118, 0.0
      %v2122 = vmax.f32 %v2119, 0.0
      %v2123 = vmax.f32 %v2120, 0.0
      %v2124 = vmul.f32 %v2121, %v741
      %v2125 = vmul.f32 %v2122, %v745
      %v2126 = vmul.f32 %v2123, %v749
      %2127 = vst [vmem:[#allocation5 + $0x8] sm:$0xff] %v2124
      %2128 = vst [vmem:[#allocation5 + $0x10] sm:$0xff] %v2125
      %2129 = vst.msk [vmem:[#allocation5 + $0x18] sm:$0xff] %vm276, %v2126
      %v2130 = vld [vmem:[#allocation5] sm:$0xff]
      %v2131 = vld [vmem:[#allocation5 + $0x8] sm:$0xff]
      %v2132 = vld [vmem:[#allocation5 + $0x10] sm:$0xff]
      %v2133 = vld [vmem:[#allocation5 + $0x18] sm:$0xff]
      %v2134 = vpack.c.bf16 %v2130, %v2130
      %v2135 = vpack.c.bf16 %v2131, %v2131
      %v2136 = vpack.c.bf16 %v2132, %v2132
      %v2137 = vpack.c.bf16 %v2133, %v2133
      %v2142 = vunpack.c.l.b16 %v2134
      %v2143 = vunpack.c.l.b16 %v2135
      %v2144 = vunpack.c.l.b16 %v2136
      %v2145 = vunpack.c.l.b16 %v2137
      %v2146 = vpack.c.b16 %v2143, %v2142
      %v2147 = vpack.c.b16 %v2145, %v2144
      %2148 = vrot.lane.b32.xlu0 %v2146, 38
      %v2149 = vpop.permute.xlu0 %2148
      %2150 = vrot.lane.b32.xlu0 %v2147, 38
      %v2151 = vpop.permute.xlu0 %2150
      %v2152 = vrot.slane %v2149, 4
      %v2153 = vrot.slane %v2151, 4
      %v2154 = vsel %vm309, %v2152, %v2153
      %vm2155 = vcmask 310272
      %v2156 = vsel %vm2155, %v2149, %v2154
      %v2157 = vsel %vm2155, %v2151, %v2153
      %2160 = vst [vmem:[#allocation6] sm:$0xff] %v2156
      %2161 = vst.msk [vmem:[#allocation6 + $0x8] sm:$0xf] %vm761, %v2157
      %v2162 = vld [vmem:[#allocation5] sm:$0xff]
      %v2163 = vld [vmem:[#allocation5 + $0x8] sm:$0xff]
      %v2164 = vld [vmem:[#allocation5 + $0x10] sm:$0xff]
      %v2165 = vld [vmem:[#allocation5 + $0x18] sm:$0xff]
      %v2166 = vpack.c.bf16 %v2162, %v2162
      %v2167 = vpack.c.bf16 %v2163, %v2163
      %v2168 = vpack.c.bf16 %v2164, %v2164
      %v2169 = vpack.c.bf16 %v2165, %v2165
      %v2174 = vunpack.c.l.b16 %v2166
      %v2175 = vunpack.c.l.b16 %v2167
      %v2176 = vunpack.c.l.b16 %v2168
      %v2177 = vunpack.c.l.b16 %v2169
      %v2178 = vpack.c.b16 %v2175, %v2174
      %v2179 = vpack.c.b16 %v2177, %v2176
      %2180 = vrot.lane.b32.xlu0 %v2178, 36
      %v2181 = vpop.permute.xlu0 %2180
      %2182 = vrot.lane.b32.xlu0 %v2179, 36
      %v2183 = vpop.permute.xlu0 %2182
      %v2184 = vrot.slane %v2181, 4
      %v2185 = vrot.slane %v2183, 4
      %v2186 = vsel %vm309, %v2184, %v2185
      %vm2187 = vcmask 293888
      %v2188 = vsel %vm2187, %v2181, %v2186
      %v2189 = vsel %vm2187, %v2183, %v2185
      %2192 = vst [vmem:[#allocation6 + $0xc] sm:$0xff] %v2188
      %2193 = vst.msk [vmem:[#allocation6 + $0x14] sm:$0xf] %vm761, %v2189
      %v2194 = vld [vmem:[#allocation5] sm:$0xff]
      %v2195 = vld [vmem:[#allocation5 + $0x8] sm:$0xff]
      %v2196 = vld [vmem:[#allocation5 + $0x10] sm:$0xff]
      %v2197 = vld [vmem:[#allocation5 + $0x18] sm:$0xff]
      %v2198 = vpack.c.bf16 %v2194, %v2194
      %v2199 = vpack.c.bf16 %v2195, %v2195
      %v2200 = vpack.c.bf16 %v2196, %v2196
      %v2201 = vpack.c.bf16 %v2197, %v2197
      %v2206 = vunpack.c.l.b16 %v2198
      %v2207 = vunpack.c.l.b16 %v2199
      %v2208 = vunpack.c.l.b16 %v2200
      %v2209 = vunpack.c.l.b16 %v2201
      %v2210 = vpack.c.b16 %v2207, %v2206
      %v2211 = vpack.c.b16 %v2209, %v2208
      %2212 = vrot.lane.b32.xlu0 %v2210, 34
      %v2213 = vpop.permute.xlu0 %2212
      %2214 = vrot.lane.b32.xlu0 %v2211, 34
      %v2215 = vpop.permute.xlu0 %2214
      %v2216 = vrot.slane %v2213, 4
      %v2217 = vrot.slane %v2215, 4
      %v2218 = vsel %vm309, %v2216, %v2217
      %vm2219 = vcmask 277504
      %v2220 = vsel %vm2219, %v2213, %v2218
      %v2221 = vsel %vm2219, %v2215, %v2217
      %2224 = vst [vmem:[#allocation6 + $0x18] sm:$0xff] %v2220
      %2225 = vst.msk [vmem:[#allocation6 + $0x20] sm:$0xf] %vm761, %v2221
      %v2226 = vld [vmem:[#allocation5] sm:$0xff]
      %v2227 = vld [vmem:[#allocation5 + $0x8] sm:$0xff]
      %v2228 = vld [vmem:[#allocation5 + $0x10] sm:$0xff]
      %v2229 = vld [vmem:[#allocation5 + $0x18] sm:$0xff]
      %v2230 = vpack.c.bf16 %v2226, %v2226
      %v2231 = vpack.c.bf16 %v2227, %v2227
      %v2232 = vpack.c.bf16 %v2228, %v2228
      %v2233 = vpack.c.bf16 %v2229, %v2229
      %v2238 = vunpack.c.l.b16 %v2230
      %v2239 = vunpack.c.l.b16 %v2231
      %v2240 = vunpack.c.l.b16 %v2232
      %v2241 = vunpack.c.l.b16 %v2233
      %v2242 = vpack.c.b16 %v2239, %v2238
      %v2243 = vpack.c.b16 %v2241, %v2240
      %2244 = vrot.lane.b32.xlu0 %v2242, 2
      %v2245 = vpop.permute.xlu0 %2244
      %2246 = vrot.lane.b32.xlu0 %v2243, 2
      %v2247 = vpop.permute.xlu0 %2246
      %v2248 = vrot.slane %v2245, 4
      %v2249 = vrot.slane %v2247, 4
      %v2250 = vsel %vm309, %v2248, %v2249
      %vm2251 = vcmask 15360
      %v2252 = vsel %vm2251, %v2245, %v2250
      %v2253 = vsel %vm2251, %v2247, %v2249
      %2256 = vst [vmem:[#allocation6 + $0x24] sm:$0xff] %v2252
      %2257 = vst.msk [vmem:[#allocation6 + $0x2c] sm:$0xf] %vm761, %v2253
      %v2258 = vld [vmem:[#allocation5 + $0x8] sm:$0xff]
      %v2259 = vld [vmem:[#allocation5 + $0x10] sm:$0xff]
      %v2260 = vld [vmem:[#allocation5 + $0x18] sm:$0xff]
      %v2261 = vpack.c.bf16 %v2258, %v2258
      %v2262 = vpack.c.bf16 %v2259, %v2259
      %v2263 = vpack.c.bf16 %v2260, %v2260
      %v2267 = vunpack.c.l.b16 %v2261
      %v2268 = vunpack.c.l.b16 %v2262
      %v2269 = vunpack.c.l.b16 %v2263
      %v2270 = vpack.c.b16 %v2268, %v2267
      %v2271 = vpack.c.b16 %v2269, %v2269
      %2274 = vst [vmem:[#allocation6 + $0x30] sm:$0xff] %v2270
      %2275 = vst.msk [vmem:[#allocation6 + $0x38] sm:$0xf] %vm761, %v2271
      %v2276 = vld [vmem:[#allocation5 + $0x8] sm:$0xff]
      %v2277 = vld [vmem:[#allocation5 + $0x10] sm:$0xff]
      %v2278 = vld [vmem:[#allocation5 + $0x18] sm:$0xff]
      %v2279 = vpack.c.bf16 %v2276, %v2276
      %v2280 = vpack.c.bf16 %v2277, %v2277
      %v2281 = vpack.c.bf16 %v2278, %v2278
      %v2285 = vunpack.c.l.b16 %v2279
      %v2286 = vunpack.c.l.b16 %v2280
      %v2287 = vunpack.c.l.b16 %v2281
      %v2288 = vpack.c.b16 %v2286, %v2285
      %v2289 = vpack.c.b16 %v2287, %v2287
      %2290 = vrot.lane.b32.xlu0 %v2288, 126
      %v2291 = vpop.permute.xlu0 %2290
      %2292 = vrot.lane.b32.xlu0 %v2289, 126
      %v2293 = vpop.permute.xlu0 %2292
      %v2294 = vrot.slane %v2291, 4
      %v2295 = vrot.slane %v2293, 4
      %v2296 = vsel %vm309, %v2294, %v2295
      %vm2297 = vcmask 1031168
      %v2298 = vsel %vm2297, %v2291, %v2296
      %2301 = vst [vmem:[#allocation6 + $0x3c] sm:$0xff] %v2298
      %2302 = vst.msk [vmem:[#allocation6 + $0x44] sm:$0xf] %vm761, %v2293
      %v2303 = vld [vmem:[#allocation5 + $0x8] sm:$0xff]
      %v2304 = vld [vmem:[#allocation5 + $0x10] sm:$0xff]
      %v2305 = vld [vmem:[#allocation5 + $0x18] sm:$0xff]
      %v2306 = vpack.c.bf16 %v2303, %v2303
      %v2307 = vpack.c.bf16 %v2304, %v2304
      %v2308 = vpack.c.bf16 %v2305, %v2305
      %v2312 = vunpack.c.l.b16 %v2306
      %v2313 = vunpack.c.l.b16 %v2307
      %v2314 = vunpack.c.l.b16 %v2308
      %v2315 = vpack.c.b16 %v2313, %v2312
      %v2316 = vpack.c.b16 %v2314, %v2314
      %2317 = vrot.lane.b32.xlu0 %v2315, 94
      %v2318 = vpop.permute.xlu0 %2317
      %2319 = vrot.lane.b32.xlu0 %v2316, 94
      %v2320 = vpop.permute.xlu0 %2319
      %v2321 = vrot.slane %v2318, 4
      %v2322 = vrot.slane %v2320, 4
      %v2323 = vsel %vm309, %v2321, %v2322
      %vm2324 = vcmask 769024
      %v2325 = vsel %vm2324, %v2318, %v2323
      %2328 = vst [vmem:[#allocation6 + $0x48] sm:$0xff] %v2325
      %2329 = vst.msk [vmem:[#allocation6 + $0x50] sm:$0xf] %vm761, %v2320
      %v2330 = vld [vmem:[#allocation5 + $0x8] sm:$0xff]
      %v2331 = vld [vmem:[#allocation5 + $0x10] sm:$0xff]
      %v2332 = vld [vmem:[#allocation5 + $0x18] sm:$0xff]
      %v2333 = vpack.c.bf16 %v2330, %v2330
      %v2334 = vpack.c.bf16 %v2331, %v2331
      %v2335 = vpack.c.bf16 %v2332, %v2332
      %v2339 = vunpack.c.l.b16 %v2333
      %v2340 = vunpack.c.l.b16 %v2334
      %v2341 = vunpack.c.l.b16 %v2335
      %v2342 = vpack.c.b16 %v2340, %v2339
      %v2343 = vpack.c.b16 %v2341, %v2341
      %2344 = vrot.lane.b32.xlu0 %v2342, 92
      %v2345 = vpop.permute.xlu0 %2344
      %2346 = vrot.lane.b32.xlu0 %v2343, 92
      %v2347 = vpop.permute.xlu0 %2346
      %v2348 = vrot.slane %v2345, 4
      %v2349 = vrot.slane %v2347, 4
      %v2350 = vsel %vm309, %v2348, %v2349
      %vm2351 = vcmask 752640
      %v2352 = vsel %vm2351, %v2345, %v2350
      %2355 = vst [vmem:[#allocation6 + $0x54] sm:$0xff] %v2352
      %2356 = vst.msk [vmem:[#allocation6 + $0x5c] sm:$0xf] %vm761, %v2347
      %v2357 = vld [vmem:[#allocation5 + $0x8] sm:$0xff]
      %v2358 = vld [vmem:[#allocation5 + $0x10] sm:$0xff]
      %v2359 = vld [vmem:[#allocation5 + $0x18] sm:$0xff]
      %v2360 = vpack.c.bf16 %v2357, %v2357
      %v2361 = vpack.c.bf16 %v2358, %v2358
      %v2362 = vpack.c.bf16 %v2359, %v2359
      %v2366 = vunpack.c.l.b16 %v2360
      %v2367 = vunpack.c.l.b16 %v2361
      %v2368 = vunpack.c.l.b16 %v2362
      %v2369 = vpack.c.b16 %v2367, %v2366
      %v2370 = vpack.c.b16 %v2368, %v2368
      %2371 = vrot.lane.b32.xlu0 %v2369, 90
      %v2372 = vpop.permute.xlu0 %2371
      %2373 = vrot.lane.b32.xlu0 %v2370, 90
      %v2374 = vpop.permute.xlu0 %2373
      %v2375 = vrot.slane %v2372, 4
      %v2376 = vrot.slane %v2374, 4
      %v2377 = vsel %vm309, %v2375, %v2376
      %vm2378 = vcmask 736256
      %v2379 = vsel %vm2378, %v2372, %v2377
      %2382 = vst [vmem:[#allocation6 + $0x60] sm:$0xff] %v2379
      %2383 = vst.msk [vmem:[#allocation6 + $0x68] sm:$0xf] %vm761, %v2374
      %v2384 = vld [vmem:[%s1 + $0x8] sm:$0xc]
      %v2385 = vld [vmem:[%s1 + $0xc] sm:$0x3]
      %v2386 = vld [vmem:[#allocation6] sm:$0xff]
      %v2387 = vld [vmem:[#allocation6 + $0x8] sm:$0xf]
      %v2388 = vld [vmem:[#allocation6 + $0xc] sm:$0xff]
      %v2389 = vld [vmem:[#allocation6 + $0x14] sm:$0xf]
      %v2390 = vld [vmem:[#allocation6 + $0x18] sm:$0xff]
      %v2391 = vld [vmem:[#allocation6 + $0x20] sm:$0xf]
      %v2392 = vld [vmem:[#allocation6 + $0x24] sm:$0xff]
      %v2393 = vld [vmem:[#allocation6 + $0x2c] sm:$0xf]
      %v2394 = vld [vmem:[#allocation6 + $0x30] sm:$0xff]
      %v2395 = vld [vmem:[#allocation6 + $0x38] sm:$0xf]
      %v2396 = vld [vmem:[#allocation6 + $0x3c] sm:$0xff]
      %v2397 = vld [vmem:[#allocation6 + $0x44] sm:$0xf]
      %v2398 = vld [vmem:[#allocation6 + $0x48] sm:$0xff]
      %v2399 = vld [vmem:[#allocation6 + $0x50] sm:$0xf]
      %v2400 = vld [vmem:[#allocation6 + $0x54] sm:$0xff]
      %v2401 = vld [vmem:[#allocation6 + $0x5c] sm:$0xf]
      %v2402 = vld [vmem:[#allocation6 + $0x60] sm:$0xff]
      %v2403 = vld [vmem:[#allocation6 + $0x68] sm:$0xf]
      %v2406 = vunpack.c.l.b16 %v2384
      %v2407 = vunpack.c.l.b16 %v2385
      %v2408 = vpack.c.b16 %v2407, %v2406
      %v2409 = vrot.slane %v2408, 2
      %v2428 = vunpack.c.l.b16 %v2386
      %v2429 = vunpack.c.h.b16 %v2386
      %v2430 = vunpack.c.l.b16 %v2387
      %v2431 = vunpack.c.l.b16 %v2388
      %v2432 = vunpack.c.h.b16 %v2388
      %v2433 = vunpack.c.l.b16 %v2389
      %v2434 = vunpack.c.l.b16 %v2390
      %v2435 = vunpack.c.h.b16 %v2390
      %v2436 = vunpack.c.l.b16 %v2391
      %v2437 = vunpack.c.l.b16 %v2392
      %v2438 = vunpack.c.h.b16 %v2392
      %v2439 = vunpack.c.l.b16 %v2393
      %v2440 = vunpack.c.l.b16 %v2394
      %v2441 = vunpack.c.h.b16 %v2394
      %v2442 = vunpack.c.l.b16 %v2395
      %v2443 = vunpack.c.l.b16 %v2396
      %v2444 = vunpack.c.h.b16 %v2396
      %v2445 = vunpack.c.l.b16 %v2397
      %v2446 = vunpack.c.l.b16 %v2398
      %v2447 = vunpack.c.h.b16 %v2398
      %v2448 = vunpack.c.l.b16 %v2399
      %v2449 = vunpack.c.l.b16 %v2400
      %v2450 = vunpack.c.h.b16 %v2400
      %v2451 = vunpack.c.l.b16 %v2401
      %v2452 = vunpack.c.l.b16 %v2402
      %v2453 = vunpack.c.h.b16 %v2402
      %v2454 = vunpack.c.l.b16 %v2403
      %v2455 = vpack.c.b16 %v2431, %v2428
      %v2456 = vpack.c.b16 %v2432, %v2429
      %v2457 = vpack.c.b16 %v2433, %v2430
      %v2458 = vpack.c.b16 %v2437, %v2434
      %v2459 = vpack.c.b16 %v2438, %v2435
      %v2460 = vpack.c.b16 %v2439, %v2436
      %v2461 = vpack.c.b16 %v2443, %v2440
      %v2462 = vpack.c.b16 %v2444, %v2441
      %v2463 = vpack.c.b16 %v2445, %v2442
      %v2464 = vpack.c.b16 %v2449, %v2446
      %v2465 = vpack.c.b16 %v2450, %v2447
      %v2466 = vpack.c.b16 %v2451, %v2448
      %v2467 = vpack.c.b16 %v2452, %v2452
      %v2468 = vpack.c.b16 %v2453, %v2453
      %v2469 = vpack.c.b16 %v2454, %v2454
      %vm2482 = vcmask 588800
      %v2484 = vsel %vm2482, %v2409, 0
      %vm2486 = vcmask 1043456
      %v2488 = vsel %vm2486, %v2467, 0
      %v2491 = vsel %vm2486, %v2468, 0
      %v2494 = vsel %vm2486, %v2469, 0
      %2496 = vmatprep.subr.bf16.mxu0 0
      %2497 = vmatpush1.bf16.msra.mxu0 0
      %2498 = vmatprep.subr.bf16.mxu0 0
      %2499 = vmatpush1.bf16.msra.mxu0 0
      %2500 = vmatprep.subr.bf16.mxu0 0
      %2501 = vmatpush1.bf16.msra.mxu0 0
      %2502 = vmatprep.subr.bf16.mxu0 %v2491
      %2503 = vmatpush1.bf16.msra.mxu0 %v2488
      %2504 = vmatprep.subr.bf16.mxu0 %v2465
      %2505 = vmatpush1.bf16.msra.mxu0 %v2464
      %2506 = vmatprep.subr.bf16.mxu0 %v2462
      %2507 = vmatpush1.bf16.msra.mxu0 %v2461
      %2508 = vmatprep.subr.bf16.mxu0 %v2459
      %2509 = vmatpush1.bf16.msra.mxu0 %v2458
      %2510 = vmatprep.subr.bf16.mxu0 %v2456
      %2511 = vmatpush1.bf16.msra.mxu0 %v2455
      %2512 = vmatprep.subr.bf16.mxu0 0
      %2513 = vmatpush2.bf16.msra.mxu0 0
      %2514 = vmatprep.subr.bf16.mxu0 0
      %2515 = vmatpush2.bf16.msra.mxu0 0
      %2516 = vmatprep.subr.bf16.mxu0 0
      %2517 = vmatpush2.bf16.msra.mxu0 0
      %2518 = vmatprep.subr.bf16.mxu0 0
      %2519 = vmatpush2.bf16.msra.mxu0 0
      %2520 = vmatprep.subr.bf16.mxu0 0
      %2521 = vmatpush2.bf16.msra.mxu0 0
      %2522 = vmatprep.subr.bf16.mxu0 0
      %2523 = vmatpush2.bf16.msra.mxu0 0
      %2524 = vmatprep.subr.bf16.mxu0 0
      %2525 = vmatpush2.bf16.msra.mxu0 0
      %2526 = vmatprep.subr.bf16.mxu0 0
      %2527 = vmatpush2.bf16.msra.mxu0 0
      %2528 = vmatprep.mubr.bf16.mxu0 0
      %2529 = vmatmul.mubr.bf16.gmra.mxu0 %v2484
      %v2530 = vpop.f32.mrf.mxu0
      %v2531 = vadd.f32 0.0, %v2530
      %v2532 = vpop.f32.mrf.mxu0
      %v2533 = vadd.f32 0.0, %v2532
      %v2534 = vpop.f32.mrf.mxu0
      %v2535 = vpop.f32.mrf.mxu0
      %2536 = vdwg.mxu0
      %2537 = vmatprep.subr.bf16.mxu0 0
      %2538 = vmatpush1.bf16.msra.mxu0 0
      %2539 = vmatprep.subr.bf16.mxu0 0
      %2540 = vmatpush1.bf16.msra.mxu0 0
      %2541 = vmatprep.subr.bf16.mxu0 0
      %2542 = vmatpush1.bf16.msra.mxu0 0
      %2543 = vmatprep.subr.bf16.mxu0 0
      %2544 = vmatpush1.bf16.msra.mxu0 %v2494
      %2545 = vmatprep.subr.bf16.mxu0 0
      %2546 = vmatpush1.bf16.msra.mxu0 %v2466
      %2547 = vmatprep.subr.bf16.mxu0 0
      %2548 = vmatpush1.bf16.msra.mxu0 %v2463
      %2549 = vmatprep.subr.bf16.mxu0 0
      %2550 = vmatpush1.bf16.msra.mxu0 %v2460
      %2551 = vmatprep.subr.bf16.mxu0 0
      %2552 = vmatpush1.bf16.msra.mxu0 %v2457
      %2553 = vmatprep.subr.bf16.mxu0 0
      %2554 = vmatpush2.bf16.msra.mxu0 0
      %2555 = vmatprep.subr.bf16.mxu0 0
      %2556 = vmatpush2.bf16.msra.mxu0 0
      %2557 = vmatprep.subr.bf16.mxu0 0
      %2558 = vmatpush2.bf16.msra.mxu0 0
      %2559 = vmatprep.subr.bf16.mxu0 0
      %2560 = vmatpush2.bf16.msra.mxu0 0
      %2561 = vmatprep.subr.bf16.mxu0 0
      %2562 = vmatpush2.bf16.msra.mxu0 0
      %2563 = vmatprep.subr.bf16.mxu0 0
      %2564 = vmatpush2.bf16.msra.mxu0 0
      %2565 = vmatprep.subr.bf16.mxu0 0
      %2566 = vmatpush2.bf16.msra.mxu0 0
      %2567 = vmatprep.subr.bf16.mxu0 0
      %2568 = vmatpush2.bf16.msra.mxu0 0
      %2569 = vmatprep.mubr.bf16.mxu0 0
      %2570 = vmatmul.mubr.bf16.gmra.mxu0 %v2484
      %v2571 = vpop.f32.mrf.mxu0
      %v2572 = vadd.f32 0.0, %v2571
      %v2573 = vpop.f32.mrf.mxu0
      %v2574 = vpop.f32.mrf.mxu0
      %v2575 = vpop.f32.mrf.mxu0
      %2576 = vdwg.mxu0
      %v2577 = vld [vmem:[%s2] sm:$0xff]
      %2579 = vset.pattern.permute.xlu0 8
      %2580 = vperm.xlu0 %2579, %v2577
      %v2581 = vpop.permute.xlu0 %2580
      %v2583 = vmul.f32 %v2531, %v2581
      %v2584 = vmul.f32 %v2533, %v2581
      %v2585 = vmul.f32 %v2572, %v2581
      %2586 = vset.pattern.permute.xlu0 9
      %2587 = vperm.xlu0 %2586, %v2577
      %v2588 = vpop.permute.xlu0 %2587
      %v2590 = vadd.f32 %v2583, %v2588
      %v2591 = vadd.f32 %v2584, %v2588
      %v2592 = vadd.f32 %v2585, %v2588
      %v2593 = vld [vmem:[%s1 + $0xc] sm:$0xc]
      %v2594 = vld [vmem:[%s1 + $0x10] sm:$0x3]
      %v2595 = vpack.c.bf16 %v1662, %v1662
      %v2596 = vpack.c.bf16 %v1663, %v1663
      %v2597 = vpack.c.bf16 %v1664, %v1664
      %v2600 = vunpack.c.l.b16 %v2593
      %v2601 = vunpack.c.l.b16 %v2594
      %v2602 = vpack.c.b16 %v2601, %v2600
      %v2603 = vrot.slane %v2602, 2
      %vm2604 = vcmask 31744
      %v2606 = vsel %vm2604, %v2603, 0
      %v2609 = vsel %vm627, %v2595, 0
      %v2612 = vsel %vm627, %v2596, 0
      %v2615 = vsel %vm627, %v2597, 0
      %2617 = vmatprep.subr.bf16.mxu0 0
      %2618 = vmatpush1.bf16.msra.mxu0 0
      %2619 = vmatprep.subr.bf16.mxu0 0
      %2620 = vmatpush1.bf16.msra.mxu0 0
      %2621 = vmatprep.subr.bf16.mxu0 0
      %2622 = vmatpush1.bf16.msra.mxu0 0
      %2623 = vmatprep.subr.bf16.mxu0 0
      %2624 = vmatpush1.bf16.msra.mxu0 0
      %2625 = vmatprep.subr.bf16.mxu0 0
      %2626 = vmatpush1.bf16.msra.mxu0 0
      %2627 = vmatprep.subr.bf16.mxu0 0
      %2628 = vmatpush1.bf16.msra.mxu0 0
      %2629 = vmatprep.subr.bf16.mxu0 0
      %2630 = vmatpush1.bf16.msra.mxu0 0
      %2631 = vmatprep.subr.bf16.mxu0 %v2612
      %2632 = vmatpush1.bf16.msra.mxu0 %v2609
      %2633 = vmatprep.subr.bf16.mxu0 0
      %2634 = vmatpush2.bf16.msra.mxu0 0
      %2635 = vmatprep.subr.bf16.mxu0 0
      %2636 = vmatpush2.bf16.msra.mxu0 0
      %2637 = vmatprep.subr.bf16.mxu0 0
      %2638 = vmatpush2.bf16.msra.mxu0 0
      %2639 = vmatprep.subr.bf16.mxu0 0
      %2640 = vmatpush2.bf16.msra.mxu0 0
      %2641 = vmatprep.subr.bf16.mxu0 0
      %2642 = vmatpush2.bf16.msra.mxu0 0
      %2643 = vmatprep.subr.bf16.mxu0 0
      %2644 = vmatpush2.bf16.msra.mxu0 0
      %2645 = vmatprep.subr.bf16.mxu0 0
      %2646 = vmatpush2.bf16.msra.mxu0 0
      %2647 = vmatprep.subr.bf16.mxu0 0
      %2648 = vmatpush2.bf16.msra.mxu0 0
      %2649 = vmatprep.mubr.bf16.mxu0 0
      %2650 = vmatmul.mubr.bf16.gmra.mxu0 %v2606
      %v2651 = vpop.f32.mrf.mxu0
      %v2652 = vadd.f32 0.0, %v2651
      %v2653 = vpop.f32.mrf.mxu0
      %v2654 = vadd.f32 0.0, %v2653
      %v2655 = vpop.f32.mrf.mxu0
      %v2656 = vpop.f32.mrf.mxu0
      %2657 = vdwg.mxu0
      %2658 = vmatprep.subr.bf16.mxu0 0
      %2659 = vmatpush1.bf16.msra.mxu0 0
      %2660 = vmatprep.subr.bf16.mxu0 0
      %2661 = vmatpush1.bf16.msra.mxu0 0
      %2662 = vmatprep.subr.bf16.mxu0 0
      %2663 = vmatpush1.bf16.msra.mxu0 0
      %2664 = vmatprep.subr.bf16.mxu0 0
      %2665 = vmatpush1.bf16.msra.mxu0 0
      %2666 = vmatprep.subr.bf16.mxu0 0
      %2667 = vmatpush1.bf16.msra.mxu0 0
      %2668 = vmatprep.subr.bf16.mxu0 0
      %2669 = vmatpush1.bf16.msra.mxu0 0
      %2670 = vmatprep.subr.bf16.mxu0 0
      %2671 = vmatpush1.bf16.msra.mxu0 0
      %2672 = vmatprep.subr.bf16.mxu0 0
      %2673 = vmatpush1.bf16.msra.mxu0 %v2615
      %2674 = vmatprep.subr.bf16.mxu0 0
      %2675 = vmatpush2.bf16.msra.mxu0 0
      %2676 = vmatprep.subr.bf16.mxu0 0
      %2677 = vmatpush2.bf16.msra.mxu0 0
      %2678 = vmatprep.subr.bf16.mxu0 0
      %2679 = vmatpush2.bf16.msra.mxu0 0
      %2680 = vmatprep.subr.bf16.mxu0 0
      %2681 = vmatpush2.bf16.msra.mxu0 0
      %2682 = vmatprep.subr.bf16.mxu0 0
      %2683 = vmatpush2.bf16.msra.mxu0 0
      %2684 = vmatprep.subr.bf16.mxu0 0
      %2685 = vmatpush2.bf16.msra.mxu0 0
      %2686 = vmatprep.subr.bf16.mxu0 0
      %2687 = vmatpush2.bf16.msra.mxu0 0
      %2688 = vmatprep.subr.bf16.mxu0 0
      %2689 = vmatpush2.bf16.msra.mxu0 0
      %2690 = vmatprep.mubr.bf16.mxu0 0
      %2691 = vmatmul.mubr.bf16.gmra.mxu0 %v2606
      %v2692 = vpop.f32.mrf.mxu0
      %v2693 = vadd.f32 0.0, %v2692
      %v2694 = vpop.f32.mrf.mxu0
      %v2695 = vpop.f32.mrf.mxu0
      %v2696 = vpop.f32.mrf.mxu0
      %2697 = vdwg.mxu0
      %2698 = vset.pattern.permute.xlu0 10
      %2699 = vperm.xlu0 %2698, %v2577
      %v2700 = vpop.permute.xlu0 %2699
      %v2702 = vmul.f32 %v2652, %v2700
      %v2703 = vmul.f32 %v2654, %v2700
      %v2704 = vmul.f32 %v2693, %v2700
      %2705 = vset.pattern.permute.xlu0 11
      %2706 = vperm.xlu0 %2705, %v2577
      %v2707 = vpop.permute.xlu0 %2706
      %v2709 = vadd.f32 %v2702, %v2707
      %v2710 = vadd.f32 %v2703, %v2707
      %v2711 = vadd.f32 %v2704, %v2707
      %v2712 = vadd.f32 %v2590, %v2709
      %v2713 = vadd.f32 %v2591, %v2710
      %v2714 = vadd.f32 %v2592, %v2711
      %v2715 = vmax.f32 %v2712, 0.0
      %v2716 = vmax.f32 %v2713, 0.0
      %v2717 = vmax.f32 %v2714, 0.0
      %v2719 = vlaneseq
      %v2720 = vshrl.u32 %v2719, 7
      %v2721 = vsub.s32 0, %v2720
      %v2722 = vrot.slane %v280, %v2721
      %v2723 = vlaneseq
      %v2724 = vshrl.u32 %v2723, 7
      %v2725 = vsub.s32 1, %v2724
      %v2726 = vrot.slane %v280, %v2725
      %v2727 = vlaneseq
      %v2728 = vshrl.u32 %v2727, 7
      %v2729 = vsub.s32 2, %v2728
      %v2730 = vrot.slane %v280, %v2729
      %v2734 = vmul.f32 %v2715, %v2722
      %v2735 = vmul.f32 %v2716, %v2726
      %v2736 = vmul.f32 %v2717, %v2730
      %v2737 = vadd.f32 %v2734, %v2735
      %v2738 = vsel %vm276, %v2736, 0.0
      %v2739 = vadd.f32 %v2737, %v2738
      %2740 = vadd.xlane.f32.xlu0 %v2739
      %v2741 = vpop.xlane.xlu0 %2740
      %vm2742 = vcmask 7168
      %2743 = vst.msk [vmem:[%s262] sm:$0xff] %vm2742, %v2741
      %v2744 = vld [vmem:[%s1 + $0x10] sm:$0xc]
      %v2745 = vld [vmem:[%s1 + $0x14] sm:$0x7]
      %v2746 = vunpack.c.l.bf16 %v2744
      %v2747 = vunpack.c.l.bf16 %v2745
      %v2748 = vld [vmem:[%s3] sm:$0xff]
      %v2749 = vld [vmem:[%s3 + $0x8] sm:$0x3]
      %v2752 = vrot.slane %v2746, 4
      %v2753 = vrot.slane %v2747, 4
      %v2754 = vsel %vm2486, %v2752, %v2753
      %vm2755 = vcmask 64512
      %v2756 = vsel %vm2755, %v2754, 0
      %v2758 = vsel %vm2755, %v2753, 0
      %2760 = vmatprep.subr.mxu0 0.0
      %2761 = vmatpush1.msra.mxu0 0.0
      %2762 = vmatprep.subr.mxu0 0.0
      %2763 = vmatpush1.msra.mxu0 0.0
      %2764 = vmatprep.subr.mxu0 0.0
      %2765 = vmatpush1.msra.mxu0 0.0
      %2766 = vmatprep.subr.mxu0 0.0
      %2767 = vmatpush1.msra.mxu0 0.0
      %2768 = vmatprep.subr.mxu0 0.0
      %2769 = vmatpush1.msra.mxu0 0.0
      %2770 = vmatprep.subr.mxu0 0.0
      %2771 = vmatpush1.msra.mxu0 0.0
      %2772 = vmatprep.subr.mxu0 0.0
      %2773 = vmatpush1.msra.mxu0 0.0
      %2774 = vmatprep.subr.mxu0 0.0
      %2775 = vmatpush1.msra.mxu0 0.0
      %2776 = vmatprep.subr.mxu0 0.0
      %2777 = vmatpush1.msra.mxu0 0.0
      %2778 = vmatprep.subr.mxu0 0.0
      %2779 = vmatpush1.msra.mxu0 0.0
      %2780 = vmatprep.subr.mxu0 0.0
      %2781 = vmatpush1.msra.mxu0 0.0
      %2782 = vmatprep.subr.mxu0 0.0
      %2783 = vmatpush1.msra.mxu0 0.0
      %2784 = vmatprep.subr.mxu0 0.0
      %2785 = vmatpush1.msra.mxu0 0.0
      %2786 = vmatprep.subr.mxu0 0.0
      %2787 = vmatpush1.msra.mxu0 0.0
      %2788 = vmatprep.subr.mxu0 0.0
      %2789 = vmatpush1.msra.mxu0 0.0
      %2790 = vmatprep.subr.mxu0 0.0
      %2791 = vmatpush1.msra.mxu0 %v2741
      %2792 = vmatprep.subr.mxu0 0.0
      %2793 = vmatpush2.msra.mxu0 0.0
      %2794 = vmatprep.subr.mxu0 0.0
      %2795 = vmatpush2.msra.mxu0 0.0
      %2796 = vmatprep.subr.mxu0 0.0
      %2797 = vmatpush2.msra.mxu0 0.0
      %2798 = vmatprep.subr.mxu0 0.0
      %2799 = vmatpush2.msra.mxu0 0.0
      %2800 = vmatprep.subr.mxu0 0.0
      %2801 = vmatpush2.msra.mxu0 0.0
      %2802 = vmatprep.subr.mxu0 0.0
      %2803 = vmatpush2.msra.mxu0 0.0
      %2804 = vmatprep.subr.mxu0 0.0
      %2805 = vmatpush2.msra.mxu0 0.0
      %2806 = vmatprep.subr.mxu0 0.0
      %2807 = vmatpush2.msra.mxu0 0.0
      %2808 = vmatprep.subr.mxu0 0.0
      %2809 = vmatpush2.msra.mxu0 0.0
      %2810 = vmatprep.subr.mxu0 0.0
      %2811 = vmatpush2.msra.mxu0 0.0
      %2812 = vmatprep.subr.mxu0 0.0
      %2813 = vmatpush2.msra.mxu0 0.0
      %2814 = vmatprep.subr.mxu0 0.0
      %2815 = vmatpush2.msra.mxu0 0.0
      %2816 = vmatprep.subr.mxu0 0.0
      %2817 = vmatpush2.msra.mxu0 0.0
      %2818 = vmatprep.subr.mxu0 0.0
      %2819 = vmatpush2.msra.mxu0 0.0
      %2820 = vmatprep.subr.mxu0 0.0
      %2821 = vmatpush2.msra.mxu0 0.0
      %2822 = vmatprep.subr.mxu0 0.0
      %2823 = vmatpush2.msra.mxu0 0.0
      %2824 = vmatprep.mubr.f32.mxu0 0.0
      %2825 = vmatmul.mubr.f32.gmra.mxu0 %v2756
      %v2826 = vpop.f32.mrf.mxu0
      %v2827 = vadd.f32 %v2748, %v2826
      %v2828 = vpop.f32.mrf.mxu0
      %2829 = vmatprep.mubr.f32.mxu0 0.0
      %2830 = vmatmul.mubr.f32.gmra.mxu0 %v2758
      %v2831 = vpop.f32.mrf.mxu0
      %v2832 = vadd.f32 %v2749, %v2831
      %v2833 = vpop.f32.mrf.mxu0
      %2834 = vdwg.mxu0
      %2835 = vst.msk [vmem:[%s258] sm:$0xff] %vm2742, %v2827
      %vm2836 = vcmask 1024
      %2837 = vst.msk [vmem:[%s258 + $0x8] sm:$0x3] %vm2836, %v2832
      %p2838 = scmp.lt.s32.totalorder %s18, 1
      %s2839 = scalar_select %p2838, %s18, 1
      %s2840 = smul.addr %s2839, 2
      %s2841 = smul.addr %s2840, 8
      %s2842 = scalar_lea.vmem %s5, %s2841
      %p2843 = scmp.lt.s32.totalorder %s18, 1
      %s2844 = scalar_select %p2843, %s18, 1
      %s2845 = smul.addr %s2844, 8
      %s2846 = scalar_lea.vmem %s6, %s2845
      // Predicated region
      $region41: #{resnet_forward.1} parent=39 // pred_check
        %p2847 = pneg %p146
      $region42: #{resnet_forward.1} parent=39 // pred_check_branch
        %2849 = sbr.rel (%p2847) target = $region44
      $region43: #{resnet_forward.1} parent=39 // pred_region
        _
      $region44: #{resnet_forward.1} parent=39 // pred_fallthru
        _
      // Predicated region
      $region45: #{resnet_forward.1} parent=39 // pred_check
        %p2850 = pneg %p172
      $region46: #{resnet_forward.1} parent=39 // pred_check_branch
        %2852 = sbr.rel (%p2850) target = $region48
      $region47: #{resnet_forward.1} parent=39 // pred_region
        _
      $region48: #{resnet_forward.1} parent=39 // pred_fallthru
        _
    $region40: #{resnet_forward.1} parent=5 // pred_fallthru
      _
    %p2853 = scmp.le.s32.totalorder 2, %s13
    // Predicated region
    $region49: #{resnet_forward.1} parent=5 // pred_check
      %p2854 = pneg %p2853
    $region50: #{resnet_forward.1} parent=5 // pred_check_branch
      %2856 = sbr.rel (%p2854) target = $region52
    $region51: #{resnet_forward.1} parent=5 // pred_region
      %s2857 = ssub.s32 %s13, 2
      // Predicated region
      $region53: #{resnet_forward.1} parent=51 // pred_check
        %p2858 = pneg %p152
      $region54: #{resnet_forward.1} parent=51 // pred_check_branch
        %2860 = sbr.rel (%p2858) target = $region56
      $region55: #{resnet_forward.1} parent=51 // pred_region
        %p2861 = scmp.lt.s32.totalorder %s19, 1
        %s2862 = scalar_select %p2861, %s19, 1
        %s2863 = smul.addr %s2862, 2
        %s2864 = smul.addr %s2863, 8
        %s2865 = scalar_lea.vmem %s5, %s2864
      $region56: #{resnet_forward.1} parent=51 // pred_fallthru
        _
      // Predicated region
      $region57: #{resnet_forward.1} parent=51 // pred_check
        %p2866 = pneg %p178
      $region58: #{resnet_forward.1} parent=51 // pred_check_branch
        %2868 = sbr.rel (%p2866) target = $region60
      $region59: #{resnet_forward.1} parent=51 // pred_region
        %p2869 = scmp.lt.s32.totalorder %s19, 1
        %s2870 = scalar_select %p2869, %s19, 1
        %s2871 = smul.addr %s2870, 8
        %s2872 = scalar_lea.vmem %s6, %s2871
      $region60: #{resnet_forward.1} parent=51 // pred_fallthru
        _
    $region52: #{resnet_forward.1} parent=5 // pred_fallthru
      _
  $region6: #{resnet_forward.1} parent=0 // loop_footer
    %s17 = sadd.s32 1, %s13
  $region7: #{resnet_forward.1} parent=0 // loop_footer_branch
    %12 = sbr.rel target = $region3
  $region8: #{resnet_forward.1} parent=0 // loop_exit
    _

</llo_original>
